<compile_context>
chip_gen: v5e
topology: v5e:2x2
jax: 0.10.0
libtpu: 0.0.40
codegen_flags: <defaults>
</compile_context>

<pallas_src>
import math
from functools import partial

import jax
import jax.numpy as jnp
from jax import lax
from jax.experimental import pallas as pl
from jax.experimental.pallas import tpu as pltpu


# ------------------------------ Pallas kernel -------------------------------

def _block_kernel(x_ref, w_ref, b_ref, ga_ref, gamma_ref, beta_ref,
                  scale_ref, shift_ref, o_ref, *, H, W, C, Cout, eps):
    """One batch element: 3x3 conv + bias + GroupNorm + scale_shift + SiLU.

    x_ref : (1, H*W + 2*(W+1), C)  fp32, zero-padded along the flattened rows
    w_ref : (9*C, Cout)            bf16, tap-major im2col weight layout
    b_ref : (1, Cout)              fp32 conv bias
    ga_ref: (Cout, Cout)           fp32 group-averaging matrix
    gamma/beta: (1, Cout)          fp32 GroupNorm affine
    scale/shift: (1, 1, Cout)      fp32 optional FiLM-style modulation
    o_ref : (1, H*W, Cout)         fp32
    """
    HW = H * W
    taps = [(di, dj) for di in (-1, 0, 1) for dj in (-1, 0, 1)]

    # w-coordinate of every flattened row (for the horizontal border mask).
    col_w = lax.broadcasted_iota(jnp.int32, (HW, C), 0) % W

    # ---- 3x3 conv: 9 shifted bf16 MXU matmuls accumulated in fp32 ----------
    acc = jnp.zeros((HW, Cout), jnp.float32)
    for t, (di, dj) in enumerate(taps):
        shift = di * W + dj
        start = (W + 1) + shift                  # >= 0 thanks to the row pad
        a = x_ref[0, start:start + HW, :]        # (HW, C) shifted window
        if dj != 0:                              # vertical border is zero-padded
            valid = (col_w + dj >= 0) & (col_w + dj < W)
            a = jnp.where(valid, a, 0.0)
        w_tap = w_ref[t * C:(t + 1) * C, :]      # (C, Cout) bf16
        acc = acc + jnp.dot(a.astype(jnp.bfloat16), w_tap,
                            preferred_element_type=jnp.float32)
    acc = acc + b_ref[...]                       # conv bias

    # ---- fused GroupNorm (stats via a tiny group-averaging matmul) ---------
    colsum = jnp.sum(acc, axis=0, keepdims=True)         # (1, Cout)
    colsq = jnp.sum(acc * acc, axis=0, keepdims=True)    # (1, Cout)
    mean = jnp.dot(colsum, ga_ref[...], preferred_element_type=jnp.float32)
    meansq = jnp.dot(colsq, ga_ref[...], preferred_element_type=jnp.float32)
    var = meansq - mean * mean
    inv = lax.rsqrt(var + eps)
    z = (acc - mean) * inv * gamma_ref[...] + beta_ref[...]

    # ---- optional scale_shift: x * (scale + 1) + shift ----------------------
    z = z * (scale_ref[0] + 1.0) + shift_ref[0]

    # ---- SiLU epilogue (EUP exp + approx reciprocal) ------------------------
    sig = pl.reciprocal(1.0 + jnp.exp(-z), approx=True)
    o_ref[0] = (z * sig).astype(o_ref.dtype)


# --------------------------------- wrapper ----------------------------------

def block_forward(params, x_nchw, scale_shift=None, groups=8, eps=1e-5):
    """Matches PyTorch Block.forward; NCHW in, NCHW out."""
    w, b = params["w"], params["b"]
    gamma, beta = params["gamma"], params["beta"]
    Cout, Cin, kh, kw = w.shape
    assert (kh, kw) == (3, 3) and Cout % groups == 0
    B, C, H, W = x_nchw.shape
    assert C == Cin
    HW = H * W

    # NCHW -> (B, H*W, C); pad (W+1) zero rows on each side of the flat row
    # axis so every conv tap is a contiguous, in-bounds window in the kernel.
    x = jnp.transpose(x_nchw, (0, 2, 3, 1)).astype(jnp.float32)
    x = x.reshape(B, HW, C)
    x = jnp.pad(x, ((0, 0), (W + 1, W + 1), (0, 0)))
    HWp = HW + 2 * (W + 1)

    # (Cout, Cin, 3, 3) -> (9*Cin, Cout), bf16 operands for the MXU.
    w2 = (jnp.transpose(w, (2, 3, 1, 0))
             .reshape(9 * Cin, Cout)
             .astype(jnp.bfloat16))
    b2 = b.reshape(1, Cout).astype(jnp.float32)

    # Group-averaging matrix: (colsum @ GA)[c] = mean over group(c).
    cg = Cout // groups
    gid = jnp.arange(Cout) // cg
    ga = (gid[:, None] == gid[None, :]).astype(jnp.float32) / float(HW * cg)

    gamma2 = gamma.reshape(1, Cout).astype(jnp.float32)
    beta2 = beta.reshape(1, Cout).astype(jnp.float32)

    if scale_shift is None:
        scale = jnp.zeros((B, 1, Cout), jnp.float32)
        shift = jnp.zeros((B, 1, Cout), jnp.float32)
    else:
        s, t = scale_shift
        scale = s.reshape(B, Cout).astype(jnp.float32).reshape(B, 1, Cout)
        shift = t.reshape(B, Cout).astype(jnp.float32).reshape(B, 1, Cout)

    out = pl.pallas_call(
        partial(_block_kernel, H=H, W=W, C=C, Cout=Cout, eps=eps),
        out_shape=jax.ShapeDtypeStruct((B, HW, Cout), jnp.float32),
        grid=(B,),
        in_specs=[
            pl.BlockSpec((1, HWp, C), lambda bb: (bb, 0, 0)),       # x (padded)
            pl.BlockSpec((9 * Cin, Cout), lambda bb: (0, 0)),       # weights
            pl.BlockSpec((1, Cout), lambda bb: (0, 0)),             # bias
            pl.BlockSpec((Cout, Cout), lambda bb: (0, 0)),          # group avg
            pl.BlockSpec((1, Cout), lambda bb: (0, 0)),             # gamma
            pl.BlockSpec((1, Cout), lambda bb: (0, 0)),             # beta
            pl.BlockSpec((1, 1, Cout), lambda bb: (bb, 0, 0)),      # scale
            pl.BlockSpec((1, 1, Cout), lambda bb: (bb, 0, 0)),      # shift
        ],
        out_specs=pl.BlockSpec((1, HW, Cout), lambda bb: (bb, 0, 0)),
        compiler_params=pltpu.CompilerParams(
            dimension_semantics=("parallel",)),   # v7x: shard batch over 2 TCs
    )(x, w2, b2, ga, gamma2, beta2, scale, shift)

    out = out.reshape(B, H, W, Cout)
    return jnp.transpose(out, (0, 3, 1, 2))       # -> NCHW


# ---------------------------- fp32 JAX reference -----------------------------

def block_reference(x, w, b, gamma, beta, groups=8, eps=1e-5):
    y = lax.conv_general_dilated(
        x, w, window_strides=(1, 1), padding=((1, 1), (1, 1)),
        dimension_numbers=("NCHW", "OIHW", "NCHW"))
    y = y + b[None, :, None, None]
    B, C, H, W = y.shape
    yg = y.reshape(B, groups, C // groups, H, W)
    mean = yg.mean(axis=(2, 3, 4), keepdims=True)
    var = ((yg - mean) ** 2).mean(axis=(2, 3, 4), keepdims=True)
    yn = ((yg - mean) / jnp.sqrt(var + eps)).reshape(B, C, H, W)
    yn = yn * gamma[None, :, None, None] + beta[None, :, None, None]
    return yn * jax.nn.sigmoid(yn)


# ------------------------------------ main -----------------------------------

if __name__ == "__main__":
    key = jax.random.PRNGKey(0)
    kx, kw, kb = jax.random.split(key, 3)

    B, C, H, W = 2, 32, 16, 16
    Cout, groups = 64, 8

    # nn.Conv2d default init; GroupNorm affine = (ones, zeros).
    fan_in = C * 9
    bound = 1.0 / math.sqrt(fan_in)
    params = {
        "w": jax.random.uniform(kw, (Cout, C, 3, 3), jnp.float32, -bound, bound),
        "b": jax.random.uniform(kb, (Cout,), jnp.float32, -bound, bound),
        "gamma": jnp.ones((Cout,), jnp.float32),
        "beta": jnp.zeros((Cout,), jnp.float32),
    }
    x = jax.random.normal(kx, (B, C, H, W), jnp.float32)

    # TODO(synk): scale_shift path is fused in-kernel but exercised here with
    #             None (zeros), matching Block's default usage in the Unet.
    fwd = jax.jit(partial(block_forward, groups=groups))
    out = jax.block_until_ready(fwd(params, x))

    assert out.shape == (B, Cout, H, W), out.shape
    assert bool(jnp.all(jnp.isfinite(out)))

    ref = block_reference(x, params["w"], params["b"], params["gamma"],
                          params["beta"], groups=groups)
    assert bool(jnp.allclose(out, ref, rtol=0.1, atol=0.1)), float(
        jnp.max(jnp.abs(out - ref)))

    print("KERNEL_OK")
</pallas_src>

<mosaic_0001>
module attributes {stable_mosaic.version = 11 : i64} {
  func.func @_block_kernel(%arg0: i32, %arg1: memref<1x290x32xf32, #tpu.memory_space<vmem>>, %arg2: memref<288x64xbf16, #tpu.memory_space<vmem>>, %arg3: memref<1x64xf32, #tpu.memory_space<vmem>>, %arg4: memref<64x64xf32, #tpu.memory_space<vmem>>, %arg5: memref<1x64xf32, #tpu.memory_space<vmem>>, %arg6: memref<1x64xf32, #tpu.memory_space<vmem>>, %arg7: memref<1x1x64xf32, #tpu.memory_space<vmem>>, %arg8: memref<1x1x64xf32, #tpu.memory_space<vmem>>, %arg9: memref<1x256x64xf32, #tpu.memory_space<vmem>>) attributes {dimension_semantics = [#tpu.dimension_semantics<parallel>], iteration_bounds = array<i64: 2>, scalar_prefetch = 0 : i64, scratch_operands = 0 : i64, tpu.core_type = #tpu.core_type<tc>, window_params = [{transform_indices = @transform_0, window_bounds = array<i64: 1, 290, 32>}, {pipeline_mode = #tpu.pipeline_mode<synchronous>, transform_indices = @transform_1, window_bounds = array<i64: 288, 64>}, {pipeline_mode = #tpu.pipeline_mode<synchronous>, transform_indices = @transform_2, window_bounds = array<i64: 1, 64>}, {pipeline_mode = #tpu.pipeline_mode<synchronous>, transform_indices = @transform_3, window_bounds = array<i64: 64, 64>}, {pipeline_mode = #tpu.pipeline_mode<synchronous>, transform_indices = @transform_4, window_bounds = array<i64: 1, 64>}, {pipeline_mode = #tpu.pipeline_mode<synchronous>, transform_indices = @transform_5, window_bounds = array<i64: 1, 64>}, {transform_indices = @transform_6, window_bounds = array<i64: 1, 1, 64>}, {transform_indices = @transform_7, window_bounds = array<i64: 1, 1, 64>}, {transform_indices = @transform_8, window_bounds = array<i64: 1, 256, 64>}]} {
    %0 = tpu.iota {dimensions = array<i32: 0>} : vector<256x32xi32>
    %c16_i32 = arith.constant 16 : i32
    %c0_i32 = arith.constant 0 : i32
    %1 = arith.cmpi eq, %c16_i32, %c0_i32 : i32
    %c1_i32 = arith.constant 1 : i32
    %2 = arith.select %1, %c1_i32, %c16_i32 : i32
    %3 = vector.broadcast %2 : i32 to vector<256x32xi32>
    %4 = arith.remsi %0, %3 : vector<256x32xi32>
    %c0_i32_0 = arith.constant 0 : i32
    %5 = vector.broadcast %c0_i32_0 : i32 to vector<256x32xi32>
    %6 = arith.cmpi ne, %4, %5 : vector<256x32xi32>
    %c0_i32_1 = arith.constant 0 : i32
    %7 = vector.broadcast %c0_i32_1 : i32 to vector<256x32xi32>
    %8 = arith.cmpi slt, %4, %7 : vector<256x32xi32>
    %c0_i32_2 = arith.constant 0 : i32
    %9 = arith.cmpi slt, %2, %c0_i32_2 : i32
    %10 = vector.broadcast %9 : i1 to vector<256x32xi1>
    %11 = vector.broadcast %10 : vector<256x32xi1> to vector<256x32xi1>
    %12 = arith.xori %8, %11 : vector<256x32xi1>
    %13 = arith.andi %12, %6 : vector<256x32xi1>
    %14 = vector.broadcast %2 : i32 to vector<256x32xi32>
    %15 = arith.addi %4, %14 : vector<256x32xi32>
    %16 = arith.select %13, %15, %4 : vector<256x32xi1>, vector<256x32xi32>
    %cst = arith.constant 0.000000e+00 : f32
    %17 = vector.broadcast %cst : f32 to vector<256x64xf32>
    %c0 = arith.constant 0 : index
    %c0_3 = arith.constant 0 : index
    %c0_4 = arith.constant 0 : index
    %18 = vector.load %arg1[%c0, %c0_3, %c0_4] : memref<1x290x32xf32, #tpu.memory_space<vmem>>, vector<1x256x32xf32>
    %19 = vector.shape_cast %18 : vector<1x256x32xf32> to vector<256x32xf32>
    %c-1_i32 = arith.constant -1 : i32
    %20 = vector.broadcast %c-1_i32 : i32 to vector<256x32xi32>
    %21 = arith.addi %16, %20 : vector<256x32xi32>
    %c0_i32_5 = arith.constant 0 : i32
    %22 = vector.broadcast %c0_i32_5 : i32 to vector<256x32xi32>
    %23 = arith.cmpi sge, %21, %22 : vector<256x32xi32>
    %c-1_i32_6 = arith.constant -1 : i32
    %24 = vector.broadcast %c-1_i32_6 : i32 to vector<256x32xi32>
    %25 = arith.addi %16, %24 : vector<256x32xi32>
    %c16_i32_7 = arith.constant 16 : i32
    %26 = vector.broadcast %c16_i32_7 : i32 to vector<256x32xi32>
    %27 = arith.cmpi slt, %25, %26 : vector<256x32xi32>
    %28 = arith.andi %23, %27 : vector<256x32xi1>
    %cst_8 = arith.constant 0.000000e+00 : f32
    %29 = vector.broadcast %cst_8 : f32 to vector<256x32xf32>
    %30 = arith.select %28, %19, %29 : vector<256x32xi1>, vector<256x32xf32>
    %c0_9 = arith.constant 0 : index
    %c0_10 = arith.constant 0 : index
    %31 = vector.load %arg2[%c0_9, %c0_10] : memref<288x64xbf16, #tpu.memory_space<vmem>>, vector<32x64xbf16>
    %32 = arith.truncf %30 : vector<256x32xf32> to vector<256x32xbf16>
    %cst_11 = arith.constant dense<0.000000e+00> : vector<256x64xf32>
    %33 = tpu.matmul %32, %31, %cst_11 {dimension_numbers = #tpu.dot_dimension_numbers<[1], [0], [0], [1], [0, 0, 1, 1], [], []>} : vector<256x32xbf16>, vector<32x64xbf16>, vector<256x64xf32> -> vector<256x64xf32>
    %34 = arith.addf %17, %33 : vector<256x64xf32>
    %c0_12 = arith.constant 0 : index
    %c1 = arith.constant 1 : index
    %c0_13 = arith.constant 0 : index
    %35 = vector.load %arg1[%c0_12, %c1, %c0_13] : memref<1x290x32xf32, #tpu.memory_space<vmem>>, vector<1x256x32xf32>
    %36 = vector.shape_cast %35 : vector<1x256x32xf32> to vector<256x32xf32>
    %c32 = arith.constant 32 : index
    %c0_14 = arith.constant 0 : index
    %37 = vector.load %arg2[%c32, %c0_14] : memref<288x64xbf16, #tpu.memory_space<vmem>>, vector<32x64xbf16>
    %38 = arith.truncf %36 : vector<256x32xf32> to vector<256x32xbf16>
    %cst_15 = arith.constant dense<0.000000e+00> : vector<256x64xf32>
    %39 = tpu.matmul %38, %37, %cst_15 {dimension_numbers = #tpu.dot_dimension_numbers<[1], [0], [0], [1], [0, 0, 1, 1], [], []>} : vector<256x32xbf16>, vector<32x64xbf16>, vector<256x64xf32> -> vector<256x64xf32>
    %40 = arith.addf %34, %39 : vector<256x64xf32>
    %c0_16 = arith.constant 0 : index
    %c2 = arith.constant 2 : index
    %c0_17 = arith.constant 0 : index
    %41 = vector.load %arg1[%c0_16, %c2, %c0_17] : memref<1x290x32xf32, #tpu.memory_space<vmem>>, vector<1x256x32xf32>
    %42 = vector.shape_cast %41 : vector<1x256x32xf32> to vector<256x32xf32>
    %c1_i32_18 = arith.constant 1 : i32
    %43 = vector.broadcast %c1_i32_18 : i32 to vector<256x32xi32>
    %44 = arith.addi %16, %43 : vector<256x32xi32>
    %c0_i32_19 = arith.constant 0 : i32
    %45 = vector.broadcast %c0_i32_19 : i32 to vector<256x32xi32>
    %46 = arith.cmpi sge, %44, %45 : vector<256x32xi32>
    %c1_i32_20 = arith.constant 1 : i32
    %47 = vector.broadcast %c1_i32_20 : i32 to vector<256x32xi32>
    %48 = arith.addi %16, %47 : vector<256x32xi32>
    %c16_i32_21 = arith.constant 16 : i32
    %49 = vector.broadcast %c16_i32_21 : i32 to vector<256x32xi32>
    %50 = arith.cmpi slt, %48, %49 : vector<256x32xi32>
    %51 = arith.andi %46, %50 : vector<256x32xi1>
    %cst_22 = arith.constant 0.000000e+00 : f32
    %52 = vector.broadcast %cst_22 : f32 to vector<256x32xf32>
    %53 = arith.select %51, %42, %52 : vector<256x32xi1>, vector<256x32xf32>
    %c64 = arith.constant 64 : index
    %c0_23 = arith.constant 0 : index
    %54 = vector.load %arg2[%c64, %c0_23] : memref<288x64xbf16, #tpu.memory_space<vmem>>, vector<32x64xbf16>
    %55 = arith.truncf %53 : vector<256x32xf32> to vector<256x32xbf16>
    %cst_24 = arith.constant dense<0.000000e+00> : vector<256x64xf32>
    %56 = tpu.matmul %55, %54, %cst_24 {dimension_numbers = #tpu.dot_dimension_numbers<[1], [0], [0], [1], [0, 0, 1, 1], [], []>} : vector<256x32xbf16>, vector<32x64xbf16>, vector<256x64xf32> -> vector<256x64xf32>
    %57 = arith.addf %40, %56 : vector<256x64xf32>
    %c0_25 = arith.constant 0 : index
    %c16 = arith.constant 16 : index
    %c0_26 = arith.constant 0 : index
    %58 = vector.load %arg1[%c0_25, %c16, %c0_26] : memref<1x290x32xf32, #tpu.memory_space<vmem>>, vector<1x256x32xf32>
    %59 = vector.shape_cast %58 : vector<1x256x32xf32> to vector<256x32xf32>
    %c-1_i32_27 = arith.constant -1 : i32
    %60 = vector.broadcast %c-1_i32_27 : i32 to vector<256x32xi32>
    %61 = arith.addi %16, %60 : vector<256x32xi32>
    %c0_i32_28 = arith.constant 0 : i32
    %62 = vector.broadcast %c0_i32_28 : i32 to vector<256x32xi32>
    %63 = arith.cmpi sge, %61, %62 : vector<256x32xi32>
    %c-1_i32_29 = arith.constant -1 : i32
    %64 = vector.broadcast %c-1_i32_29 : i32 to vector<256x32xi32>
    %65 = arith.addi %16, %64 : vector<256x32xi32>
    %c16_i32_30 = arith.constant 16 : i32
    %66 = vector.broadcast %c16_i32_30 : i32 to vector<256x32xi32>
    %67 = arith.cmpi slt, %65, %66 : vector<256x32xi32>
    %68 = arith.andi %63, %67 : vector<256x32xi1>
    %cst_31 = arith.constant 0.000000e+00 : f32
    %69 = vector.broadcast %cst_31 : f32 to vector<256x32xf32>
    %70 = arith.select %68, %59, %69 : vector<256x32xi1>, vector<256x32xf32>
    %c96 = arith.constant 96 : index
    %c0_32 = arith.constant 0 : index
    %71 = vector.load %arg2[%c96, %c0_32] : memref<288x64xbf16, #tpu.memory_space<vmem>>, vector<32x64xbf16>
    %72 = arith.truncf %70 : vector<256x32xf32> to vector<256x32xbf16>
    %cst_33 = arith.constant dense<0.000000e+00> : vector<256x64xf32>
    %73 = tpu.matmul %72, %71, %cst_33 {dimension_numbers = #tpu.dot_dimension_numbers<[1], [0], [0], [1], [0, 0, 1, 1], [], []>} : vector<256x32xbf16>, vector<32x64xbf16>, vector<256x64xf32> -> vector<256x64xf32>
    %74 = arith.addf %57, %73 : vector<256x64xf32>
    %c0_34 = arith.constant 0 : index
    %c17 = arith.constant 17 : index
    %c0_35 = arith.constant 0 : index
    %75 = vector.load %arg1[%c0_34, %c17, %c0_35] : memref<1x290x32xf32, #tpu.memory_space<vmem>>, vector<1x256x32xf32>
    %76 = vector.shape_cast %75 : vector<1x256x32xf32> to vector<256x32xf32>
    %c128 = arith.constant 128 : index
    %c0_36 = arith.constant 0 : index
    %77 = vector.load %arg2[%c128, %c0_36] : memref<288x64xbf16, #tpu.memory_space<vmem>>, vector<32x64xbf16>
    %78 = arith.truncf %76 : vector<256x32xf32> to vector<256x32xbf16>
    %cst_37 = arith.constant dense<0.000000e+00> : vector<256x64xf32>
    %79 = tpu.matmul %78, %77, %cst_37 {dimension_numbers = #tpu.dot_dimension_numbers<[1], [0], [0], [1], [0, 0, 1, 1], [], []>} : vector<256x32xbf16>, vector<32x64xbf16>, vector<256x64xf32> -> vector<256x64xf32>
    %80 = arith.addf %74, %79 : vector<256x64xf32>
    %c0_38 = arith.constant 0 : index
    %c18 = arith.constant 18 : index
    %c0_39 = arith.constant 0 : index
    %81 = vector.load %arg1[%c0_38, %c18, %c0_39] : memref<1x290x32xf32, #tpu.memory_space<vmem>>, vector<1x256x32xf32>
    %82 = vector.shape_cast %81 : vector<1x256x32xf32> to vector<256x32xf32>
    %c1_i32_40 = arith.constant 1 : i32
    %83 = vector.broadcast %c1_i32_40 : i32 to vector<256x32xi32>
    %84 = arith.addi %16, %83 : vector<256x32xi32>
    %c0_i32_41 = arith.constant 0 : i32
    %85 = vector.broadcast %c0_i32_41 : i32 to vector<256x32xi32>
    %86 = arith.cmpi sge, %84, %85 : vector<256x32xi32>
    %c1_i32_42 = arith.constant 1 : i32
    %87 = vector.broadcast %c1_i32_42 : i32 to vector<256x32xi32>
    %88 = arith.addi %16, %87 : vector<256x32xi32>
    %c16_i32_43 = arith.constant 16 : i32
    %89 = vector.broadcast %c16_i32_43 : i32 to vector<256x32xi32>
    %90 = arith.cmpi slt, %88, %89 : vector<256x32xi32>
    %91 = arith.andi %86, %90 : vector<256x32xi1>
    %cst_44 = arith.constant 0.000000e+00 : f32
    %92 = vector.broadcast %cst_44 : f32 to vector<256x32xf32>
    %93 = arith.select %91, %82, %92 : vector<256x32xi1>, vector<256x32xf32>
    %c160 = arith.constant 160 : index
    %c0_45 = arith.constant 0 : index
    %94 = vector.load %arg2[%c160, %c0_45] : memref<288x64xbf16, #tpu.memory_space<vmem>>, vector<32x64xbf16>
    %95 = arith.truncf %93 : vector<256x32xf32> to vector<256x32xbf16>
    %cst_46 = arith.constant dense<0.000000e+00> : vector<256x64xf32>
    %96 = tpu.matmul %95, %94, %cst_46 {dimension_numbers = #tpu.dot_dimension_numbers<[1], [0], [0], [1], [0, 0, 1, 1], [], []>} : vector<256x32xbf16>, vector<32x64xbf16>, vector<256x64xf32> -> vector<256x64xf32>
    %97 = arith.addf %80, %96 : vector<256x64xf32>
    %c0_47 = arith.constant 0 : index
    %c32_48 = arith.constant 32 : index
    %c0_49 = arith.constant 0 : index
    %98 = vector.load %arg1[%c0_47, %c32_48, %c0_49] : memref<1x290x32xf32, #tpu.memory_space<vmem>>, vector<1x256x32xf32>
    %99 = vector.shape_cast %98 : vector<1x256x32xf32> to vector<256x32xf32>
    %c-1_i32_50 = arith.constant -1 : i32
    %100 = vector.broadcast %c-1_i32_50 : i32 to vector<256x32xi32>
    %101 = arith.addi %16, %100 : vector<256x32xi32>
    %c0_i32_51 = arith.constant 0 : i32
    %102 = vector.broadcast %c0_i32_51 : i32 to vector<256x32xi32>
    %103 = arith.cmpi sge, %101, %102 : vector<256x32xi32>
    %c-1_i32_52 = arith.constant -1 : i32
    %104 = vector.broadcast %c-1_i32_52 : i32 to vector<256x32xi32>
    %105 = arith.addi %16, %104 : vector<256x32xi32>
    %c16_i32_53 = arith.constant 16 : i32
    %106 = vector.broadcast %c16_i32_53 : i32 to vector<256x32xi32>
    %107 = arith.cmpi slt, %105, %106 : vector<256x32xi32>
    %108 = arith.andi %103, %107 : vector<256x32xi1>
    %cst_54 = arith.constant 0.000000e+00 : f32
    %109 = vector.broadcast %cst_54 : f32 to vector<256x32xf32>
    %110 = arith.select %108, %99, %109 : vector<256x32xi1>, vector<256x32xf32>
    %c192 = arith.constant 192 : index
    %c0_55 = arith.constant 0 : index
    %111 = vector.load %arg2[%c192, %c0_55] : memref<288x64xbf16, #tpu.memory_space<vmem>>, vector<32x64xbf16>
    %112 = arith.truncf %110 : vector<256x32xf32> to vector<256x32xbf16>
    %cst_56 = arith.constant dense<0.000000e+00> : vector<256x64xf32>
    %113 = tpu.matmul %112, %111, %cst_56 {dimension_numbers = #tpu.dot_dimension_numbers<[1], [0], [0], [1], [0, 0, 1, 1], [], []>} : vector<256x32xbf16>, vector<32x64xbf16>, vector<256x64xf32> -> vector<256x64xf32>
    %114 = arith.addf %97, %113 : vector<256x64xf32>
    %c0_57 = arith.constant 0 : index
    %c33 = arith.constant 33 : index
    %c0_58 = arith.constant 0 : index
    %115 = vector.load %arg1[%c0_57, %c33, %c0_58] : memref<1x290x32xf32, #tpu.memory_space<vmem>>, vector<1x256x32xf32>
    %116 = vector.shape_cast %115 : vector<1x256x32xf32> to vector<256x32xf32>
    %c224 = arith.constant 224 : index
    %c0_59 = arith.constant 0 : index
    %117 = vector.load %arg2[%c224, %c0_59] : memref<288x64xbf16, #tpu.memory_space<vmem>>, vector<32x64xbf16>
    %118 = arith.truncf %116 : vector<256x32xf32> to vector<256x32xbf16>
    %cst_60 = arith.constant dense<0.000000e+00> : vector<256x64xf32>
    %119 = tpu.matmul %118, %117, %cst_60 {dimension_numbers = #tpu.dot_dimension_numbers<[1], [0], [0], [1], [0, 0, 1, 1], [], []>} : vector<256x32xbf16>, vector<32x64xbf16>, vector<256x64xf32> -> vector<256x64xf32>
    %120 = arith.addf %114, %119 : vector<256x64xf32>
    %c0_61 = arith.constant 0 : index
    %c34 = arith.constant 34 : index
    %c0_62 = arith.constant 0 : index
    %121 = vector.load %arg1[%c0_61, %c34, %c0_62] : memref<1x290x32xf32, #tpu.memory_space<vmem>>, vector<1x256x32xf32>
    %122 = vector.shape_cast %121 : vector<1x256x32xf32> to vector<256x32xf32>
    %c1_i32_63 = arith.constant 1 : i32
    %123 = vector.broadcast %c1_i32_63 : i32 to vector<256x32xi32>
    %124 = arith.addi %16, %123 : vector<256x32xi32>
    %c0_i32_64 = arith.constant 0 : i32
    %125 = vector.broadcast %c0_i32_64 : i32 to vector<256x32xi32>
    %126 = arith.cmpi sge, %124, %125 : vector<256x32xi32>
    %c1_i32_65 = arith.constant 1 : i32
    %127 = vector.broadcast %c1_i32_65 : i32 to vector<256x32xi32>
    %128 = arith.addi %16, %127 : vector<256x32xi32>
    %c16_i32_66 = arith.constant 16 : i32
    %129 = vector.broadcast %c16_i32_66 : i32 to vector<256x32xi32>
    %130 = arith.cmpi slt, %128, %129 : vector<256x32xi32>
    %131 = arith.andi %126, %130 : vector<256x32xi1>
    %cst_67 = arith.constant 0.000000e+00 : f32
    %132 = vector.broadcast %cst_67 : f32 to vector<256x32xf32>
    %133 = arith.select %131, %122, %132 : vector<256x32xi1>, vector<256x32xf32>
    %c256 = arith.constant 256 : index
    %c0_68 = arith.constant 0 : index
    %134 = vector.load %arg2[%c256, %c0_68] : memref<288x64xbf16, #tpu.memory_space<vmem>>, vector<32x64xbf16>
    %135 = arith.truncf %133 : vector<256x32xf32> to vector<256x32xbf16>
    %cst_69 = arith.constant dense<0.000000e+00> : vector<256x64xf32>
    %136 = tpu.matmul %135, %134, %cst_69 {dimension_numbers = #tpu.dot_dimension_numbers<[1], [0], [0], [1], [0, 0, 1, 1], [], []>} : vector<256x32xbf16>, vector<32x64xbf16>, vector<256x64xf32> -> vector<256x64xf32>
    %137 = arith.addf %120, %136 : vector<256x64xf32>
    %c0_70 = arith.constant 0 : index
    %c0_71 = arith.constant 0 : index
    %138 = vector.load %arg3[%c0_70, %c0_71] : memref<1x64xf32, #tpu.memory_space<vmem>>, vector<1x64xf32>
    %139 = vector.broadcast %138 : vector<1x64xf32> to vector<256x64xf32>
    %140 = arith.addf %137, %139 : vector<256x64xf32>
    %cst_72 = arith.constant dense<0.000000e+00> : vector<64xf32>
    %141 = vector.multi_reduction <add>, %140, %cst_72 [0] : vector<256x64xf32> to vector<64xf32>
    %142 = vector.shape_cast %141 : vector<64xf32> to vector<1x64xf32>
    %143 = arith.mulf %140, %140 : vector<256x64xf32>
    %cst_73 = arith.constant dense<0.000000e+00> : vector<64xf32>
    %144 = vector.multi_reduction <add>, %143, %cst_73 [0] : vector<256x64xf32> to vector<64xf32>
    %145 = vector.shape_cast %144 : vector<64xf32> to vector<1x64xf32>
    %c0_74 = arith.constant 0 : index
    %c0_75 = arith.constant 0 : index
    %146 = vector.load %arg4[%c0_74, %c0_75] : memref<64x64xf32, #tpu.memory_space<vmem>>, vector<64x64xf32>
    %cst_76 = arith.constant dense<0.000000e+00> : vector<1x64xf32>
    %147 = tpu.matmul %142, %146, %cst_76 {dimension_numbers = #tpu.dot_dimension_numbers<[1], [0], [0], [1], [0, 0, 1, 1], [], []>} : vector<1x64xf32>, vector<64x64xf32>, vector<1x64xf32> -> vector<1x64xf32>
    %c0_77 = arith.constant 0 : index
    %c0_78 = arith.constant 0 : index
    %148 = vector.load %arg4[%c0_77, %c0_78] : memref<64x64xf32, #tpu.memory_space<vmem>>, vector<64x64xf32>
    %cst_79 = arith.constant dense<0.000000e+00> : vector<1x64xf32>
    %149 = tpu.matmul %145, %148, %cst_79 {dimension_numbers = #tpu.dot_dimension_numbers<[1], [0], [0], [1], [0, 0, 1, 1], [], []>} : vector<1x64xf32>, vector<64x64xf32>, vector<1x64xf32> -> vector<1x64xf32>
    %150 = arith.mulf %147, %147 : vector<1x64xf32>
    %151 = arith.subf %149, %150 : vector<1x64xf32>
    %cst_80 = arith.constant 9.99999974E-6 : f32
    %152 = vector.broadcast %cst_80 : f32 to vector<1x64xf32>
    %153 = arith.addf %151, %152 : vector<1x64xf32>
    %154 = math.rsqrt %153 : vector<1x64xf32>
    %155 = vector.broadcast %147 : vector<1x64xf32> to vector<256x64xf32>
    %156 = arith.subf %140, %155 : vector<256x64xf32>
    %157 = vector.broadcast %154 : vector<1x64xf32> to vector<256x64xf32>
    %158 = arith.mulf %156, %157 : vector<256x64xf32>
    %c0_81 = arith.constant 0 : index
    %c0_82 = arith.constant 0 : index
    %159 = vector.load %arg5[%c0_81, %c0_82] : memref<1x64xf32, #tpu.memory_space<vmem>>, vector<1x64xf32>
    %160 = vector.broadcast %159 : vector<1x64xf32> to vector<256x64xf32>
    %161 = arith.mulf %158, %160 : vector<256x64xf32>
    %c0_83 = arith.constant 0 : index
    %c0_84 = arith.constant 0 : index
    %162 = vector.load %arg6[%c0_83, %c0_84] : memref<1x64xf32, #tpu.memory_space<vmem>>, vector<1x64xf32>
    %163 = vector.broadcast %162 : vector<1x64xf32> to vector<256x64xf32>
    %164 = arith.addf %161, %163 : vector<256x64xf32>
    %c0_85 = arith.constant 0 : index
    %c0_86 = arith.constant 0 : index
    %c0_87 = arith.constant 0 : index
    %165 = vector.load %arg7[%c0_85, %c0_86, %c0_87] : memref<1x1x64xf32, #tpu.memory_space<vmem>>, vector<1x1x64xf32>
    %166 = vector.shape_cast %165 : vector<1x1x64xf32> to vector<1x64xf32>
    %cst_88 = arith.constant 1.000000e+00 : f32
    %167 = vector.broadcast %cst_88 : f32 to vector<1x64xf32>
    %168 = arith.addf %166, %167 : vector<1x64xf32>
    %169 = vector.broadcast %168 : vector<1x64xf32> to vector<256x64xf32>
    %170 = arith.mulf %164, %169 : vector<256x64xf32>
    %c0_89 = arith.constant 0 : index
    %c0_90 = arith.constant 0 : index
    %c0_91 = arith.constant 0 : index
    %171 = vector.load %arg8[%c0_89, %c0_90, %c0_91] : memref<1x1x64xf32, #tpu.memory_space<vmem>>, vector<1x1x64xf32>
    %172 = vector.shape_cast %171 : vector<1x1x64xf32> to vector<1x64xf32>
    %173 = vector.broadcast %172 : vector<1x64xf32> to vector<256x64xf32>
    %174 = arith.addf %170, %173 : vector<256x64xf32>
    %cst_92 = arith.constant 0.000000e+00 : f32
    %175 = vector.broadcast %cst_92 : f32 to vector<256x64xf32>
    %176 = arith.subf %175, %174 : vector<256x64xf32>
    %177 = math.exp %176 : vector<256x64xf32>
    %cst_93 = arith.constant 1.000000e+00 : f32
    %178 = vector.broadcast %cst_93 : f32 to vector<256x64xf32>
    %179 = arith.addf %178, %177 : vector<256x64xf32>
    %180 = tpu.reciprocal %179 {approx = true} : vector<256x64xf32> -> vector<256x64xf32>
    %181 = arith.mulf %174, %180 : vector<256x64xf32>
    %c0_94 = arith.constant 0 : index
    %c0_95 = arith.constant 0 : index
    %c0_96 = arith.constant 0 : index
    %182 = vector.load %arg9[%c0_94, %c0_95, %c0_96] : memref<1x256x64xf32, #tpu.memory_space<vmem>>, vector<1x256x64xf32>
    %183 = vector.shape_cast %182 : vector<1x256x64xf32> to vector<256x64xf32>
    %184 = vector.shape_cast %181 : vector<256x64xf32> to vector<1x256x64xf32>
    tpu.vector_store %arg9[%c0_94, %c0_95, %c0_96], %184 {strides = array<i32>} : memref<1x256x64xf32, #tpu.memory_space<vmem>>, vector<1x256x64xf32>,
    return
  }
  func.func @transform_0(%arg0: i32) -> (i32, i32, i32) {
    %c0_i32 = arith.constant 0 : i32
    %c0_i32_0 = arith.constant 0 : i32
    %c0_i32_1 = arith.constant 0 : i32
    return %arg0, %c0_i32, %c0_i32_0 : i32, i32, i32
  }
  func.func @transform_1(%arg0: i32) -> (i32, i32) {
    %c0_i32 = arith.constant 0 : i32
    %c0_i32_0 = arith.constant 0 : i32
    %c0_i32_1 = arith.constant 0 : i32
    return %c0_i32, %c0_i32_0 : i32, i32
  }
  func.func @transform_2(%arg0: i32) -> (i32, i32) {
    %c0_i32 = arith.constant 0 : i32
    %c0_i32_0 = arith.constant 0 : i32
    %c0_i32_1 = arith.constant 0 : i32
    return %c0_i32, %c0_i32_0 : i32, i32
  }
  func.func @transform_3(%arg0: i32) -> (i32, i32) {
    %c0_i32 = arith.constant 0 : i32
    %c0_i32_0 = arith.constant 0 : i32
    %c0_i32_1 = arith.constant 0 : i32
    return %c0_i32, %c0_i32_0 : i32, i32
  }
  func.func @transform_4(%arg0: i32) -> (i32, i32) {
    %c0_i32 = arith.constant 0 : i32
    %c0_i32_0 = arith.constant 0 : i32
    %c0_i32_1 = arith.constant 0 : i32
    return %c0_i32, %c0_i32_0 : i32, i32
  }
  func.func @transform_5(%arg0: i32) -> (i32, i32) {
    %c0_i32 = arith.constant 0 : i32
    %c0_i32_0 = arith.constant 0 : i32
    %c0_i32_1 = arith.constant 0 : i32
    return %c0_i32, %c0_i32_0 : i32, i32
  }
  func.func @transform_6(%arg0: i32) -> (i32, i32, i32) {
    %c0_i32 = arith.constant 0 : i32
    %c0_i32_0 = arith.constant 0 : i32
    %c0_i32_1 = arith.constant 0 : i32
    return %arg0, %c0_i32, %c0_i32_0 : i32, i32, i32
  }
  func.func @transform_7(%arg0: i32) -> (i32, i32, i32) {
    %c0_i32 = arith.constant 0 : i32
    %c0_i32_0 = arith.constant 0 : i32
    %c0_i32_1 = arith.constant 0 : i32
    return %arg0, %c0_i32, %c0_i32_0 : i32, i32, i32
  }
  func.func @transform_8(%arg0: i32) -> (i32, i32, i32) {
    %c0_i32 = arith.constant 0 : i32
    %c0_i32_0 = arith.constant 0 : i32
    %c0_i32_1 = arith.constant 0 : i32
    return %arg0, %c0_i32, %c0_i32_0 : i32, i32, i32
  }
}

</mosaic_0001>

<llo_original>
// kernel: block_forward.1
$region0: #{block_forward.1}
  #allocation0 [shape = 'u32[]', space=smem, size = 0x4, offset = 0x4, fixed_abs, tag = 'smem constant byte address 0x4 - core index']
  #allocation1 [shape = 'u32[72,128]{1,0:T(1,128)}', space=vmem, size = 0x9000, scoped, tag = 'internal scratch']
  %s0 = inlined_call_operand.vmem [shape: f32[2,290,32], index: 0, kind: input, shape index: {}]
  %s1 = inlined_call_operand.vmem [shape: bf16[288,64], index: 1, kind: input, shape index: {}]
  %s2 = inlined_call_operand.vmem [shape: f32[1,64], index: 2, kind: input, shape index: {}]
  %s3 = inlined_call_operand.vmem [shape: f32[64,64], index: 3, kind: input, shape index: {}]
  %s4 = inlined_call_operand.vmem [shape: f32[1,64], index: 4, kind: input, shape index: {}]
  %s5 = inlined_call_operand.vmem [shape: f32[1,64], index: 5, kind: input, shape index: {}]
  %s6 = inlined_call_operand.vmem [shape: f32[2,1,64], index: 6, kind: input, shape index: {}, may-alias: {6,7}]
  %s7 = inlined_call_operand.vmem [shape: f32[2,1,64], index: 7, kind: input, shape index: {}, may-alias: {6,7}]
  %s8 = inlined_call_operand.hbm [shape: f32[2,256,64], index: 8, kind: output, shape index: {}]
  %s9 = sld [smem:[#allocation0]]
  $region65: #{block_forward.1} parent=0
    _
  %s11 = ssub.s32 1, %s9
  %s12 = scalar_select 0, %s11, %s9
  $region1: #{block_forward.1} parent=0
    #allocation2 [shape = 'u8[262144]{0}', space=vmem, size = 0x40000, scoped, tag = 'output window, operand 0']
    #allocation3 [shape = 's32[2]{0}', space=sflag, size = 0x8, scoped, tag = 'scoped memory for block_forward.1']
    %13 = vsyncpa [#allocation3], 0
    %s14 = scalar_lea.sflag [#allocation3], 1
    %15 = vsyncpa %s14, 0
    loop: start=0, step=1, limit=4
    $region2: #{block_forward.1} parent=1 // loop_pre_header
      _
    $region3: #{block_forward.1} parent=1 // loop_header
      %s17 = sphi 0, %s21
      %p18 = scmp.ge.s32.totalorder %s17, 4
      %s27 = sphi 0, %s29
      %s30 = sphi 0, %s27
      %s31 = sphi 0, %s30
      %s47 = sphi 0, %s31
      %s51 = sphi 0, %s51
      %s53 = sphi 0, %s51
      %s54 = sphi 0, %s53
      %s68 = sphi 0, %s54
      %s72 = sphi 0, %s72
      %s74 = sphi 0, %s72
      %s75 = sphi 0, %s74
      %s89 = sphi 0, %s75
      %s93 = sphi 0, %s93
      %s95 = sphi 0, %s93
      %s96 = sphi 0, %s95
      %s110 = sphi 0, %s96
      %s114 = sphi 0, %s114
      %s116 = sphi 0, %s114
      %s117 = sphi 0, %s116
      %s131 = sphi 0, %s117
      %s135 = sphi 0, %s135
      %s137 = sphi 0, %s135
      %s138 = sphi 0, %s137
      %s152 = sphi 0, %s138
      %s158 = sphi 0, %s160
      %s161 = sphi 0, %s158
      %s162 = sphi 0, %s161
      %s178 = sphi 0, %s162
      %s184 = sphi 0, %s186
      %s187 = sphi 0, %s184
      %s188 = sphi 0, %s187
      %s204 = sphi 0, %s188
      %s210 = sphi 0, %s212
      %s213 = sphi 0, %s210
      %s214 = sphi 0, %s213
      %s230 = sphi 0, %s214
    $region4: #{block_forward.1} parent=1 // loop_header_branch
      %20 = sbr.rel (%p18) target = $region8
    $region5: #{block_forward.1} parent=1 // loop_body
      %s22 = ssub.s32 %s17, 1
      %s23 = ssub.s32 %s17, 2
      %s24 = sadd.s32 %s17, 1
      %s25 = ssub.s32 %s17, %s24
      %p26 = scmp.eq.s32.totalorder %s25, 0
      %s28 = sadd.s32 %s27, 1
      %s29 = scalar_select %p26, %s27, %s28
      %p32 = pneg %p26
      %p33 = scmp.eq.s32.totalorder %s17, 1
      %p34 = por %p32, %p33
      %p35 = scmp.ne.s32.totalorder %s27, %s30
      %p36 = scmp.eq.s32.totalorder %s17, 0
      %p37 = por %p35, %p36
      %p38 = scmp.ne.s32.totalorder %s27, %s30
      %p39 = scmp.eq.s32.totalorder %s22, 1
      %p40 = por %p38, %p39
      %p41 = scmp.ne.s32.totalorder %s30, %s31
      %p42 = scmp.eq.s32.totalorder %s22, 0
      %p43 = por %p41, %p42
      %p44 = scmp.ne.s32.totalorder %s30, %s31
      %p45 = scmp.eq.s32.totalorder %s23, 1
      %p46 = por %p44, %p45
      %p48 = scmp.ne.s32.totalorder %s31, %s47
      %p49 = scmp.eq.s32.totalorder %s23, 0
      %p50 = por %p48, %p49
      %s52 = sadd.s32 %s51, 1
      %p55 = scmp.eq.s32.totalorder %s17, 1
      %p56 = scmp.ne.s32.totalorder %s51, %s53
      %p57 = scmp.eq.s32.totalorder %s17, 0
      %p58 = por %p56, %p57
      %p59 = scmp.ne.s32.totalorder %s51, %s53
      %p60 = scmp.eq.s32.totalorder %s22, 1
      %p61 = por %p59, %p60
      %p62 = scmp.ne.s32.totalorder %s53, %s54
      %p63 = scmp.eq.s32.totalorder %s22, 0
      %p64 = por %p62, %p63
      %p65 = scmp.ne.s32.totalorder %s53, %s54
      %p66 = scmp.eq.s32.totalorder %s23, 1
      %p67 = por %p65, %p66
      %p69 = scmp.ne.s32.totalorder %s54, %s68
      %p70 = scmp.eq.s32.totalorder %s23, 0
      %p71 = por %p69, %p70
      %s73 = sadd.s32 %s72, 1
      %p76 = scmp.eq.s32.totalorder %s17, 1
      %p77 = scmp.ne.s32.totalorder %s72, %s74
      %p78 = scmp.eq.s32.totalorder %s17, 0
      %p79 = por %p77, %p78
      %p80 = scmp.ne.s32.totalorder %s72, %s74
      %p81 = scmp.eq.s32.totalorder %s22, 1
      %p82 = por %p80, %p81
      %p83 = scmp.ne.s32.totalorder %s74, %s75
      %p84 = scmp.eq.s32.totalorder %s22, 0
      %p85 = por %p83, %p84
      %p86 = scmp.ne.s32.totalorder %s74, %s75
      %p87 = scmp.eq.s32.totalorder %s23, 1
      %p88 = por %p86, %p87
      %p90 = scmp.ne.s32.totalorder %s75, %s89
      %p91 = scmp.eq.s32.totalorder %s23, 0
      %p92 = por %p90, %p91
      %s94 = sadd.s32 %s93, 1
      %p97 = scmp.eq.s32.totalorder %s17, 1
      %p98 = scmp.ne.s32.totalorder %s93, %s95
      %p99 = scmp.eq.s32.totalorder %s17, 0
      %p100 = por %p98, %p99
      %p101 = scmp.ne.s32.totalorder %s93, %s95
      %p102 = scmp.eq.s32.totalorder %s22, 1
      %p103 = por %p101, %p102
      %p104 = scmp.ne.s32.totalorder %s95, %s96
      %p105 = scmp.eq.s32.totalorder %s22, 0
      %p106 = por %p104, %p105
      %p107 = scmp.ne.s32.totalorder %s95, %s96
      %p108 = scmp.eq.s32.totalorder %s23, 1
      %p109 = por %p107, %p108
      %p111 = scmp.ne.s32.totalorder %s96, %s110
      %p112 = scmp.eq.s32.totalorder %s23, 0
      %p113 = por %p111, %p112
      %s115 = sadd.s32 %s114, 1
      %p118 = scmp.eq.s32.totalorder %s17, 1
      %p119 = scmp.ne.s32.totalorder %s114, %s116
      %p120 = scmp.eq.s32.totalorder %s17, 0
      %p121 = por %p119, %p120
      %p122 = scmp.ne.s32.totalorder %s114, %s116
      %p123 = scmp.eq.s32.totalorder %s22, 1
      %p124 = por %p122, %p123
      %p125 = scmp.ne.s32.totalorder %s116, %s117
      %p126 = scmp.eq.s32.totalorder %s22, 0
      %p127 = por %p125, %p126
      %p128 = scmp.ne.s32.totalorder %s116, %s117
      %p129 = scmp.eq.s32.totalorder %s23, 1
      %p130 = por %p128, %p129
      %p132 = scmp.ne.s32.totalorder %s117, %s131
      %p133 = scmp.eq.s32.totalorder %s23, 0
      %p134 = por %p132, %p133
      %s136 = sadd.s32 %s135, 1
      %p139 = scmp.eq.s32.totalorder %s17, 1
      %p140 = scmp.ne.s32.totalorder %s135, %s137
      %p141 = scmp.eq.s32.totalorder %s17, 0
      %p142 = por %p140, %p141
      %p143 = scmp.ne.s32.totalorder %s135, %s137
      %p144 = scmp.eq.s32.totalorder %s22, 1
      %p145 = por %p143, %p144
      %p146 = scmp.ne.s32.totalorder %s137, %s138
      %p147 = scmp.eq.s32.totalorder %s22, 0
      %p148 = por %p146, %p147
      %p149 = scmp.ne.s32.totalorder %s137, %s138
      %p150 = scmp.eq.s32.totalorder %s23, 1
      %p151 = por %p149, %p150
      %p153 = scmp.ne.s32.totalorder %s138, %s152
      %p154 = scmp.eq.s32.totalorder %s23, 0
      %p155 = por %p153, %p154
      %s156 = ssub.s32 %s17, %s24
      %p157 = scmp.eq.s32.totalorder %s156, 0
      %s159 = sadd.s32 %s158, 1
      %s160 = scalar_select %p157, %s158, %s159
      %p163 = pneg %p157
      %p164 = scmp.eq.s32.totalorder %s17, 1
      %p165 = por %p163, %p164
      %p166 = scmp.ne.s32.totalorder %s158, %s161
      %p167 = scmp.eq.s32.totalorder %s17, 0
      %p168 = por %p166, %p167
      %p169 = scmp.ne.s32.totalorder %s158, %s161
      %p170 = scmp.eq.s32.totalorder %s22, 1
      %p171 = por %p169, %p170
      %p172 = scmp.ne.s32.totalorder %s161, %s162
      %p173 = scmp.eq.s32.totalorder %s22, 0
      %p174 = por %p172, %p173
      %p175 = scmp.ne.s32.totalorder %s161, %s162
      %p176 = scmp.eq.s32.totalorder %s23, 1
      %p177 = por %p175, %p176
      %p179 = scmp.ne.s32.totalorder %s162, %s178
      %p180 = scmp.eq.s32.totalorder %s23, 0
      %p181 = por %p179, %p180
      %s182 = ssub.s32 %s17, %s24
      %p183 = scmp.eq.s32.totalorder %s182, 0
      %s185 = sadd.s32 %s184, 1
      %s186 = scalar_select %p183, %s184, %s185
      %p189 = pneg %p183
      %p190 = scmp.eq.s32.totalorder %s17, 1
      %p191 = por %p189, %p190
      %p192 = scmp.ne.s32.totalorder %s184, %s187
      %p193 = scmp.eq.s32.totalorder %s17, 0
      %p194 = por %p192, %p193
      %p195 = scmp.ne.s32.totalorder %s184, %s187
      %p196 = scmp.eq.s32.totalorder %s22, 1
      %p197 = por %p195, %p196
      %p198 = scmp.ne.s32.totalorder %s187, %s188
      %p199 = scmp.eq.s32.totalorder %s22, 0
      %p200 = por %p198, %p199
      %p201 = scmp.ne.s32.totalorder %s187, %s188
      %p202 = scmp.eq.s32.totalorder %s23, 1
      %p203 = por %p201, %p202
      %p205 = scmp.ne.s32.totalorder %s188, %s204
      %p206 = scmp.eq.s32.totalorder %s23, 0
      %p207 = por %p205, %p206
      %s208 = ssub.s32 %s17, %s24
      %p209 = scmp.eq.s32.totalorder %s208, 0
      %s211 = sadd.s32 %s210, 1
      %s212 = scalar_select %p209, %s210, %s211
      %p215 = pneg %p209
      %p216 = scmp.eq.s32.totalorder %s17, 1
      %p217 = por %p215, %p216
      %p218 = scmp.ne.s32.totalorder %s210, %s213
      %p219 = scmp.eq.s32.totalorder %s17, 0
      %p220 = por %p218, %p219
      %p221 = scmp.ne.s32.totalorder %s210, %s213
      %p222 = scmp.eq.s32.totalorder %s22, 1
      %p223 = por %p221, %p222
      %p224 = scmp.ne.s32.totalorder %s213, %s214
      %p225 = scmp.eq.s32.totalorder %s22, 0
      %p226 = por %p224, %p225
      %p227 = scmp.ne.s32.totalorder %s213, %s214
      %p228 = scmp.eq.s32.totalorder %s23, 1
      %p229 = por %p227, %p228
      %p231 = scmp.ne.s32.totalorder %s214, %s230
      %p232 = scmp.eq.s32.totalorder %s23, 0
      %p233 = por %p231, %p232
      %p234 = scmp.le.s32.totalorder 1, %s17
      %p235 = scmp.lt.s32.totalorder %s17, 3
      %p236 = pnand %p234, %p235
      %p237 = pneg %p236
      // Predicated region
      $region9: #{block_forward.1} parent=5 // pred_check
        _
      $region10: #{block_forward.1} parent=5 // pred_check_branch
        %239 = sbr.rel (%p236) target = $region12
      $region11: #{block_forward.1} parent=5 // pred_region
        %s240 = ssub.s32 %s17, 1
        // Predicated region
        $region13: #{block_forward.1} parent=11 // pred_check
          %p241 = pneg %p64
        $region14: #{block_forward.1} parent=11 // pred_check_branch
          %243 = sbr.rel (%p241) target = $region16
        $region15: #{block_forward.1} parent=11 // pred_region
          _
        $region16: #{block_forward.1} parent=11 // pred_fallthru
          _
        // Predicated region
        $region17: #{block_forward.1} parent=11 // pred_check
          %p244 = pneg %p85
        $region18: #{block_forward.1} parent=11 // pred_check_branch
          %246 = sbr.rel (%p244) target = $region20
        $region19: #{block_forward.1} parent=11 // pred_region
          _
        $region20: #{block_forward.1} parent=11 // pred_fallthru
          _
        // Predicated region
        $region21: #{block_forward.1} parent=11 // pred_check
          %p247 = pneg %p106
        $region22: #{block_forward.1} parent=11 // pred_check_branch
          %249 = sbr.rel (%p247) target = $region24
        $region23: #{block_forward.1} parent=11 // pred_region
          _
        $region24: #{block_forward.1} parent=11 // pred_fallthru
          _
        // Predicated region
        $region25: #{block_forward.1} parent=11 // pred_check
          %p250 = pneg %p127
        $region26: #{block_forward.1} parent=11 // pred_check_branch
          %252 = sbr.rel (%p250) target = $region28
        $region27: #{block_forward.1} parent=11 // pred_region
          _
        $region28: #{block_forward.1} parent=11 // pred_fallthru
          _
        // Predicated region
        $region29: #{block_forward.1} parent=11 // pred_check
          %p253 = pneg %p148
        $region30: #{block_forward.1} parent=11 // pred_check_branch
          %255 = sbr.rel (%p253) target = $region32
        $region31: #{block_forward.1} parent=11 // pred_region
          _
        $region32: #{block_forward.1} parent=11 // pred_fallthru
          _
      $region12: #{block_forward.1} parent=5 // pred_fallthru
        _
      %p256 = scmp.lt.s32.totalorder %s17, 2
      // Predicated region
      $region33: #{block_forward.1} parent=5 // pred_check
        %p257 = pneg %p256
      $region34: #{block_forward.1} parent=5 // pred_check_branch
        %259 = sbr.rel (%p257) target = $region36
      $region35: #{block_forward.1} parent=5 // pred_region
        // Predicated region
        $region37: #{block_forward.1} parent=35 // pred_check
          %p260 = pneg %p37
        $region38: #{block_forward.1} parent=35 // pred_check_branch
          %262 = sbr.rel (%p260) target = $region40
        $region39: #{block_forward.1} parent=35 // pred_region
          %p263 = scmp.lt.s32.totalorder %s17, 1
          %s264 = scalar_select %p263, %s17, 1
          %s265 = smul.addr %s264, 37
          %s266 = smul.addr %s265, 8
          %s267 = scalar_lea.vmem %s0, %s266
        $region40: #{block_forward.1} parent=35 // pred_fallthru
          _
        // Predicated region
        $region41: #{block_forward.1} parent=35 // pred_check
          %p268 = pneg %p168
        $region42: #{block_forward.1} parent=35 // pred_check_branch
          %270 = sbr.rel (%p268) target = $region44
        $region43: #{block_forward.1} parent=35 // pred_region
          %p271 = scmp.lt.s32.totalorder %s17, 1
          %s272 = scalar_select %p271, %s17, 1
          %s273 = scalar_lea.vmem %s6, %s272
        $region44: #{block_forward.1} parent=35 // pred_fallthru
          _
        // Predicated region
        $region45: #{block_forward.1} parent=35 // pred_check
          %p274 = pneg %p194
        $region46: #{block_forward.1} parent=35 // pred_check_branch
          %276 = sbr.rel (%p274) target = $region48
        $region47: #{block_forward.1} parent=35 // pred_region
          %p277 = scmp.lt.s32.totalorder %s17, 1
          %s278 = scalar_select %p277, %s17, 1
          %s279 = scalar_lea.vmem %s7, %s278
        $region48: #{block_forward.1} parent=35 // pred_fallthru
          _
      $region36: #{block_forward.1} parent=5 // pred_fallthru
        _
      %p280 = scmp.le.s32.totalorder 1, %s17
      %p281 = scmp.lt.s32.totalorder %s17, 3
      %p282 = pnand %p280, %p281
      %p283 = pneg %p282
      // Predicated region
      $region49: #{block_forward.1} parent=5 // pred_check
        _
      $region50: #{block_forward.1} parent=5 // pred_check_branch
        %285 = sbr.rel (%p282) target = $region52
      $region51: #{block_forward.1} parent=5 // pred_region
        %s286 = ssub.s32 %s17, 1
        %p287 = scmp.lt.s32.totalorder %s22, 1
        %s288 = scalar_select %p287, %s22, 1
        %s289 = smul.addr %s288, 37
        %s290 = smul.addr %s289, 8
        %s291 = scalar_lea.vmem %s0, %s290
        %p292 = pneg %p43
        %p293 = pneg %p40
        %p294 = pneg %p64
        %p295 = pneg %p61
        %p296 = pneg %p85
        %p297 = pneg %p82
        %p298 = pneg %p106
        %p299 = pneg %p103
        %p300 = pneg %p127
        %p301 = pneg %p124
        %p302 = pneg %p148
        %p303 = pneg %p145
        %p304 = scmp.lt.s32.totalorder %s22, 1
        %s305 = scalar_select %p304, %s22, 1
        %s306 = scalar_lea.vmem %s6, %s305
        %p307 = pneg %p174
        %p308 = pneg %p171
        %p309 = scmp.lt.s32.totalorder %s22, 1
        %s310 = scalar_select %p309, %s22, 1
        %s311 = scalar_lea.vmem %s7, %s310
        %p312 = pneg %p200
        %p313 = pneg %p197
        %p314 = pneg %p226
        %p315 = pneg %p223
        %s316 = sand.u32 %s213, 1
        %s317 = scalar_lea.sflag [#allocation3], %s316
        %s318 = sand.u32 %s213, 1
        %s319 = smul.addr %s318, 256
        %s320 = scalar_lea.vmem [#allocation2], %s319
        %p321 = scmp.lt.s32.totalorder %s22, 1
        %s322 = scalar_select %p321, %s22, 1
        %s323 = smul.addr %s322, 37
        %s324 = smul.addr %s323, 8
        %s325 = scalar_lea.vmem %s0, %s324
        %p326 = scmp.lt.s32.totalorder %s22, 1
        %s327 = scalar_select %p326, %s22, 1
        %s328 = scalar_lea.vmem %s6, %s327
        %p329 = scmp.lt.s32.totalorder %s22, 1
        %s330 = scalar_select %p329, %s22, 1
        %s331 = scalar_lea.vmem %s7, %s330
        %v333 = vlaneseq
        %v334 = vshrl.u32 %v333, 7
        %v335 = vadd.s32 %v334, 8
        %v336 = vadd.s32 %v334, 16
        %v337 = vadd.s32 %v334, 24
        %v338 = vadd.s32 %v334, 32
        %v339 = vadd.s32 %v334, 40
        %v340 = vadd.s32 %v334, 48
        %v341 = vadd.s32 %v334, 56
        %v342 = vadd.s32 %v334, 64
        %v343 = vadd.s32 %v334, 72
        %v344 = vadd.s32 %v334, 80
        %v345 = vadd.s32 %v334, 88
        %v346 = vadd.s32 %v334, 96
        %v347 = vadd.s32 %v334, 104
        %v348 = vadd.s32 %v334, 112
        %v349 = vadd.s32 %v334, 120
        %v350 = vadd.s32 %v334, 128
        %v351 = vadd.s32 %v334, 136
        %v352 = vadd.s32 %v334, 144
        %v353 = vadd.s32 %v334, 152
        %v354 = vadd.s32 %v334, 160
        %v355 = vadd.s32 %v334, 168
        %v356 = vadd.s32 %v334, 176
        %v357 = vadd.s32 %v334, 184
        %v358 = vadd.s32 %v334, 192
        %v359 = vadd.s32 %v334, 200
        %v360 = vadd.s32 %v334, 208
        %v361 = vadd.s32 %v334, 216
        %v362 = vadd.s32 %v334, 224
        %v363 = vadd.s32 %v334, 232
        %v364 = vadd.s32 %v334, 240
        %v365 = vadd.s32 %v334, 248
        %vm366 = vcmp.lt.s32.totalorder %v334, 0
        %v367 = vsub.s32 0, %v334
        %v368 = vsel %vm366, %v367, %v334
        %v369 = vshrl.u32 %v368, 4
        %v370 = vand.u32 %v368, 15
        %v371 = vsub.s32 0, %v370
        %v372 = vsel %vm366, %v371, %v370
        %vm373 = vcmp.lt.s32.totalorder %v335, 0
        %v374 = vsub.s32 0, %v335
        %v375 = vsel %vm373, %v374, %v335
        %v376 = vshrl.u32 %v375, 4
        %v377 = vand.u32 %v375, 15
        %v378 = vsub.s32 0, %v377
        %v379 = vsel %vm373, %v378, %v377
        %vm380 = vcmp.lt.s32.totalorder %v336, 0
        %v381 = vsub.s32 0, %v336
        %v382 = vsel %vm380, %v381, %v336
        %v383 = vshrl.u32 %v382, 4
        %v384 = vand.u32 %v382, 15
        %v385 = vsub.s32 0, %v384
        %v386 = vsel %vm380, %v385, %v384
        %vm387 = vcmp.lt.s32.totalorder %v337, 0
        %v388 = vsub.s32 0, %v337
        %v389 = vsel %vm387, %v388, %v337
        %v390 = vshrl.u32 %v389, 4
        %v391 = vand.u32 %v389, 15
        %v392 = vsub.s32 0, %v391
        %v393 = vsel %vm387, %v392, %v391
        %vm394 = vcmp.lt.s32.totalorder %v338, 0
        %v395 = vsub.s32 0, %v338
        %v396 = vsel %vm394, %v395, %v338
        %v397 = vshrl.u32 %v396, 4
        %v398 = vand.u32 %v396, 15
        %v399 = vsub.s32 0, %v398
        %v400 = vsel %vm394, %v399, %v398
        %vm401 = vcmp.lt.s32.totalorder %v339, 0
        %v402 = vsub.s32 0, %v339
        %v403 = vsel %vm401, %v402, %v339
        %v404 = vshrl.u32 %v403, 4
        %v405 = vand.u32 %v403, 15
        %v406 = vsub.s32 0, %v405
        %v407 = vsel %vm401, %v406, %v405
        %vm408 = vcmp.lt.s32.totalorder %v340, 0
        %v409 = vsub.s32 0, %v340
        %v410 = vsel %vm408, %v409, %v340
        %v411 = vshrl.u32 %v410, 4
        %v412 = vand.u32 %v410, 15
        %v413 = vsub.s32 0, %v412
        %v414 = vsel %vm408, %v413, %v412
        %vm415 = vcmp.lt.s32.totalorder %v341, 0
        %v416 = vsub.s32 0, %v341
        %v417 = vsel %vm415, %v416, %v341
        %v418 = vshrl.u32 %v417, 4
        %v419 = vand.u32 %v417, 15
        %v420 = vsub.s32 0, %v419
        %v421 = vsel %vm415, %v420, %v419
        %vm422 = vcmp.lt.s32.totalorder %v342, 0
        %v423 = vsub.s32 0, %v342
        %v424 = vsel %vm422, %v423, %v342
        %v425 = vshrl.u32 %v424, 4
        %v426 = vand.u32 %v424, 15
        %v427 = vsub.s32 0, %v426
        %v428 = vsel %vm422, %v427, %v426
        %vm429 = vcmp.lt.s32.totalorder %v343, 0
        %v430 = vsub.s32 0, %v343
        %v431 = vsel %vm429, %v430, %v343
        %v432 = vshrl.u32 %v431, 4
        %v433 = vand.u32 %v431, 15
        %v434 = vsub.s32 0, %v433
        %v435 = vsel %vm429, %v434, %v433
        %vm436 = vcmp.lt.s32.totalorder %v344, 0
        %v437 = vsub.s32 0, %v344
        %v438 = vsel %vm436, %v437, %v344
        %v439 = vshrl.u32 %v438, 4
        %v440 = vand.u32 %v438, 15
        %v441 = vsub.s32 0, %v440
        %v442 = vsel %vm436, %v441, %v440
        %vm443 = vcmp.lt.s32.totalorder %v345, 0
        %v444 = vsub.s32 0, %v345
        %v445 = vsel %vm443, %v444, %v345
        %v446 = vshrl.u32 %v445, 4
        %v447 = vand.u32 %v445, 15
        %v448 = vsub.s32 0, %v447
        %v449 = vsel %vm443, %v448, %v447
        %vm450 = vcmp.lt.s32.totalorder %v346, 0
        %v451 = vsub.s32 0, %v346
        %v452 = vsel %vm450, %v451, %v346
        %v453 = vshrl.u32 %v452, 4
        %v454 = vand.u32 %v452, 15
        %v455 = vsub.s32 0, %v454
        %v456 = vsel %vm450, %v455, %v454
        %vm457 = vcmp.lt.s32.totalorder %v347, 0
        %v458 = vsub.s32 0, %v347
        %v459 = vsel %vm457, %v458, %v347
        %v460 = vshrl.u32 %v459, 4
        %v461 = vand.u32 %v459, 15
        %v462 = vsub.s32 0, %v461
        %v463 = vsel %vm457, %v462, %v461
        %vm464 = vcmp.lt.s32.totalorder %v348, 0
        %v465 = vsub.s32 0, %v348
        %v466 = vsel %vm464, %v465, %v348
        %v467 = vshrl.u32 %v466, 4
        %v468 = vand.u32 %v466, 15
        %v469 = vsub.s32 0, %v468
        %v470 = vsel %vm464, %v469, %v468
        %vm471 = vcmp.lt.s32.totalorder %v349, 0
        %v472 = vsub.s32 0, %v349
        %v473 = vsel %vm471, %v472, %v349
        %v474 = vshrl.u32 %v473, 4
        %v475 = vand.u32 %v473, 15
        %v476 = vsub.s32 0, %v475
        %v477 = vsel %vm471, %v476, %v475
        %vm478 = vcmp.lt.s32.totalorder %v350, 0
        %v479 = vsub.s32 0, %v350
        %v480 = vsel %vm478, %v479, %v350
        %v481 = vshrl.u32 %v480, 4
        %v482 = vand.u32 %v480, 15
        %v483 = vsub.s32 0, %v482
        %v484 = vsel %vm478, %v483, %v482
        %vm485 = vcmp.lt.s32.totalorder %v351, 0
        %v486 = vsub.s32 0, %v351
        %v487 = vsel %vm485, %v486, %v351
        %v488 = vshrl.u32 %v487, 4
        %v489 = vand.u32 %v487, 15
        %v490 = vsub.s32 0, %v489
        %v491 = vsel %vm485, %v490, %v489
        %vm492 = vcmp.lt.s32.totalorder %v352, 0
        %v493 = vsub.s32 0, %v352
        %v494 = vsel %vm492, %v493, %v352
        %v495 = vshrl.u32 %v494, 4
        %v496 = vand.u32 %v494, 15
        %v497 = vsub.s32 0, %v496
        %v498 = vsel %vm492, %v497, %v496
        %vm499 = vcmp.lt.s32.totalorder %v353, 0
        %v500 = vsub.s32 0, %v353
        %v501 = vsel %vm499, %v500, %v353
        %v502 = vshrl.u32 %v501, 4
        %v503 = vand.u32 %v501, 15
        %v504 = vsub.s32 0, %v503
        %v505 = vsel %vm499, %v504, %v503
        %vm506 = vcmp.lt.s32.totalorder %v354, 0
        %v507 = vsub.s32 0, %v354
        %v508 = vsel %vm506, %v507, %v354
        %v509 = vshrl.u32 %v508, 4
        %v510 = vand.u32 %v508, 15
        %v511 = vsub.s32 0, %v510
        %v512 = vsel %vm506, %v511, %v510
        %vm513 = vcmp.lt.s32.totalorder %v355, 0
        %v514 = vsub.s32 0, %v355
        %v515 = vsel %vm513, %v514, %v355
        %v516 = vshrl.u32 %v515, 4
        %v517 = vand.u32 %v515, 15
        %v518 = vsub.s32 0, %v517
        %v519 = vsel %vm513, %v518, %v517
        %vm520 = vcmp.lt.s32.totalorder %v356, 0
        %v521 = vsub.s32 0, %v356
        %v522 = vsel %vm520, %v521, %v356
        %v523 = vshrl.u32 %v522, 4
        %v524 = vand.u32 %v522, 15
        %v525 = vsub.s32 0, %v524
        %v526 = vsel %vm520, %v525, %v524
        %vm527 = vcmp.lt.s32.totalorder %v357, 0
        %v528 = vsub.s32 0, %v357
        %v529 = vsel %vm527, %v528, %v357
        %v530 = vshrl.u32 %v529, 4
        %v531 = vand.u32 %v529, 15
        %v532 = vsub.s32 0, %v531
        %v533 = vsel %vm527, %v532, %v531
        %vm534 = vcmp.lt.s32.totalorder %v358, 0
        %v535 = vsub.s32 0, %v358
        %v536 = vsel %vm534, %v535, %v358
        %v537 = vshrl.u32 %v536, 4
        %v538 = vand.u32 %v536, 15
        %v539 = vsub.s32 0, %v538
        %v540 = vsel %vm534, %v539, %v538
        %vm541 = vcmp.lt.s32.totalorder %v359, 0
        %v542 = vsub.s32 0, %v359
        %v543 = vsel %vm541, %v542, %v359
        %v544 = vshrl.u32 %v543, 4
        %v545 = vand.u32 %v543, 15
        %v546 = vsub.s32 0, %v545
        %v547 = vsel %vm541, %v546, %v545
        %vm548 = vcmp.lt.s32.totalorder %v360, 0
        %v549 = vsub.s32 0, %v360
        %v550 = vsel %vm548, %v549, %v360
        %v551 = vshrl.u32 %v550, 4
        %v552 = vand.u32 %v550, 15
        %v553 = vsub.s32 0, %v552
        %v554 = vsel %vm548, %v553, %v552
        %vm555 = vcmp.lt.s32.totalorder %v361, 0
        %v556 = vsub.s32 0, %v361
        %v557 = vsel %vm555, %v556, %v361
        %v558 = vshrl.u32 %v557, 4
        %v559 = vand.u32 %v557, 15
        %v560 = vsub.s32 0, %v559
        %v561 = vsel %vm555, %v560, %v559
        %vm562 = vcmp.lt.s32.totalorder %v362, 0
        %v563 = vsub.s32 0, %v362
        %v564 = vsel %vm562, %v563, %v362
        %v565 = vshrl.u32 %v564, 4
        %v566 = vand.u32 %v564, 15
        %v567 = vsub.s32 0, %v566
        %v568 = vsel %vm562, %v567, %v566
        %vm569 = vcmp.lt.s32.totalorder %v363, 0
        %v570 = vsub.s32 0, %v363
        %v571 = vsel %vm569, %v570, %v363
        %v572 = vshrl.u32 %v571, 4
        %v573 = vand.u32 %v571, 15
        %v574 = vsub.s32 0, %v573
        %v575 = vsel %vm569, %v574, %v573
        %vm576 = vcmp.lt.s32.totalorder %v364, 0
        %v577 = vsub.s32 0, %v364
        %v578 = vsel %vm576, %v577, %v364
        %v579 = vshrl.u32 %v578, 4
        %v580 = vand.u32 %v578, 15
        %v581 = vsub.s32 0, %v580
        %v582 = vsel %vm576, %v581, %v580
        %vm583 = vcmp.lt.s32.totalorder %v365, 0
        %v584 = vsub.s32 0, %v365
        %v585 = vsel %vm583, %v584, %v365
        %v586 = vshrl.u32 %v585, 4
        %v587 = vand.u32 %v585, 15
        %v588 = vsub.s32 0, %v587
        %v589 = vsel %vm583, %v588, %v587
        %vm590 = vcmp.ne.s32.totalorder %v372, 0
        %vm591 = vcmp.ne.s32.totalorder %v379, 0
        %vm592 = vcmp.ne.s32.totalorder %v386, 0
        %vm593 = vcmp.ne.s32.totalorder %v393, 0
        %vm594 = vcmp.ne.s32.totalorder %v400, 0
        %vm595 = vcmp.ne.s32.totalorder %v407, 0
        %vm596 = vcmp.ne.s32.totalorder %v414, 0
        %vm597 = vcmp.ne.s32.totalorder %v421, 0
        %vm598 = vcmp.ne.s32.totalorder %v428, 0
        %vm599 = vcmp.ne.s32.totalorder %v435, 0
        %vm600 = vcmp.ne.s32.totalorder %v442, 0
        %vm601 = vcmp.ne.s32.totalorder %v449, 0
        %vm602 = vcmp.ne.s32.totalorder %v456, 0
        %vm603 = vcmp.ne.s32.totalorder %v463, 0
        %vm604 = vcmp.ne.s32.totalorder %v470, 0
        %vm605 = vcmp.ne.s32.totalorder %v477, 0
        %vm606 = vcmp.ne.s32.totalorder %v484, 0
        %vm607 = vcmp.ne.s32.totalorder %v491, 0
        %vm608 = vcmp.ne.s32.totalorder %v498, 0
        %vm609 = vcmp.ne.s32.totalorder %v505, 0
        %vm610 = vcmp.ne.s32.totalorder %v512, 0
        %vm611 = vcmp.ne.s32.totalorder %v519, 0
        %vm612 = vcmp.ne.s32.totalorder %v526, 0
        %vm613 = vcmp.ne.s32.totalorder %v533, 0
        %vm614 = vcmp.ne.s32.totalorder %v540, 0
        %vm615 = vcmp.ne.s32.totalorder %v547, 0
        %vm616 = vcmp.ne.s32.totalorder %v554, 0
        %vm617 = vcmp.ne.s32.totalorder %v561, 0
        %vm618 = vcmp.ne.s32.totalorder %v568, 0
        %vm619 = vcmp.ne.s32.totalorder %v575, 0
        %vm620 = vcmp.ne.s32.totalorder %v582, 0
        %vm621 = vcmp.ne.s32.totalorder %v589, 0
        %vm622 = vcmp.lt.s32.totalorder %v372, 0
        %vm623 = vcmp.lt.s32.totalorder %v379, 0
        %vm624 = vcmp.lt.s32.totalorder %v386, 0
        %vm625 = vcmp.lt.s32.totalorder %v393, 0
        %vm626 = vcmp.lt.s32.totalorder %v400, 0
        %vm627 = vcmp.lt.s32.totalorder %v407, 0
        %vm628 = vcmp.lt.s32.totalorder %v414, 0
        %vm629 = vcmp.lt.s32.totalorder %v421, 0
        %vm630 = vcmp.lt.s32.totalorder %v428, 0
        %vm631 = vcmp.lt.s32.totalorder %v435, 0
        %vm632 = vcmp.lt.s32.totalorder %v442, 0
        %vm633 = vcmp.lt.s32.totalorder %v449, 0
        %vm634 = vcmp.lt.s32.totalorder %v456, 0
        %vm635 = vcmp.lt.s32.totalorder %v463, 0
        %vm636 = vcmp.lt.s32.totalorder %v470, 0
        %vm637 = vcmp.lt.s32.totalorder %v477, 0
        %vm638 = vcmp.lt.s32.totalorder %v484, 0
        %vm639 = vcmp.lt.s32.totalorder %v491, 0
        %vm640 = vcmp.lt.s32.totalorder %v498, 0
        %vm641 = vcmp.lt.s32.totalorder %v505, 0
        %vm642 = vcmp.lt.s32.totalorder %v512, 0
        %vm643 = vcmp.lt.s32.totalorder %v519, 0
        %vm644 = vcmp.lt.s32.totalorder %v526, 0
        %vm645 = vcmp.lt.s32.totalorder %v533, 0
        %vm646 = vcmp.lt.s32.totalorder %v540, 0
        %vm647 = vcmp.lt.s32.totalorder %v547, 0
        %vm648 = vcmp.lt.s32.totalorder %v554, 0
        %vm649 = vcmp.lt.s32.totalorder %v561, 0
        %vm650 = vcmp.lt.s32.totalorder %v568, 0
        %vm651 = vcmp.lt.s32.totalorder %v575, 0
        %vm652 = vcmp.lt.s32.totalorder %v582, 0
        %vm653 = vcmp.lt.s32.totalorder %v589, 0
        %vm654 = vmand %vm622, %vm590
        %vm655 = vmand %vm623, %vm591
        %vm656 = vmand %vm624, %vm592
        %vm657 = vmand %vm625, %vm593
        %vm658 = vmand %vm626, %vm594
        %vm659 = vmand %vm627, %vm595
        %vm660 = vmand %vm628, %vm596
        %vm661 = vmand %vm629, %vm597
        %vm662 = vmand %vm630, %vm598
        %vm663 = vmand %vm631, %vm599
        %vm664 = vmand %vm632, %vm600
        %vm665 = vmand %vm633, %vm601
        %vm666 = vmand %vm634, %vm602
        %vm667 = vmand %vm635, %vm603
        %vm668 = vmand %vm636, %vm604
        %vm669 = vmand %vm637, %vm605
        %vm670 = vmand %vm638, %vm606
        %vm671 = vmand %vm639, %vm607
        %vm672 = vmand %vm640, %vm608
        %vm673 = vmand %vm641, %vm609
        %vm674 = vmand %vm642, %vm610
        %vm675 = vmand %vm643, %vm611
        %vm676 = vmand %vm644, %vm612
        %vm677 = vmand %vm645, %vm613
        %vm678 = vmand %vm646, %vm614
        %vm679 = vmand %vm647, %vm615
        %vm680 = vmand %vm648, %vm616
        %vm681 = vmand %vm649, %vm617
        %vm682 = vmand %vm650, %vm618
        %vm683 = vmand %vm651, %vm619
        %vm684 = vmand %vm652, %vm620
        %vm685 = vmand %vm653, %vm621
        %v686 = vadd.s32 %v372, 16
        %v687 = vadd.s32 %v379, 16
        %v688 = vadd.s32 %v386, 16
        %v689 = vadd.s32 %v393, 16
        %v690 = vadd.s32 %v400, 16
        %v691 = vadd.s32 %v407, 16
        %v692 = vadd.s32 %v414, 16
        %v693 = vadd.s32 %v421, 16
        %v694 = vadd.s32 %v428, 16
        %v695 = vadd.s32 %v435, 16
        %v696 = vadd.s32 %v442, 16
        %v697 = vadd.s32 %v449, 16
        %v698 = vadd.s32 %v456, 16
        %v699 = vadd.s32 %v463, 16
        %v700 = vadd.s32 %v470, 16
        %v701 = vadd.s32 %v477, 16
        %v702 = vadd.s32 %v484, 16
        %v703 = vadd.s32 %v491, 16
        %v704 = vadd.s32 %v498, 16
        %v705 = vadd.s32 %v505, 16
        %v706 = vadd.s32 %v512, 16
        %v707 = vadd.s32 %v519, 16
        %v708 = vadd.s32 %v526, 16
        %v709 = vadd.s32 %v533, 16
        %v710 = vadd.s32 %v540, 16
        %v711 = vadd.s32 %v547, 16
        %v712 = vadd.s32 %v554, 16
        %v713 = vadd.s32 %v561, 16
        %v714 = vadd.s32 %v568, 16
        %v715 = vadd.s32 %v575, 16
        %v716 = vadd.s32 %v582, 16
        %v717 = vadd.s32 %v589, 16
        %v718 = vsel %vm654, %v686, %v372
        %v719 = vsel %vm655, %v687, %v379
        %v720 = vsel %vm656, %v688, %v386
        %v721 = vsel %vm657, %v689, %v393
        %v722 = vsel %vm658, %v690, %v400
        %v723 = vsel %vm659, %v691, %v407
        %v724 = vsel %vm660, %v692, %v414
        %v725 = vsel %vm661, %v693, %v421
        %v726 = vsel %vm662, %v694, %v428
        %v727 = vsel %vm663, %v695, %v435
        %v728 = vsel %vm664, %v696, %v442
        %v729 = vsel %vm665, %v697, %v449
        %v730 = vsel %vm666, %v698, %v456
        %v731 = vsel %vm667, %v699, %v463
        %v732 = vsel %vm668, %v700, %v470
        %v733 = vsel %vm669, %v701, %v477
        %v734 = vsel %vm670, %v702, %v484
        %v735 = vsel %vm671, %v703, %v491
        %v736 = vsel %vm672, %v704, %v498
        %v737 = vsel %vm673, %v705, %v505
        %v738 = vsel %vm674, %v706, %v512
        %v739 = vsel %vm675, %v707, %v519
        %v740 = vsel %vm676, %v708, %v526
        %v741 = vsel %vm677, %v709, %v533
        %v742 = vsel %vm678, %v710, %v540
        %v743 = vsel %vm679, %v711, %v547
        %v744 = vsel %vm680, %v712, %v554
        %v745 = vsel %vm681, %v713, %v561
        %v746 = vsel %vm682, %v714, %v568
        %v747 = vsel %vm683, %v715, %v575
        %v748 = vsel %vm684, %v716, %v582
        %v749 = vsel %vm685, %v717, %v589
        %v750 = vld [vmem:[%s325] sm:$0xff]
        %v751 = vld [vmem:[%s325 + $0x8] sm:$0xff]
        %v752 = vld [vmem:[%s325 + $0x10] sm:$0xff]
        %v753 = vld [vmem:[%s325 + $0x18] sm:$0xff]
        %v754 = vld [vmem:[%s325 + $0x20] sm:$0xff]
        %v755 = vld [vmem:[%s325 + $0x28] sm:$0xff]
        %v756 = vld [vmem:[%s325 + $0x30] sm:$0xff]
        %v757 = vld [vmem:[%s325 + $0x38] sm:$0xff]
        %v758 = vld [vmem:[%s325 + $0x40] sm:$0xff]
        %v759 = vld [vmem:[%s325 + $0x48] sm:$0xff]
        %v760 = vld [vmem:[%s325 + $0x50] sm:$0xff]
        %v761 = vld [vmem:[%s325 + $0x58] sm:$0xff]
        %v762 = vld [vmem:[%s325 + $0x60] sm:$0xff]
        %v763 = vld [vmem:[%s325 + $0x68] sm:$0xff]
        %v764 = vld [vmem:[%s325 + $0x70] sm:$0xff]
        %v765 = vld [vmem:[%s325 + $0x78] sm:$0xff]
        %v766 = vld [vmem:[%s325 + $0x80] sm:$0xff]
        %v767 = vld [vmem:[%s325 + $0x88] sm:$0xff]
        %v768 = vld [vmem:[%s325 + $0x90] sm:$0xff]
        %v769 = vld [vmem:[%s325 + $0x98] sm:$0xff]
        %v770 = vld [vmem:[%s325 + $0xa0] sm:$0xff]
        %v771 = vld [vmem:[%s325 + $0xa8] sm:$0xff]
        %v772 = vld [vmem:[%s325 + $0xb0] sm:$0xff]
        %v773 = vld [vmem:[%s325 + $0xb8] sm:$0xff]
        %v774 = vld [vmem:[%s325 + $0xc0] sm:$0xff]
        %v775 = vld [vmem:[%s325 + $0xc8] sm:$0xff]
        %v776 = vld [vmem:[%s325 + $0xd0] sm:$0xff]
        %v777 = vld [vmem:[%s325 + $0xd8] sm:$0xff]
        %v778 = vld [vmem:[%s325 + $0xe0] sm:$0xff]
        %v779 = vld [vmem:[%s325 + $0xe8] sm:$0xff]
        %v780 = vld [vmem:[%s325 + $0xf0] sm:$0xff]
        %v781 = vld [vmem:[%s325 + $0xf8] sm:$0xff]
        %v782 = vadd.s32 %v718, 4294967295
        %v783 = vadd.s32 %v719, 4294967295
        %v784 = vadd.s32 %v720, 4294967295
        %v785 = vadd.s32 %v721, 4294967295
        %v786 = vadd.s32 %v722, 4294967295
        %v787 = vadd.s32 %v723, 4294967295
        %v788 = vadd.s32 %v724, 4294967295
        %v789 = vadd.s32 %v725, 4294967295
        %v790 = vadd.s32 %v726, 4294967295
        %v791 = vadd.s32 %v727, 4294967295
        %v792 = vadd.s32 %v728, 4294967295
        %v793 = vadd.s32 %v729, 4294967295
        %v794 = vadd.s32 %v730, 4294967295
        %v795 = vadd.s32 %v731, 4294967295
        %v796 = vadd.s32 %v732, 4294967295
        %v797 = vadd.s32 %v733, 4294967295
        %v798 = vadd.s32 %v734, 4294967295
        %v799 = vadd.s32 %v735, 4294967295
        %v800 = vadd.s32 %v736, 4294967295
        %v801 = vadd.s32 %v737, 4294967295
        %v802 = vadd.s32 %v738, 4294967295
        %v803 = vadd.s32 %v739, 4294967295
        %v804 = vadd.s32 %v740, 4294967295
        %v805 = vadd.s32 %v741, 4294967295
        %v806 = vadd.s32 %v742, 4294967295
        %v807 = vadd.s32 %v743, 4294967295
        %v808 = vadd.s32 %v744, 4294967295
        %v809 = vadd.s32 %v745, 4294967295
        %v810 = vadd.s32 %v746, 4294967295
        %v811 = vadd.s32 %v747, 4294967295
        %v812 = vadd.s32 %v748, 4294967295
        %v813 = vadd.s32 %v749, 4294967295
        %vm814 = vcmp.ge.s32.totalorder %v782, 0
        %vm815 = vcmp.ge.s32.totalorder %v783, 0
        %vm816 = vcmp.ge.s32.totalorder %v784, 0
        %vm817 = vcmp.ge.s32.totalorder %v785, 0
        %vm818 = vcmp.ge.s32.totalorder %v786, 0
        %vm819 = vcmp.ge.s32.totalorder %v787, 0
        %vm820 = vcmp.ge.s32.totalorder %v788, 0
        %vm821 = vcmp.ge.s32.totalorder %v789, 0
        %vm822 = vcmp.ge.s32.totalorder %v790, 0
        %vm823 = vcmp.ge.s32.totalorder %v791, 0
        %vm824 = vcmp.ge.s32.totalorder %v792, 0
        %vm825 = vcmp.ge.s32.totalorder %v793, 0
        %vm826 = vcmp.ge.s32.totalorder %v794, 0
        %vm827 = vcmp.ge.s32.totalorder %v795, 0
        %vm828 = vcmp.ge.s32.totalorder %v796, 0
        %vm829 = vcmp.ge.s32.totalorder %v797, 0
        %vm830 = vcmp.ge.s32.totalorder %v798, 0
        %vm831 = vcmp.ge.s32.totalorder %v799, 0
        %vm832 = vcmp.ge.s32.totalorder %v800, 0
        %vm833 = vcmp.ge.s32.totalorder %v801, 0
        %vm834 = vcmp.ge.s32.totalorder %v802, 0
        %vm835 = vcmp.ge.s32.totalorder %v803, 0
        %vm836 = vcmp.ge.s32.totalorder %v804, 0
        %vm837 = vcmp.ge.s32.totalorder %v805, 0
        %vm838 = vcmp.ge.s32.totalorder %v806, 0
        %vm839 = vcmp.ge.s32.totalorder %v807, 0
        %vm840 = vcmp.ge.s32.totalorder %v808, 0
        %vm841 = vcmp.ge.s32.totalorder %v809, 0
        %vm842 = vcmp.ge.s32.totalorder %v810, 0
        %vm843 = vcmp.ge.s32.totalorder %v811, 0
        %vm844 = vcmp.ge.s32.totalorder %v812, 0
        %vm845 = vcmp.ge.s32.totalorder %v813, 0
        %vm846 = vcmp.lt.s32.totalorder %v782, 16
        %vm847 = vcmp.lt.s32.totalorder %v783, 16
        %vm848 = vcmp.lt.s32.totalorder %v784, 16
        %vm849 = vcmp.lt.s32.totalorder %v785, 16
        %vm850 = vcmp.lt.s32.totalorder %v786, 16
        %vm851 = vcmp.lt.s32.totalorder %v787, 16
        %vm852 = vcmp.lt.s32.totalorder %v788, 16
        %vm853 = vcmp.lt.s32.totalorder %v789, 16
        %vm854 = vcmp.lt.s32.totalorder %v790, 16
        %vm855 = vcmp.lt.s32.totalorder %v791, 16
        %vm856 = vcmp.lt.s32.totalorder %v792, 16
        %vm857 = vcmp.lt.s32.totalorder %v793, 16
        %vm858 = vcmp.lt.s32.totalorder %v794, 16
        %vm859 = vcmp.lt.s32.totalorder %v795, 16
        %vm860 = vcmp.lt.s32.totalorder %v796, 16
        %vm861 = vcmp.lt.s32.totalorder %v797, 16
        %vm862 = vcmp.lt.s32.totalorder %v798, 16
        %vm863 = vcmp.lt.s32.totalorder %v799, 16
        %vm864 = vcmp.lt.s32.totalorder %v800, 16
        %vm865 = vcmp.lt.s32.totalorder %v801, 16
        %vm866 = vcmp.lt.s32.totalorder %v802, 16
        %vm867 = vcmp.lt.s32.totalorder %v803, 16
        %vm868 = vcmp.lt.s32.totalorder %v804, 16
        %vm869 = vcmp.lt.s32.totalorder %v805, 16
        %vm870 = vcmp.lt.s32.totalorder %v806, 16
        %vm871 = vcmp.lt.s32.totalorder %v807, 16
        %vm872 = vcmp.lt.s32.totalorder %v808, 16
        %vm873 = vcmp.lt.s32.totalorder %v809, 16
        %vm874 = vcmp.lt.s32.totalorder %v810, 16
        %vm875 = vcmp.lt.s32.totalorder %v811, 16
        %vm876 = vcmp.lt.s32.totalorder %v812, 16
        %vm877 = vcmp.lt.s32.totalorder %v813, 16
        %vm878 = vmand %vm814, %vm846
        %vm879 = vmand %vm815, %vm847
        %vm880 = vmand %vm816, %vm848
        %vm881 = vmand %vm817, %vm849
        %vm882 = vmand %vm818, %vm850
        %vm883 = vmand %vm819, %vm851
        %vm884 = vmand %vm820, %vm852
        %vm885 = vmand %vm821, %vm853
        %vm886 = vmand %vm822, %vm854
        %vm887 = vmand %vm823, %vm855
        %vm888 = vmand %vm824, %vm856
        %vm889 = vmand %vm825, %vm857
        %vm890 = vmand %vm826, %vm858
        %vm891 = vmand %vm827, %vm859
        %vm892 = vmand %vm828, %vm860
        %vm893 = vmand %vm829, %vm861
        %vm894 = vmand %vm830, %vm862
        %vm895 = vmand %vm831, %vm863
        %vm896 = vmand %vm832, %vm864
        %vm897 = vmand %vm833, %vm865
        %vm898 = vmand %vm834, %vm866
        %vm899 = vmand %vm835, %vm867
        %vm900 = vmand %vm836, %vm868
        %vm901 = vmand %vm837, %vm869
        %vm902 = vmand %vm838, %vm870
        %vm903 = vmand %vm839, %vm871
        %vm904 = vmand %vm840, %vm872
        %vm905 = vmand %vm841, %vm873
        %vm906 = vmand %vm842, %vm874
        %vm907 = vmand %vm843, %vm875
        %vm908 = vmand %vm844, %vm876
        %vm909 = vmand %vm845, %vm877
        %v910 = vsel %vm878, %v750, 0.0
        %v911 = vsel %vm879, %v751, 0.0
        %v912 = vsel %vm880, %v752, 0.0
        %v913 = vsel %vm881, %v753, 0.0
        %v914 = vsel %vm882, %v754, 0.0
        %v915 = vsel %vm883, %v755, 0.0
        %v916 = vsel %vm884, %v756, 0.0
        %v917 = vsel %vm885, %v757, 0.0
        %v918 = vsel %vm886, %v758, 0.0
        %v919 = vsel %vm887, %v759, 0.0
        %v920 = vsel %vm888, %v760, 0.0
        %v921 = vsel %vm889, %v761, 0.0
        %v922 = vsel %vm890, %v762, 0.0
        %v923 = vsel %vm891, %v763, 0.0
        %v924 = vsel %vm892, %v764, 0.0
        %v925 = vsel %vm893, %v765, 0.0
        %v926 = vsel %vm894, %v766, 0.0
        %v927 = vsel %vm895, %v767, 0.0
        %v928 = vsel %vm896, %v768, 0.0
        %v929 = vsel %vm897, %v769, 0.0
        %v930 = vsel %vm898, %v770, 0.0
        %v931 = vsel %vm899, %v771, 0.0
        %v932 = vsel %vm900, %v772, 0.0
        %v933 = vsel %vm901, %v773, 0.0
        %v934 = vsel %vm902, %v774, 0.0
        %v935 = vsel %vm903, %v775, 0.0
        %v936 = vsel %vm904, %v776, 0.0
        %v937 = vsel %vm905, %v777, 0.0
        %v938 = vsel %vm906, %v778, 0.0
        %v939 = vsel %vm907, %v779, 0.0
        %v940 = vsel %vm908, %v780, 0.0
        %v941 = vsel %vm909, %v781, 0.0
        %v942 = vld [vmem:[%s1] sm:$0xf]
        %v943 = vld [vmem:[%s1 + $0x4] sm:$0xf]
        %v944 = vld [vmem:[%s1 + $0x8] sm:$0xf]
        %v945 = vld [vmem:[%s1 + $0xc] sm:$0xf]
        %v946 = vpack.c.bf16 %v911, %v910
        %v947 = vpack.c.bf16 %v913, %v912
        %v948 = vpack.c.bf16 %v915, %v914
        %v949 = vpack.c.bf16 %v917, %v916
        %v950 = vpack.c.bf16 %v919, %v918
        %v951 = vpack.c.bf16 %v921, %v920
        %v952 = vpack.c.bf16 %v923, %v922
        %v953 = vpack.c.bf16 %v925, %v924
        %v954 = vpack.c.bf16 %v927, %v926
        %v955 = vpack.c.bf16 %v929, %v928
        %v956 = vpack.c.bf16 %v931, %v930
        %v957 = vpack.c.bf16 %v933, %v932
        %v958 = vpack.c.bf16 %v935, %v934
        %v959 = vpack.c.bf16 %v937, %v936
        %v960 = vpack.c.bf16 %v939, %v938
        %v961 = vpack.c.bf16 %v941, %v940
        %v962 = vld [vmem:[%s325 + $0x1] sm:$0xff]
        %v963 = vld [vmem:[%s325 + $0x9] sm:$0xff]
        %v964 = vld [vmem:[%s325 + $0x11] sm:$0xff]
        %v965 = vld [vmem:[%s325 + $0x19] sm:$0xff]
        %v966 = vld [vmem:[%s325 + $0x21] sm:$0xff]
        %v967 = vld [vmem:[%s325 + $0x29] sm:$0xff]
        %v968 = vld [vmem:[%s325 + $0x31] sm:$0xff]
        %v969 = vld [vmem:[%s325 + $0x39] sm:$0xff]
        %v970 = vld [vmem:[%s325 + $0x41] sm:$0xff]
        %v971 = vld [vmem:[%s325 + $0x49] sm:$0xff]
        %v972 = vld [vmem:[%s325 + $0x51] sm:$0xff]
        %v973 = vld [vmem:[%s325 + $0x59] sm:$0xff]
        %v974 = vld [vmem:[%s325 + $0x61] sm:$0xff]
        %v975 = vld [vmem:[%s325 + $0x69] sm:$0xff]
        %v976 = vld [vmem:[%s325 + $0x71] sm:$0xff]
        %v977 = vld [vmem:[%s325 + $0x79] sm:$0xff]
        %v978 = vld [vmem:[%s325 + $0x81] sm:$0xff]
        %v979 = vld [vmem:[%s325 + $0x89] sm:$0xff]
        %v980 = vld [vmem:[%s325 + $0x91] sm:$0xff]
        %v981 = vld [vmem:[%s325 + $0x99] sm:$0xff]
        %v982 = vld [vmem:[%s325 + $0xa1] sm:$0xff]
        %v983 = vld [vmem:[%s325 + $0xa9] sm:$0xff]
        %v984 = vld [vmem:[%s325 + $0xb1] sm:$0xff]
        %v985 = vld [vmem:[%s325 + $0xb9] sm:$0xff]
        %v986 = vld [vmem:[%s325 + $0xc1] sm:$0xff]
        %v987 = vld [vmem:[%s325 + $0xc9] sm:$0xff]
        %v988 = vld [vmem:[%s325 + $0xd1] sm:$0xff]
        %v989 = vld [vmem:[%s325 + $0xd9] sm:$0xff]
        %v990 = vld [vmem:[%s325 + $0xe1] sm:$0xff]
        %v991 = vld [vmem:[%s325 + $0xe9] sm:$0xff]
        %v992 = vld [vmem:[%s325 + $0xf1] sm:$0xff]
        %v993 = vld [vmem:[%s325 + $0xf9] sm:$0xff]
        %v994 = vld [vmem:[%s1 + $0x10] sm:$0xf]
        %v995 = vld [vmem:[%s1 + $0x14] sm:$0xf]
        %v996 = vld [vmem:[%s1 + $0x18] sm:$0xf]
        %v997 = vld [vmem:[%s1 + $0x1c] sm:$0xf]
        %v998 = vpack.c.bf16 %v963, %v962
        %v999 = vpack.c.bf16 %v965, %v964
        %v1000 = vpack.c.bf16 %v967, %v966
        %v1001 = vpack.c.bf16 %v969, %v968
        %v1002 = vpack.c.bf16 %v971, %v970
        %v1003 = vpack.c.bf16 %v973, %v972
        %v1004 = vpack.c.bf16 %v975, %v974
        %v1005 = vpack.c.bf16 %v977, %v976
        %v1006 = vpack.c.bf16 %v979, %v978
        %v1007 = vpack.c.bf16 %v981, %v980
        %v1008 = vpack.c.bf16 %v983, %v982
        %v1009 = vpack.c.bf16 %v985, %v984
        %v1010 = vpack.c.bf16 %v987, %v986
        %v1011 = vpack.c.bf16 %v989, %v988
        %v1012 = vpack.c.bf16 %v991, %v990
        %v1013 = vpack.c.bf16 %v993, %v992
        %v1018 = vunpack.c.l.b16 %v994
        %v1019 = vunpack.c.l.b16 %v995
        %v1020 = vunpack.c.l.b16 %v996
        %v1021 = vunpack.c.l.b16 %v997
        %v1022 = vpack.c.b16 %v1019, %v1018
        %v1023 = vpack.c.b16 %v1021, %v1020
        %vm1026 = vcmask 261120
        %v1028 = vsel %vm1026, %v998, 0
        %v1031 = vsel %vm1026, %v999, 0
        %v1034 = vsel %vm1026, %v1000, 0
        %v1037 = vsel %vm1026, %v1001, 0
        %v1040 = vsel %vm1026, %v1002, 0
        %v1043 = vsel %vm1026, %v1003, 0
        %v1046 = vsel %vm1026, %v1004, 0
        %v1049 = vsel %vm1026, %v1005, 0
        %v1052 = vsel %vm1026, %v1006, 0
        %v1055 = vsel %vm1026, %v1007, 0
        %v1058 = vsel %vm1026, %v1008, 0
        %v1061 = vsel %vm1026, %v1009, 0
        %v1064 = vsel %vm1026, %v1010, 0
        %v1067 = vsel %vm1026, %v1011, 0
        %v1070 = vsel %vm1026, %v1012, 0
        %v1073 = vsel %vm1026, %v1013, 0
        %1075 = vmatpush.bf16.msra.mxu0 0
        %1076 = vmatpush.bf16.msra.mxu0 0
        %1077 = vmatpush.bf16.msra.mxu0 0
        %1078 = vmatpush.bf16.msra.mxu0 0
        %1079 = vmatpush.bf16.msra.mxu0 0
        %1080 = vmatpush.bf16.msra.mxu0 0
        %1081 = vmatpush.bf16.msra.mxu0 %v1023
        %1082 = vmatpush.bf16.msra.mxu0 %v1022
        %1083 = vmatmul.bf16.gmra.mxu0 %v1028
        %v1084 = vpop.f32.mrf.mxu0
        %v1085 = vadd.f32 0.0, %v1084
        %v1086 = vpop.f32.mrf.mxu0
        %v1087 = vadd.f32 0.0, %v1086
        %1088 = vmatmul.bf16.gmra.mxu0 %v1031
        %v1089 = vpop.f32.mrf.mxu0
        %v1090 = vadd.f32 0.0, %v1089
        %v1091 = vpop.f32.mrf.mxu0
        %v1092 = vadd.f32 0.0, %v1091
        %1093 = vmatmul.bf16.gmra.mxu0 %v1034
        %v1094 = vpop.f32.mrf.mxu0
        %v1095 = vadd.f32 0.0, %v1094
        %v1096 = vpop.f32.mrf.mxu0
        %v1097 = vadd.f32 0.0, %v1096
        %1098 = vmatmul.bf16.gmra.mxu0 %v1037
        %v1099 = vpop.f32.mrf.mxu0
        %v1100 = vadd.f32 0.0, %v1099
        %v1101 = vpop.f32.mrf.mxu0
        %v1102 = vadd.f32 0.0, %v1101
        %1103 = vmatmul.bf16.gmra.mxu0 %v1040
        %v1104 = vpop.f32.mrf.mxu0
        %v1105 = vadd.f32 0.0, %v1104
        %v1106 = vpop.f32.mrf.mxu0
        %v1107 = vadd.f32 0.0, %v1106
        %1108 = vmatmul.bf16.gmra.mxu0 %v1043
        %v1109 = vpop.f32.mrf.mxu0
        %v1110 = vadd.f32 0.0, %v1109
        %v1111 = vpop.f32.mrf.mxu0
        %v1112 = vadd.f32 0.0, %v1111
        %1113 = vmatmul.bf16.gmra.mxu0 %v1046
        %v1114 = vpop.f32.mrf.mxu0
        %v1115 = vadd.f32 0.0, %v1114
        %v1116 = vpop.f32.mrf.mxu0
        %v1117 = vadd.f32 0.0, %v1116
        %1118 = vmatmul.bf16.gmra.mxu0 %v1049
        %v1119 = vpop.f32.mrf.mxu0
        %v1120 = vadd.f32 0.0, %v1119
        %v1121 = vpop.f32.mrf.mxu0
        %v1122 = vadd.f32 0.0, %v1121
        %1123 = vmatmul.bf16.gmra.mxu0 %v1052
        %v1124 = vpop.f32.mrf.mxu0
        %v1125 = vadd.f32 0.0, %v1124
        %v1126 = vpop.f32.mrf.mxu0
        %v1127 = vadd.f32 0.0, %v1126
        %1128 = vmatmul.bf16.gmra.mxu0 %v1055
        %v1129 = vpop.f32.mrf.mxu0
        %v1130 = vadd.f32 0.0, %v1129
        %v1131 = vpop.f32.mrf.mxu0
        %v1132 = vadd.f32 0.0, %v1131
        %1133 = vmatmul.bf16.gmra.mxu0 %v1058
        %v1134 = vpop.f32.mrf.mxu0
        %v1135 = vadd.f32 0.0, %v1134
        %v1136 = vpop.f32.mrf.mxu0
        %v1137 = vadd.f32 0.0, %v1136
        %1138 = vmatmul.bf16.gmra.mxu0 %v1061
        %v1139 = vpop.f32.mrf.mxu0
        %v1140 = vadd.f32 0.0, %v1139
        %v1141 = vpop.f32.mrf.mxu0
        %v1142 = vadd.f32 0.0, %v1141
        %1143 = vmatmul.bf16.gmra.mxu0 %v1064
        %v1144 = vpop.f32.mrf.mxu0
        %v1145 = vadd.f32 0.0, %v1144
        %v1146 = vpop.f32.mrf.mxu0
        %v1147 = vadd.f32 0.0, %v1146
        %1148 = vmatmul.bf16.gmra.mxu0 %v1067
        %v1149 = vpop.f32.mrf.mxu0
        %v1150 = vadd.f32 0.0, %v1149
        %v1151 = vpop.f32.mrf.mxu0
        %v1152 = vadd.f32 0.0, %v1151
        %1153 = vmatmul.bf16.gmra.mxu0 %v1070
        %v1154 = vpop.f32.mrf.mxu0
        %v1155 = vadd.f32 0.0, %v1154
        %v1156 = vpop.f32.mrf.mxu0
        %v1157 = vadd.f32 0.0, %v1156
        %1158 = vmatmul.bf16.gmra.mxu0 %v1073
        %v1159 = vpop.f32.mrf.mxu0
        %v1160 = vadd.f32 0.0, %v1159
        %v1161 = vpop.f32.mrf.mxu0
        %v1162 = vadd.f32 0.0, %v1161
        %1163 = vdwg.mxu0
        %v1168 = vunpack.c.l.b16 %v942
        %v1169 = vunpack.c.l.b16 %v943
        %v1170 = vunpack.c.l.b16 %v944
        %v1171 = vunpack.c.l.b16 %v945
        %v1172 = vpack.c.b16 %v1169, %v1168
        %v1173 = vpack.c.b16 %v1171, %v1170
        %v1177 = vsel %vm1026, %v946, 0
        %v1180 = vsel %vm1026, %v947, 0
        %v1183 = vsel %vm1026, %v948, 0
        %v1186 = vsel %vm1026, %v949, 0
        %v1189 = vsel %vm1026, %v950, 0
        %v1192 = vsel %vm1026, %v951, 0
        %v1195 = vsel %vm1026, %v952, 0
        %v1198 = vsel %vm1026, %v953, 0
        %v1201 = vsel %vm1026, %v954, 0
        %v1204 = vsel %vm1026, %v955, 0
        %v1207 = vsel %vm1026, %v956, 0
        %v1210 = vsel %vm1026, %v957, 0
        %v1213 = vsel %vm1026, %v958, 0
        %v1216 = vsel %vm1026, %v959, 0
        %v1219 = vsel %vm1026, %v960, 0
        %v1222 = vsel %vm1026, %v961, 0
        %1224 = vmatpush.bf16.msra.mxu0 0
        %1225 = vmatpush.bf16.msra.mxu0 0
        %1226 = vmatpush.bf16.msra.mxu0 0
        %1227 = vmatpush.bf16.msra.mxu0 0
        %1228 = vmatpush.bf16.msra.mxu0 0
        %1229 = vmatpush.bf16.msra.mxu0 0
        %1230 = vmatpush.bf16.msra.mxu0 %v1173
        %1231 = vmatpush.bf16.msra.mxu0 %v1172
        %1232 = vmatmul.bf16.gmra.mxu0 %v1177
        %v1233 = vpop.f32.mrf.mxu0
        %v1234 = vadd.f32 %v1085, %v1233
        %v1235 = vpop.f32.mrf.mxu0
        %v1236 = vadd.f32 %v1087, %v1235
        %1237 = vmatmul.bf16.gmra.mxu0 %v1180
        %v1238 = vpop.f32.mrf.mxu0
        %v1239 = vadd.f32 %v1090, %v1238
        %v1240 = vpop.f32.mrf.mxu0
        %v1241 = vadd.f32 %v1092, %v1240
        %1242 = vmatmul.bf16.gmra.mxu0 %v1183
        %v1243 = vpop.f32.mrf.mxu0
        %v1244 = vadd.f32 %v1095, %v1243
        %v1245 = vpop.f32.mrf.mxu0
        %v1246 = vadd.f32 %v1097, %v1245
        %1247 = vmatmul.bf16.gmra.mxu0 %v1186
        %v1248 = vpop.f32.mrf.mxu0
        %v1249 = vadd.f32 %v1100, %v1248
        %v1250 = vpop.f32.mrf.mxu0
        %v1251 = vadd.f32 %v1102, %v1250
        %1252 = vmatmul.bf16.gmra.mxu0 %v1189
        %v1253 = vpop.f32.mrf.mxu0
        %v1254 = vadd.f32 %v1105, %v1253
        %v1255 = vpop.f32.mrf.mxu0
        %v1256 = vadd.f32 %v1107, %v1255
        %1257 = vmatmul.bf16.gmra.mxu0 %v1192
        %v1258 = vpop.f32.mrf.mxu0
        %v1259 = vadd.f32 %v1110, %v1258
        %v1260 = vpop.f32.mrf.mxu0
        %v1261 = vadd.f32 %v1112, %v1260
        %1262 = vmatmul.bf16.gmra.mxu0 %v1195
        %v1263 = vpop.f32.mrf.mxu0
        %v1264 = vadd.f32 %v1115, %v1263
        %v1265 = vpop.f32.mrf.mxu0
        %v1266 = vadd.f32 %v1117, %v1265
        %1267 = vmatmul.bf16.gmra.mxu0 %v1198
        %v1268 = vpop.f32.mrf.mxu0
        %v1269 = vadd.f32 %v1120, %v1268
        %v1270 = vpop.f32.mrf.mxu0
        %v1271 = vadd.f32 %v1122, %v1270
        %1272 = vmatmul.bf16.gmra.mxu0 %v1201
        %v1273 = vpop.f32.mrf.mxu0
        %v1274 = vadd.f32 %v1125, %v1273
        %v1275 = vpop.f32.mrf.mxu0
        %v1276 = vadd.f32 %v1127, %v1275
        %1277 = vmatmul.bf16.gmra.mxu0 %v1204
        %v1278 = vpop.f32.mrf.mxu0
        %v1279 = vadd.f32 %v1130, %v1278
        %v1280 = vpop.f32.mrf.mxu0
        %v1281 = vadd.f32 %v1132, %v1280
        %1282 = vmatmul.bf16.gmra.mxu0 %v1207
        %v1283 = vpop.f32.mrf.mxu0
        %v1284 = vadd.f32 %v1135, %v1283
        %v1285 = vpop.f32.mrf.mxu0
        %v1286 = vadd.f32 %v1137, %v1285
        %1287 = vmatmul.bf16.gmra.mxu0 %v1210
        %v1288 = vpop.f32.mrf.mxu0
        %v1289 = vadd.f32 %v1140, %v1288
        %v1290 = vpop.f32.mrf.mxu0
        %v1291 = vadd.f32 %v1142, %v1290
        %1292 = vmatmul.bf16.gmra.mxu0 %v1213
        %v1293 = vpop.f32.mrf.mxu0
        %v1294 = vadd.f32 %v1145, %v1293
        %v1295 = vpop.f32.mrf.mxu0
        %v1296 = vadd.f32 %v1147, %v1295
        %1297 = vmatmul.bf16.gmra.mxu0 %v1216
        %v1298 = vpop.f32.mrf.mxu0
        %v1299 = vadd.f32 %v1150, %v1298
        %v1300 = vpop.f32.mrf.mxu0
        %v1301 = vadd.f32 %v1152, %v1300
        %1302 = vmatmul.bf16.gmra.mxu0 %v1219
        %v1303 = vpop.f32.mrf.mxu0
        %v1304 = vadd.f32 %v1155, %v1303
        %v1305 = vpop.f32.mrf.mxu0
        %v1306 = vadd.f32 %v1157, %v1305
        %1307 = vmatmul.bf16.gmra.mxu0 %v1222
        %v1308 = vpop.f32.mrf.mxu0
        %v1309 = vadd.f32 %v1160, %v1308
        %v1310 = vpop.f32.mrf.mxu0
        %v1311 = vadd.f32 %v1162, %v1310
        %1312 = vdwg.mxu0
        %v1313 = vld [vmem:[%s325 + $0x2] sm:$0xff]
        %v1314 = vld [vmem:[%s325 + $0xa] sm:$0xff]
        %v1315 = vld [vmem:[%s325 + $0x12] sm:$0xff]
        %v1316 = vld [vmem:[%s325 + $0x1a] sm:$0xff]
        %v1317 = vld [vmem:[%s325 + $0x22] sm:$0xff]
        %v1318 = vld [vmem:[%s325 + $0x2a] sm:$0xff]
        %v1319 = vld [vmem:[%s325 + $0x32] sm:$0xff]
        %v1320 = vld [vmem:[%s325 + $0x3a] sm:$0xff]
        %v1321 = vld [vmem:[%s325 + $0x42] sm:$0xff]
        %v1322 = vld [vmem:[%s325 + $0x4a] sm:$0xff]
        %v1323 = vld [vmem:[%s325 + $0x52] sm:$0xff]
        %v1324 = vld [vmem:[%s325 + $0x5a] sm:$0xff]
        %v1325 = vld [vmem:[%s325 + $0x62] sm:$0xff]
        %v1326 = vld [vmem:[%s325 + $0x6a] sm:$0xff]
        %v1327 = vld [vmem:[%s325 + $0x72] sm:$0xff]
        %v1328 = vld [vmem:[%s325 + $0x7a] sm:$0xff]
        %v1329 = vld [vmem:[%s325 + $0x82] sm:$0xff]
        %v1330 = vld [vmem:[%s325 + $0x8a] sm:$0xff]
        %v1331 = vld [vmem:[%s325 + $0x92] sm:$0xff]
        %v1332 = vld [vmem:[%s325 + $0x9a] sm:$0xff]
        %v1333 = vld [vmem:[%s325 + $0xa2] sm:$0xff]
        %v1334 = vld [vmem:[%s325 + $0xaa] sm:$0xff]
        %v1335 = vld [vmem:[%s325 + $0xb2] sm:$0xff]
        %v1336 = vld [vmem:[%s325 + $0xba] sm:$0xff]
        %v1337 = vld [vmem:[%s325 + $0xc2] sm:$0xff]
        %v1338 = vld [vmem:[%s325 + $0xca] sm:$0xff]
        %v1339 = vld [vmem:[%s325 + $0xd2] sm:$0xff]
        %v1340 = vld [vmem:[%s325 + $0xda] sm:$0xff]
        %v1341 = vld [vmem:[%s325 + $0xe2] sm:$0xff]
        %v1342 = vld [vmem:[%s325 + $0xea] sm:$0xff]
        %v1343 = vld [vmem:[%s325 + $0xf2] sm:$0xff]
        %v1344 = vld [vmem:[%s325 + $0xfa] sm:$0xff]
        %v1345 = vadd.s32 %v718, 1
        %v1346 = vadd.s32 %v719, 1
        %v1347 = vadd.s32 %v720, 1
        %v1348 = vadd.s32 %v721, 1
        %v1349 = vadd.s32 %v722, 1
        %v1350 = vadd.s32 %v723, 1
        %v1351 = vadd.s32 %v724, 1
        %v1352 = vadd.s32 %v725, 1
        %v1353 = vadd.s32 %v726, 1
        %v1354 = vadd.s32 %v727, 1
        %v1355 = vadd.s32 %v728, 1
        %v1356 = vadd.s32 %v729, 1
        %v1357 = vadd.s32 %v730, 1
        %v1358 = vadd.s32 %v731, 1
        %v1359 = vadd.s32 %v732, 1
        %v1360 = vadd.s32 %v733, 1
        %v1361 = vadd.s32 %v734, 1
        %v1362 = vadd.s32 %v735, 1
        %v1363 = vadd.s32 %v736, 1
        %v1364 = vadd.s32 %v737, 1
        %v1365 = vadd.s32 %v738, 1
        %v1366 = vadd.s32 %v739, 1
        %v1367 = vadd.s32 %v740, 1
        %v1368 = vadd.s32 %v741, 1
        %v1369 = vadd.s32 %v742, 1
        %v1370 = vadd.s32 %v743, 1
        %v1371 = vadd.s32 %v744, 1
        %v1372 = vadd.s32 %v745, 1
        %v1373 = vadd.s32 %v746, 1
        %v1374 = vadd.s32 %v747, 1
        %v1375 = vadd.s32 %v748, 1
        %v1376 = vadd.s32 %v749, 1
        %vm1377 = vcmp.ge.s32.totalorder %v1345, 0
        %vm1378 = vcmp.ge.s32.totalorder %v1346, 0
        %vm1379 = vcmp.ge.s32.totalorder %v1347, 0
        %vm1380 = vcmp.ge.s32.totalorder %v1348, 0
        %vm1381 = vcmp.ge.s32.totalorder %v1349, 0
        %vm1382 = vcmp.ge.s32.totalorder %v1350, 0
        %vm1383 = vcmp.ge.s32.totalorder %v1351, 0
        %vm1384 = vcmp.ge.s32.totalorder %v1352, 0
        %vm1385 = vcmp.ge.s32.totalorder %v1353, 0
        %vm1386 = vcmp.ge.s32.totalorder %v1354, 0
        %vm1387 = vcmp.ge.s32.totalorder %v1355, 0
        %vm1388 = vcmp.ge.s32.totalorder %v1356, 0
        %vm1389 = vcmp.ge.s32.totalorder %v1357, 0
        %vm1390 = vcmp.ge.s32.totalorder %v1358, 0
        %vm1391 = vcmp.ge.s32.totalorder %v1359, 0
        %vm1392 = vcmp.ge.s32.totalorder %v1360, 0
        %vm1393 = vcmp.ge.s32.totalorder %v1361, 0
        %vm1394 = vcmp.ge.s32.totalorder %v1362, 0
        %vm1395 = vcmp.ge.s32.totalorder %v1363, 0
        %vm1396 = vcmp.ge.s32.totalorder %v1364, 0
        %vm1397 = vcmp.ge.s32.totalorder %v1365, 0
        %vm1398 = vcmp.ge.s32.totalorder %v1366, 0
        %vm1399 = vcmp.ge.s32.totalorder %v1367, 0
        %vm1400 = vcmp.ge.s32.totalorder %v1368, 0
        %vm1401 = vcmp.ge.s32.totalorder %v1369, 0
        %vm1402 = vcmp.ge.s32.totalorder %v1370, 0
        %vm1403 = vcmp.ge.s32.totalorder %v1371, 0
        %vm1404 = vcmp.ge.s32.totalorder %v1372, 0
        %vm1405 = vcmp.ge.s32.totalorder %v1373, 0
        %vm1406 = vcmp.ge.s32.totalorder %v1374, 0
        %vm1407 = vcmp.ge.s32.totalorder %v1375, 0
        %vm1408 = vcmp.ge.s32.totalorder %v1376, 0
        %vm1409 = vcmp.lt.s32.totalorder %v1345, 16
        %vm1410 = vcmp.lt.s32.totalorder %v1346, 16
        %vm1411 = vcmp.lt.s32.totalorder %v1347, 16
        %vm1412 = vcmp.lt.s32.totalorder %v1348, 16
        %vm1413 = vcmp.lt.s32.totalorder %v1349, 16
        %vm1414 = vcmp.lt.s32.totalorder %v1350, 16
        %vm1415 = vcmp.lt.s32.totalorder %v1351, 16
        %vm1416 = vcmp.lt.s32.totalorder %v1352, 16
        %vm1417 = vcmp.lt.s32.totalorder %v1353, 16
        %vm1418 = vcmp.lt.s32.totalorder %v1354, 16
        %vm1419 = vcmp.lt.s32.totalorder %v1355, 16
        %vm1420 = vcmp.lt.s32.totalorder %v1356, 16
        %vm1421 = vcmp.lt.s32.totalorder %v1357, 16
        %vm1422 = vcmp.lt.s32.totalorder %v1358, 16
        %vm1423 = vcmp.lt.s32.totalorder %v1359, 16
        %vm1424 = vcmp.lt.s32.totalorder %v1360, 16
        %vm1425 = vcmp.lt.s32.totalorder %v1361, 16
        %vm1426 = vcmp.lt.s32.totalorder %v1362, 16
        %vm1427 = vcmp.lt.s32.totalorder %v1363, 16
        %vm1428 = vcmp.lt.s32.totalorder %v1364, 16
        %vm1429 = vcmp.lt.s32.totalorder %v1365, 16
        %vm1430 = vcmp.lt.s32.totalorder %v1366, 16
        %vm1431 = vcmp.lt.s32.totalorder %v1367, 16
        %vm1432 = vcmp.lt.s32.totalorder %v1368, 16
        %vm1433 = vcmp.lt.s32.totalorder %v1369, 16
        %vm1434 = vcmp.lt.s32.totalorder %v1370, 16
        %vm1435 = vcmp.lt.s32.totalorder %v1371, 16
        %vm1436 = vcmp.lt.s32.totalorder %v1372, 16
        %vm1437 = vcmp.lt.s32.totalorder %v1373, 16
        %vm1438 = vcmp.lt.s32.totalorder %v1374, 16
        %vm1439 = vcmp.lt.s32.totalorder %v1375, 16
        %vm1440 = vcmp.lt.s32.totalorder %v1376, 16
        %vm1441 = vmand %vm1377, %vm1409
        %vm1442 = vmand %vm1378, %vm1410
        %vm1443 = vmand %vm1379, %vm1411
        %vm1444 = vmand %vm1380, %vm1412
        %vm1445 = vmand %vm1381, %vm1413
        %vm1446 = vmand %vm1382, %vm1414
        %vm1447 = vmand %vm1383, %vm1415
        %vm1448 = vmand %vm1384, %vm1416
        %vm1449 = vmand %vm1385, %vm1417
        %vm1450 = vmand %vm1386, %vm1418
        %vm1451 = vmand %vm1387, %vm1419
        %vm1452 = vmand %vm1388, %vm1420
        %vm1453 = vmand %vm1389, %vm1421
        %vm1454 = vmand %vm1390, %vm1422
        %vm1455 = vmand %vm1391, %vm1423
        %vm1456 = vmand %vm1392, %vm1424
        %vm1457 = vmand %vm1393, %vm1425
        %vm1458 = vmand %vm1394, %vm1426
        %vm1459 = vmand %vm1395, %vm1427
        %vm1460 = vmand %vm1396, %vm1428
        %vm1461 = vmand %vm1397, %vm1429
        %vm1462 = vmand %vm1398, %vm1430
        %vm1463 = vmand %vm1399, %vm1431
        %vm1464 = vmand %vm1400, %vm1432
        %vm1465 = vmand %vm1401, %vm1433
        %vm1466 = vmand %vm1402, %vm1434
        %vm1467 = vmand %vm1403, %vm1435
        %vm1468 = vmand %vm1404, %vm1436
        %vm1469 = vmand %vm1405, %vm1437
        %vm1470 = vmand %vm1406, %vm1438
        %vm1471 = vmand %vm1407, %vm1439
        %vm1472 = vmand %vm1408, %vm1440
        %v1473 = vsel %vm1441, %v1313, 0.0
        %v1474 = vsel %vm1442, %v1314, 0.0
        %v1475 = vsel %vm1443, %v1315, 0.0
        %v1476 = vsel %vm1444, %v1316, 0.0
        %v1477 = vsel %vm1445, %v1317, 0.0
        %v1478 = vsel %vm1446, %v1318, 0.0
        %v1479 = vsel %vm1447, %v1319, 0.0
        %v1480 = vsel %vm1448, %v1320, 0.0
        %v1481 = vsel %vm1449, %v1321, 0.0
        %v1482 = vsel %vm1450, %v1322, 0.0
        %v1483 = vsel %vm1451, %v1323, 0.0
        %v1484 = vsel %vm1452, %v1324, 0.0
        %v1485 = vsel %vm1453, %v1325, 0.0
        %v1486 = vsel %vm1454, %v1326, 0.0
        %v1487 = vsel %vm1455, %v1327, 0.0
        %v1488 = vsel %vm1456, %v1328, 0.0
        %v1489 = vsel %vm1457, %v1329, 0.0
        %v1490 = vsel %vm1458, %v1330, 0.0
        %v1491 = vsel %vm1459, %v1331, 0.0
        %v1492 = vsel %vm1460, %v1332, 0.0
        %v1493 = vsel %vm1461, %v1333, 0.0
        %v1494 = vsel %vm1462, %v1334, 0.0
        %v1495 = vsel %vm1463, %v1335, 0.0
        %v1496 = vsel %vm1464, %v1336, 0.0
        %v1497 = vsel %vm1465, %v1337, 0.0
        %v1498 = vsel %vm1466, %v1338, 0.0
        %v1499 = vsel %vm1467, %v1339, 0.0
        %v1500 = vsel %vm1468, %v1340, 0.0
        %v1501 = vsel %vm1469, %v1341, 0.0
        %v1502 = vsel %vm1470, %v1342, 0.0
        %v1503 = vsel %vm1471, %v1343, 0.0
        %v1504 = vsel %vm1472, %v1344, 0.0
        %v1505 = vld [vmem:[%s1 + $0x20] sm:$0xf]
        %v1506 = vld [vmem:[%s1 + $0x24] sm:$0xf]
        %v1507 = vld [vmem:[%s1 + $0x28] sm:$0xf]
        %v1508 = vld [vmem:[%s1 + $0x2c] sm:$0xf]
        %v1509 = vpack.c.bf16 %v1474, %v1473
        %v1510 = vpack.c.bf16 %v1476, %v1475
        %v1511 = vpack.c.bf16 %v1478, %v1477
        %v1512 = vpack.c.bf16 %v1480, %v1479
        %v1513 = vpack.c.bf16 %v1482, %v1481
        %v1514 = vpack.c.bf16 %v1484, %v1483
        %v1515 = vpack.c.bf16 %v1486, %v1485
        %v1516 = vpack.c.bf16 %v1488, %v1487
        %v1517 = vpack.c.bf16 %v1490, %v1489
        %v1518 = vpack.c.bf16 %v1492, %v1491
        %v1519 = vpack.c.bf16 %v1494, %v1493
        %v1520 = vpack.c.bf16 %v1496, %v1495
        %v1521 = vpack.c.bf16 %v1498, %v1497
        %v1522 = vpack.c.bf16 %v1500, %v1499
        %v1523 = vpack.c.bf16 %v1502, %v1501
        %v1524 = vpack.c.bf16 %v1504, %v1503
        %v1529 = vunpack.c.l.b16 %v1505
        %v1530 = vunpack.c.l.b16 %v1506
        %v1531 = vunpack.c.l.b16 %v1507
        %v1532 = vunpack.c.l.b16 %v1508
        %v1533 = vpack.c.b16 %v1530, %v1529
        %v1534 = vpack.c.b16 %v1532, %v1531
        %v1538 = vsel %vm1026, %v1509, 0
        %v1541 = vsel %vm1026, %v1510, 0
        %v1544 = vsel %vm1026, %v1511, 0
        %v1547 = vsel %vm1026, %v1512, 0
        %v1550 = vsel %vm1026, %v1513, 0
        %v1553 = vsel %vm1026, %v1514, 0
        %v1556 = vsel %vm1026, %v1515, 0
        %v1559 = vsel %vm1026, %v1516, 0
        %v1562 = vsel %vm1026, %v1517, 0
        %v1565 = vsel %vm1026, %v1518, 0
        %v1568 = vsel %vm1026, %v1519, 0
        %v1571 = vsel %vm1026, %v1520, 0
        %v1574 = vsel %vm1026, %v1521, 0
        %v1577 = vsel %vm1026, %v1522, 0
        %v1580 = vsel %vm1026, %v1523, 0
        %v1583 = vsel %vm1026, %v1524, 0
        %1585 = vmatpush.bf16.msra.mxu0 0
        %1586 = vmatpush.bf16.msra.mxu0 0
        %1587 = vmatpush.bf16.msra.mxu0 0
        %1588 = vmatpush.bf16.msra.mxu0 0
        %1589 = vmatpush.bf16.msra.mxu0 0
        %1590 = vmatpush.bf16.msra.mxu0 0
        %1591 = vmatpush.bf16.msra.mxu0 %v1534
        %1592 = vmatpush.bf16.msra.mxu0 %v1533
        %1593 = vmatmul.bf16.gmra.mxu0 %v1538
        %v1594 = vpop.f32.mrf.mxu0
        %v1595 = vadd.f32 0.0, %v1594
        %v1596 = vpop.f32.mrf.mxu0
        %v1597 = vadd.f32 0.0, %v1596
        %1598 = vmatmul.bf16.gmra.mxu0 %v1541
        %v1599 = vpop.f32.mrf.mxu0
        %v1600 = vadd.f32 0.0, %v1599
        %v1601 = vpop.f32.mrf.mxu0
        %v1602 = vadd.f32 0.0, %v1601
        %1603 = vmatmul.bf16.gmra.mxu0 %v1544
        %v1604 = vpop.f32.mrf.mxu0
        %v1605 = vadd.f32 0.0, %v1604
        %v1606 = vpop.f32.mrf.mxu0
        %v1607 = vadd.f32 0.0, %v1606
        %1608 = vmatmul.bf16.gmra.mxu0 %v1547
        %v1609 = vpop.f32.mrf.mxu0
        %v1610 = vadd.f32 0.0, %v1609
        %v1611 = vpop.f32.mrf.mxu0
        %v1612 = vadd.f32 0.0, %v1611
        %1613 = vmatmul.bf16.gmra.mxu0 %v1550
        %v1614 = vpop.f32.mrf.mxu0
        %v1615 = vadd.f32 0.0, %v1614
        %v1616 = vpop.f32.mrf.mxu0
        %v1617 = vadd.f32 0.0, %v1616
        %1618 = vmatmul.bf16.gmra.mxu0 %v1553
        %v1619 = vpop.f32.mrf.mxu0
        %v1620 = vadd.f32 0.0, %v1619
        %v1621 = vpop.f32.mrf.mxu0
        %v1622 = vadd.f32 0.0, %v1621
        %1623 = vmatmul.bf16.gmra.mxu0 %v1556
        %v1624 = vpop.f32.mrf.mxu0
        %v1625 = vadd.f32 0.0, %v1624
        %v1626 = vpop.f32.mrf.mxu0
        %v1627 = vadd.f32 0.0, %v1626
        %1628 = vmatmul.bf16.gmra.mxu0 %v1559
        %v1629 = vpop.f32.mrf.mxu0
        %v1630 = vadd.f32 0.0, %v1629
        %v1631 = vpop.f32.mrf.mxu0
        %v1632 = vadd.f32 0.0, %v1631
        %1633 = vmatmul.bf16.gmra.mxu0 %v1562
        %v1634 = vpop.f32.mrf.mxu0
        %v1635 = vadd.f32 0.0, %v1634
        %v1636 = vpop.f32.mrf.mxu0
        %v1637 = vadd.f32 0.0, %v1636
        %1638 = vmatmul.bf16.gmra.mxu0 %v1565
        %v1639 = vpop.f32.mrf.mxu0
        %v1640 = vadd.f32 0.0, %v1639
        %v1641 = vpop.f32.mrf.mxu0
        %v1642 = vadd.f32 0.0, %v1641
        %1643 = vmatmul.bf16.gmra.mxu0 %v1568
        %v1644 = vpop.f32.mrf.mxu0
        %v1645 = vadd.f32 0.0, %v1644
        %v1646 = vpop.f32.mrf.mxu0
        %v1647 = vadd.f32 0.0, %v1646
        %1648 = vmatmul.bf16.gmra.mxu0 %v1571
        %v1649 = vpop.f32.mrf.mxu0
        %v1650 = vadd.f32 0.0, %v1649
        %v1651 = vpop.f32.mrf.mxu0
        %v1652 = vadd.f32 0.0, %v1651
        %1653 = vmatmul.bf16.gmra.mxu0 %v1574
        %v1654 = vpop.f32.mrf.mxu0
        %v1655 = vadd.f32 0.0, %v1654
        %v1656 = vpop.f32.mrf.mxu0
        %v1657 = vadd.f32 0.0, %v1656
        %1658 = vmatmul.bf16.gmra.mxu0 %v1577
        %v1659 = vpop.f32.mrf.mxu0
        %v1660 = vadd.f32 0.0, %v1659
        %v1661 = vpop.f32.mrf.mxu0
        %v1662 = vadd.f32 0.0, %v1661
        %1663 = vmatmul.bf16.gmra.mxu0 %v1580
        %v1664 = vpop.f32.mrf.mxu0
        %v1665 = vadd.f32 0.0, %v1664
        %v1666 = vpop.f32.mrf.mxu0
        %v1667 = vadd.f32 0.0, %v1666
        %1668 = vmatmul.bf16.gmra.mxu0 %v1583
        %v1669 = vpop.f32.mrf.mxu0
        %v1670 = vadd.f32 0.0, %v1669
        %v1671 = vpop.f32.mrf.mxu0
        %v1672 = vadd.f32 0.0, %v1671
        %1673 = vdwg.mxu0
        %v1674 = vadd.f32 %v1234, %v1595
        %v1675 = vadd.f32 %v1236, %v1597
        %v1676 = vadd.f32 %v1239, %v1600
        %v1677 = vadd.f32 %v1241, %v1602
        %v1678 = vadd.f32 %v1244, %v1605
        %v1679 = vadd.f32 %v1246, %v1607
        %v1680 = vadd.f32 %v1249, %v1610
        %v1681 = vadd.f32 %v1251, %v1612
        %v1682 = vadd.f32 %v1254, %v1615
        %v1683 = vadd.f32 %v1256, %v1617
        %v1684 = vadd.f32 %v1259, %v1620
        %v1685 = vadd.f32 %v1261, %v1622
        %v1686 = vadd.f32 %v1264, %v1625
        %v1687 = vadd.f32 %v1266, %v1627
        %v1688 = vadd.f32 %v1269, %v1630
        %v1689 = vadd.f32 %v1271, %v1632
        %v1690 = vadd.f32 %v1274, %v1635
        %v1691 = vadd.f32 %v1276, %v1637
        %v1692 = vadd.f32 %v1279, %v1640
        %v1693 = vadd.f32 %v1281, %v1642
        %v1694 = vadd.f32 %v1284, %v1645
        %v1695 = vadd.f32 %v1286, %v1647
        %v1696 = vadd.f32 %v1289, %v1650
        %v1697 = vadd.f32 %v1291, %v1652
        %v1698 = vadd.f32 %v1294, %v1655
        %v1699 = vadd.f32 %v1296, %v1657
        %v1700 = vadd.f32 %v1299, %v1660
        %v1701 = vadd.f32 %v1301, %v1662
        %v1702 = vadd.f32 %v1304, %v1665
        %v1703 = vadd.f32 %v1306, %v1667
        %v1704 = vadd.f32 %v1309, %v1670
        %v1705 = vadd.f32 %v1311, %v1672
        %v1706 = vld [vmem:[%s325 + $0x10] sm:$0xff]
        %v1707 = vld [vmem:[%s325 + $0x18] sm:$0xff]
        %v1708 = vld [vmem:[%s325 + $0x20] sm:$0xff]
        %v1709 = vld [vmem:[%s325 + $0x28] sm:$0xff]
        %v1710 = vld [vmem:[%s325 + $0x30] sm:$0xff]
        %v1711 = vld [vmem:[%s325 + $0x38] sm:$0xff]
        %v1712 = vld [vmem:[%s325 + $0x40] sm:$0xff]
        %v1713 = vld [vmem:[%s325 + $0x48] sm:$0xff]
        %v1714 = vld [vmem:[%s325 + $0x50] sm:$0xff]
        %v1715 = vld [vmem:[%s325 + $0x58] sm:$0xff]
        %v1716 = vld [vmem:[%s325 + $0x60] sm:$0xff]
        %v1717 = vld [vmem:[%s325 + $0x68] sm:$0xff]
        %v1718 = vld [vmem:[%s325 + $0x70] sm:$0xff]
        %v1719 = vld [vmem:[%s325 + $0x78] sm:$0xff]
        %v1720 = vld [vmem:[%s325 + $0x80] sm:$0xff]
        %v1721 = vld [vmem:[%s325 + $0x88] sm:$0xff]
        %v1722 = vld [vmem:[%s325 + $0x90] sm:$0xff]
        %v1723 = vld [vmem:[%s325 + $0x98] sm:$0xff]
        %v1724 = vld [vmem:[%s325 + $0xa0] sm:$0xff]
        %v1725 = vld [vmem:[%s325 + $0xa8] sm:$0xff]
        %v1726 = vld [vmem:[%s325 + $0xb0] sm:$0xff]
        %v1727 = vld [vmem:[%s325 + $0xb8] sm:$0xff]
        %v1728 = vld [vmem:[%s325 + $0xc0] sm:$0xff]
        %v1729 = vld [vmem:[%s325 + $0xc8] sm:$0xff]
        %v1730 = vld [vmem:[%s325 + $0xd0] sm:$0xff]
        %v1731 = vld [vmem:[%s325 + $0xd8] sm:$0xff]
        %v1732 = vld [vmem:[%s325 + $0xe0] sm:$0xff]
        %v1733 = vld [vmem:[%s325 + $0xe8] sm:$0xff]
        %v1734 = vld [vmem:[%s325 + $0xf0] sm:$0xff]
        %v1735 = vld [vmem:[%s325 + $0xf8] sm:$0xff]
        %v1736 = vld [vmem:[%s325 + $0x100] sm:$0xff]
        %v1737 = vld [vmem:[%s325 + $0x108] sm:$0xff]
        %v1738 = vsel %vm878, %v1706, 0.0
        %v1739 = vsel %vm879, %v1707, 0.0
        %v1740 = vsel %vm880, %v1708, 0.0
        %v1741 = vsel %vm881, %v1709, 0.0
        %v1742 = vsel %vm882, %v1710, 0.0
        %v1743 = vsel %vm883, %v1711, 0.0
        %v1744 = vsel %vm884, %v1712, 0.0
        %v1745 = vsel %vm885, %v1713, 0.0
        %v1746 = vsel %vm886, %v1714, 0.0
        %v1747 = vsel %vm887, %v1715, 0.0
        %v1748 = vsel %vm888, %v1716, 0.0
        %v1749 = vsel %vm889, %v1717, 0.0
        %v1750 = vsel %vm890, %v1718, 0.0
        %v1751 = vsel %vm891, %v1719, 0.0
        %v1752 = vsel %vm892, %v1720, 0.0
        %v1753 = vsel %vm893, %v1721, 0.0
        %v1754 = vsel %vm894, %v1722, 0.0
        %v1755 = vsel %vm895, %v1723, 0.0
        %v1756 = vsel %vm896, %v1724, 0.0
        %v1757 = vsel %vm897, %v1725, 0.0
        %v1758 = vsel %vm898, %v1726, 0.0
        %v1759 = vsel %vm899, %v1727, 0.0
        %v1760 = vsel %vm900, %v1728, 0.0
        %v1761 = vsel %vm901, %v1729, 0.0
        %v1762 = vsel %vm902, %v1730, 0.0
        %v1763 = vsel %vm903, %v1731, 0.0
        %v1764 = vsel %vm904, %v1732, 0.0
        %v1765 = vsel %vm905, %v1733, 0.0
        %v1766 = vsel %vm906, %v1734, 0.0
        %v1767 = vsel %vm907, %v1735, 0.0
        %v1768 = vsel %vm908, %v1736, 0.0
        %v1769 = vsel %vm909, %v1737, 0.0
        %v1770 = vld [vmem:[%s1 + $0x30] sm:$0xf]
        %v1771 = vld [vmem:[%s1 + $0x34] sm:$0xf]
        %v1772 = vld [vmem:[%s1 + $0x38] sm:$0xf]
        %v1773 = vld [vmem:[%s1 + $0x3c] sm:$0xf]
        %v1774 = vpack.c.bf16 %v1739, %v1738
        %v1775 = vpack.c.bf16 %v1741, %v1740
        %v1776 = vpack.c.bf16 %v1743, %v1742
        %v1777 = vpack.c.bf16 %v1745, %v1744
        %v1778 = vpack.c.bf16 %v1747, %v1746
        %v1779 = vpack.c.bf16 %v1749, %v1748
        %v1780 = vpack.c.bf16 %v1751, %v1750
        %v1781 = vpack.c.bf16 %v1753, %v1752
        %v1782 = vpack.c.bf16 %v1755, %v1754
        %v1783 = vpack.c.bf16 %v1757, %v1756
        %v1784 = vpack.c.bf16 %v1759, %v1758
        %v1785 = vpack.c.bf16 %v1761, %v1760
        %v1786 = vpack.c.bf16 %v1763, %v1762
        %v1787 = vpack.c.bf16 %v1765, %v1764
        %v1788 = vpack.c.bf16 %v1767, %v1766
        %v1789 = vpack.c.bf16 %v1769, %v1768
        %v1794 = vunpack.c.l.b16 %v1770
        %v1795 = vunpack.c.l.b16 %v1771
        %v1796 = vunpack.c.l.b16 %v1772
        %v1797 = vunpack.c.l.b16 %v1773
        %v1798 = vpack.c.b16 %v1795, %v1794
        %v1799 = vpack.c.b16 %v1797, %v1796
        %v1803 = vsel %vm1026, %v1774, 0
        %v1806 = vsel %vm1026, %v1775, 0
        %v1809 = vsel %vm1026, %v1776, 0
        %v1812 = vsel %vm1026, %v1777, 0
        %v1815 = vsel %vm1026, %v1778, 0
        %v1818 = vsel %vm1026, %v1779, 0
        %v1821 = vsel %vm1026, %v1780, 0
        %v1824 = vsel %vm1026, %v1781, 0
        %v1827 = vsel %vm1026, %v1782, 0
        %v1830 = vsel %vm1026, %v1783, 0
        %v1833 = vsel %vm1026, %v1784, 0
        %v1836 = vsel %vm1026, %v1785, 0
        %v1839 = vsel %vm1026, %v1786, 0
        %v1842 = vsel %vm1026, %v1787, 0
        %v1845 = vsel %vm1026, %v1788, 0
        %v1848 = vsel %vm1026, %v1789, 0
        %1850 = vmatpush.bf16.msra.mxu0 0
        %1851 = vmatpush.bf16.msra.mxu0 0
        %1852 = vmatpush.bf16.msra.mxu0 0
        %1853 = vmatpush.bf16.msra.mxu0 0
        %1854 = vmatpush.bf16.msra.mxu0 0
        %1855 = vmatpush.bf16.msra.mxu0 0
        %1856 = vmatpush.bf16.msra.mxu0 %v1799
        %1857 = vmatpush.bf16.msra.mxu0 %v1798
        %1858 = vmatmul.bf16.gmra.mxu0 %v1803
        %v1859 = vpop.f32.mrf.mxu0
        %v1860 = vadd.f32 0.0, %v1859
        %v1861 = vpop.f32.mrf.mxu0
        %v1862 = vadd.f32 0.0, %v1861
        %1863 = vmatmul.bf16.gmra.mxu0 %v1806
        %v1864 = vpop.f32.mrf.mxu0
        %v1865 = vadd.f32 0.0, %v1864
        %v1866 = vpop.f32.mrf.mxu0
        %v1867 = vadd.f32 0.0, %v1866
        %1868 = vmatmul.bf16.gmra.mxu0 %v1809
        %v1869 = vpop.f32.mrf.mxu0
        %v1870 = vadd.f32 0.0, %v1869
        %v1871 = vpop.f32.mrf.mxu0
        %v1872 = vadd.f32 0.0, %v1871
        %1873 = vmatmul.bf16.gmra.mxu0 %v1812
        %v1874 = vpop.f32.mrf.mxu0
        %v1875 = vadd.f32 0.0, %v1874
        %v1876 = vpop.f32.mrf.mxu0
        %v1877 = vadd.f32 0.0, %v1876
        %1878 = vmatmul.bf16.gmra.mxu0 %v1815
        %v1879 = vpop.f32.mrf.mxu0
        %v1880 = vadd.f32 0.0, %v1879
        %v1881 = vpop.f32.mrf.mxu0
        %v1882 = vadd.f32 0.0, %v1881
        %1883 = vmatmul.bf16.gmra.mxu0 %v1818
        %v1884 = vpop.f32.mrf.mxu0
        %v1885 = vadd.f32 0.0, %v1884
        %v1886 = vpop.f32.mrf.mxu0
        %v1887 = vadd.f32 0.0, %v1886
        %1888 = vmatmul.bf16.gmra.mxu0 %v1821
        %v1889 = vpop.f32.mrf.mxu0
        %v1890 = vadd.f32 0.0, %v1889
        %v1891 = vpop.f32.mrf.mxu0
        %v1892 = vadd.f32 0.0, %v1891
        %1893 = vmatmul.bf16.gmra.mxu0 %v1824
        %v1894 = vpop.f32.mrf.mxu0
        %v1895 = vadd.f32 0.0, %v1894
        %v1896 = vpop.f32.mrf.mxu0
        %v1897 = vadd.f32 0.0, %v1896
        %1898 = vmatmul.bf16.gmra.mxu0 %v1827
        %v1899 = vpop.f32.mrf.mxu0
        %v1900 = vadd.f32 0.0, %v1899
        %v1901 = vpop.f32.mrf.mxu0
        %v1902 = vadd.f32 0.0, %v1901
        %1903 = vmatmul.bf16.gmra.mxu0 %v1830
        %v1904 = vpop.f32.mrf.mxu0
        %v1905 = vadd.f32 0.0, %v1904
        %v1906 = vpop.f32.mrf.mxu0
        %v1907 = vadd.f32 0.0, %v1906
        %1908 = vmatmul.bf16.gmra.mxu0 %v1833
        %v1909 = vpop.f32.mrf.mxu0
        %v1910 = vadd.f32 0.0, %v1909
        %v1911 = vpop.f32.mrf.mxu0
        %v1912 = vadd.f32 0.0, %v1911
        %1913 = vmatmul.bf16.gmra.mxu0 %v1836
        %v1914 = vpop.f32.mrf.mxu0
        %v1915 = vadd.f32 0.0, %v1914
        %v1916 = vpop.f32.mrf.mxu0
        %v1917 = vadd.f32 0.0, %v1916
        %1918 = vmatmul.bf16.gmra.mxu0 %v1839
        %v1919 = vpop.f32.mrf.mxu0
        %v1920 = vadd.f32 0.0, %v1919
        %v1921 = vpop.f32.mrf.mxu0
        %v1922 = vadd.f32 0.0, %v1921
        %1923 = vmatmul.bf16.gmra.mxu0 %v1842
        %v1924 = vpop.f32.mrf.mxu0
        %v1925 = vadd.f32 0.0, %v1924
        %v1926 = vpop.f32.mrf.mxu0
        %v1927 = vadd.f32 0.0, %v1926
        %1928 = vmatmul.bf16.gmra.mxu0 %v1845
        %v1929 = vpop.f32.mrf.mxu0
        %v1930 = vadd.f32 0.0, %v1929
        %v1931 = vpop.f32.mrf.mxu0
        %v1932 = vadd.f32 0.0, %v1931
        %1933 = vmatmul.bf16.gmra.mxu0 %v1848
        %v1934 = vpop.f32.mrf.mxu0
        %v1935 = vadd.f32 0.0, %v1934
        %v1936 = vpop.f32.mrf.mxu0
        %v1937 = vadd.f32 0.0, %v1936
        %1938 = vdwg.mxu0
        %v1939 = vadd.f32 %v1674, %v1860
        %v1940 = vadd.f32 %v1675, %v1862
        %v1941 = vadd.f32 %v1676, %v1865
        %v1942 = vadd.f32 %v1677, %v1867
        %v1943 = vadd.f32 %v1678, %v1870
        %v1944 = vadd.f32 %v1679, %v1872
        %v1945 = vadd.f32 %v1680, %v1875
        %v1946 = vadd.f32 %v1681, %v1877
        %v1947 = vadd.f32 %v1682, %v1880
        %v1948 = vadd.f32 %v1683, %v1882
        %v1949 = vadd.f32 %v1684, %v1885
        %v1950 = vadd.f32 %v1685, %v1887
        %v1951 = vadd.f32 %v1686, %v1890
        %v1952 = vadd.f32 %v1687, %v1892
        %v1953 = vadd.f32 %v1688, %v1895
        %v1954 = vadd.f32 %v1689, %v1897
        %v1955 = vadd.f32 %v1690, %v1900
        %v1956 = vadd.f32 %v1691, %v1902
        %v1957 = vadd.f32 %v1692, %v1905
        %v1958 = vadd.f32 %v1693, %v1907
        %v1959 = vadd.f32 %v1694, %v1910
        %v1960 = vadd.f32 %v1695, %v1912
        %v1961 = vadd.f32 %v1696, %v1915
        %v1962 = vadd.f32 %v1697, %v1917
        %v1963 = vadd.f32 %v1698, %v1920
        %v1964 = vadd.f32 %v1699, %v1922
        %v1965 = vadd.f32 %v1700, %v1925
        %v1966 = vadd.f32 %v1701, %v1927
        %v1967 = vadd.f32 %v1702, %v1930
        %v1968 = vadd.f32 %v1703, %v1932
        %v1969 = vadd.f32 %v1704, %v1935
        %v1970 = vadd.f32 %v1705, %v1937
        %v1971 = vld [vmem:[%s325 + $0x11] sm:$0xff]
        %v1972 = vld [vmem:[%s325 + $0x19] sm:$0xff]
        %v1973 = vld [vmem:[%s325 + $0x21] sm:$0xff]
        %v1974 = vld [vmem:[%s325 + $0x29] sm:$0xff]
        %v1975 = vld [vmem:[%s325 + $0x31] sm:$0xff]
        %v1976 = vld [vmem:[%s325 + $0x39] sm:$0xff]
        %v1977 = vld [vmem:[%s325 + $0x41] sm:$0xff]
        %v1978 = vld [vmem:[%s325 + $0x49] sm:$0xff]
        %v1979 = vld [vmem:[%s325 + $0x51] sm:$0xff]
        %v1980 = vld [vmem:[%s325 + $0x59] sm:$0xff]
        %v1981 = vld [vmem:[%s325 + $0x61] sm:$0xff]
        %v1982 = vld [vmem:[%s325 + $0x69] sm:$0xff]
        %v1983 = vld [vmem:[%s325 + $0x71] sm:$0xff]
        %v1984 = vld [vmem:[%s325 + $0x79] sm:$0xff]
        %v1985 = vld [vmem:[%s325 + $0x81] sm:$0xff]
        %v1986 = vld [vmem:[%s325 + $0x89] sm:$0xff]
        %v1987 = vld [vmem:[%s325 + $0x91] sm:$0xff]
        %v1988 = vld [vmem:[%s325 + $0x99] sm:$0xff]
        %v1989 = vld [vmem:[%s325 + $0xa1] sm:$0xff]
        %v1990 = vld [vmem:[%s325 + $0xa9] sm:$0xff]
        %v1991 = vld [vmem:[%s325 + $0xb1] sm:$0xff]
        %v1992 = vld [vmem:[%s325 + $0xb9] sm:$0xff]
        %v1993 = vld [vmem:[%s325 + $0xc1] sm:$0xff]
        %v1994 = vld [vmem:[%s325 + $0xc9] sm:$0xff]
        %v1995 = vld [vmem:[%s325 + $0xd1] sm:$0xff]
        %v1996 = vld [vmem:[%s325 + $0xd9] sm:$0xff]
        %v1997 = vld [vmem:[%s325 + $0xe1] sm:$0xff]
        %v1998 = vld [vmem:[%s325 + $0xe9] sm:$0xff]
        %v1999 = vld [vmem:[%s325 + $0xf1] sm:$0xff]
        %v2000 = vld [vmem:[%s325 + $0xf9] sm:$0xff]
        %v2001 = vld [vmem:[%s325 + $0x101] sm:$0xff]
        %v2002 = vld [vmem:[%s325 + $0x109] sm:$0xff]
        %v2003 = vld [vmem:[%s1 + $0x40] sm:$0xf]
        %v2004 = vld [vmem:[%s1 + $0x44] sm:$0xf]
        %v2005 = vld [vmem:[%s1 + $0x48] sm:$0xf]
        %v2006 = vld [vmem:[%s1 + $0x4c] sm:$0xf]
        %v2007 = vpack.c.bf16 %v1972, %v1971
        %v2008 = vpack.c.bf16 %v1974, %v1973
        %v2009 = vpack.c.bf16 %v1976, %v1975
        %v2010 = vpack.c.bf16 %v1978, %v1977
        %v2011 = vpack.c.bf16 %v1980, %v1979
        %v2012 = vpack.c.bf16 %v1982, %v1981
        %v2013 = vpack.c.bf16 %v1984, %v1983
        %v2014 = vpack.c.bf16 %v1986, %v1985
        %v2015 = vpack.c.bf16 %v1988, %v1987
        %v2016 = vpack.c.bf16 %v1990, %v1989
        %v2017 = vpack.c.bf16 %v1992, %v1991
        %v2018 = vpack.c.bf16 %v1994, %v1993
        %v2019 = vpack.c.bf16 %v1996, %v1995
        %v2020 = vpack.c.bf16 %v1998, %v1997
        %v2021 = vpack.c.bf16 %v2000, %v1999
        %v2022 = vpack.c.bf16 %v2002, %v2001
        %v2027 = vunpack.c.l.b16 %v2003
        %v2028 = vunpack.c.l.b16 %v2004
        %v2029 = vunpack.c.l.b16 %v2005
        %v2030 = vunpack.c.l.b16 %v2006
        %v2031 = vpack.c.b16 %v2028, %v2027
        %v2032 = vpack.c.b16 %v2030, %v2029
        %v2036 = vsel %vm1026, %v2007, 0
        %v2039 = vsel %vm1026, %v2008, 0
        %v2042 = vsel %vm1026, %v2009, 0
        %v2045 = vsel %vm1026, %v2010, 0
        %v2048 = vsel %vm1026, %v2011, 0
        %v2051 = vsel %vm1026, %v2012, 0
        %v2054 = vsel %vm1026, %v2013, 0
        %v2057 = vsel %vm1026, %v2014, 0
        %v2060 = vsel %vm1026, %v2015, 0
        %v2063 = vsel %vm1026, %v2016, 0
        %v2066 = vsel %vm1026, %v2017, 0
        %v2069 = vsel %vm1026, %v2018, 0
        %v2072 = vsel %vm1026, %v2019, 0
        %v2075 = vsel %vm1026, %v2020, 0
        %v2078 = vsel %vm1026, %v2021, 0
        %v2081 = vsel %vm1026, %v2022, 0
        %2083 = vmatpush.bf16.msra.mxu0 0
        %2084 = vmatpush.bf16.msra.mxu0 0
        %2085 = vmatpush.bf16.msra.mxu0 0
        %2086 = vmatpush.bf16.msra.mxu0 0
        %2087 = vmatpush.bf16.msra.mxu0 0
        %2088 = vmatpush.bf16.msra.mxu0 0
        %2089 = vmatpush.bf16.msra.mxu0 %v2032
        %2090 = vmatpush.bf16.msra.mxu0 %v2031
        %2091 = vmatmul.bf16.gmra.mxu0 %v2036
        %v2092 = vpop.f32.mrf.mxu0
        %v2093 = vadd.f32 0.0, %v2092
        %v2094 = vpop.f32.mrf.mxu0
        %v2095 = vadd.f32 0.0, %v2094
        %2096 = vmatmul.bf16.gmra.mxu0 %v2039
        %v2097 = vpop.f32.mrf.mxu0
        %v2098 = vadd.f32 0.0, %v2097
        %v2099 = vpop.f32.mrf.mxu0
        %v2100 = vadd.f32 0.0, %v2099
        %2101 = vmatmul.bf16.gmra.mxu0 %v2042
        %v2102 = vpop.f32.mrf.mxu0
        %v2103 = vadd.f32 0.0, %v2102
        %v2104 = vpop.f32.mrf.mxu0
        %v2105 = vadd.f32 0.0, %v2104
        %2106 = vmatmul.bf16.gmra.mxu0 %v2045
        %v2107 = vpop.f32.mrf.mxu0
        %v2108 = vadd.f32 0.0, %v2107
        %v2109 = vpop.f32.mrf.mxu0
        %v2110 = vadd.f32 0.0, %v2109
        %2111 = vmatmul.bf16.gmra.mxu0 %v2048
        %v2112 = vpop.f32.mrf.mxu0
        %v2113 = vadd.f32 0.0, %v2112
        %v2114 = vpop.f32.mrf.mxu0
        %v2115 = vadd.f32 0.0, %v2114
        %2116 = vmatmul.bf16.gmra.mxu0 %v2051
        %v2117 = vpop.f32.mrf.mxu0
        %v2118 = vadd.f32 0.0, %v2117
        %v2119 = vpop.f32.mrf.mxu0
        %v2120 = vadd.f32 0.0, %v2119
        %2121 = vmatmul.bf16.gmra.mxu0 %v2054
        %v2122 = vpop.f32.mrf.mxu0
        %v2123 = vadd.f32 0.0, %v2122
        %v2124 = vpop.f32.mrf.mxu0
        %v2125 = vadd.f32 0.0, %v2124
        %2126 = vmatmul.bf16.gmra.mxu0 %v2057
        %v2127 = vpop.f32.mrf.mxu0
        %v2128 = vadd.f32 0.0, %v2127
        %v2129 = vpop.f32.mrf.mxu0
        %v2130 = vadd.f32 0.0, %v2129
        %2131 = vmatmul.bf16.gmra.mxu0 %v2060
        %v2132 = vpop.f32.mrf.mxu0
        %v2133 = vadd.f32 0.0, %v2132
        %v2134 = vpop.f32.mrf.mxu0
        %v2135 = vadd.f32 0.0, %v2134
        %2136 = vmatmul.bf16.gmra.mxu0 %v2063
        %v2137 = vpop.f32.mrf.mxu0
        %v2138 = vadd.f32 0.0, %v2137
        %v2139 = vpop.f32.mrf.mxu0
        %v2140 = vadd.f32 0.0, %v2139
        %2141 = vmatmul.bf16.gmra.mxu0 %v2066
        %v2142 = vpop.f32.mrf.mxu0
        %v2143 = vadd.f32 0.0, %v2142
        %v2144 = vpop.f32.mrf.mxu0
        %v2145 = vadd.f32 0.0, %v2144
        %2146 = vmatmul.bf16.gmra.mxu0 %v2069
        %v2147 = vpop.f32.mrf.mxu0
        %v2148 = vadd.f32 0.0, %v2147
        %v2149 = vpop.f32.mrf.mxu0
        %v2150 = vadd.f32 0.0, %v2149
        %2151 = vmatmul.bf16.gmra.mxu0 %v2072
        %v2152 = vpop.f32.mrf.mxu0
        %v2153 = vadd.f32 0.0, %v2152
        %v2154 = vpop.f32.mrf.mxu0
        %v2155 = vadd.f32 0.0, %v2154
        %2156 = vmatmul.bf16.gmra.mxu0 %v2075
        %v2157 = vpop.f32.mrf.mxu0
        %v2158 = vadd.f32 0.0, %v2157
        %v2159 = vpop.f32.mrf.mxu0
        %v2160 = vadd.f32 0.0, %v2159
        %2161 = vmatmul.bf16.gmra.mxu0 %v2078
        %v2162 = vpop.f32.mrf.mxu0
        %v2163 = vadd.f32 0.0, %v2162
        %v2164 = vpop.f32.mrf.mxu0
        %v2165 = vadd.f32 0.0, %v2164
        %2166 = vmatmul.bf16.gmra.mxu0 %v2081
        %v2167 = vpop.f32.mrf.mxu0
        %v2168 = vadd.f32 0.0, %v2167
        %v2169 = vpop.f32.mrf.mxu0
        %v2170 = vadd.f32 0.0, %v2169
        %2171 = vdwg.mxu0
        %v2172 = vadd.f32 %v1939, %v2093
        %v2173 = vadd.f32 %v1940, %v2095
        %v2174 = vadd.f32 %v1941, %v2098
        %v2175 = vadd.f32 %v1942, %v2100
        %v2176 = vadd.f32 %v1943, %v2103
        %v2177 = vadd.f32 %v1944, %v2105
        %v2178 = vadd.f32 %v1945, %v2108
        %v2179 = vadd.f32 %v1946, %v2110
        %v2180 = vadd.f32 %v1947, %v2113
        %v2181 = vadd.f32 %v1948, %v2115
        %v2182 = vadd.f32 %v1949, %v2118
        %v2183 = vadd.f32 %v1950, %v2120
        %v2184 = vadd.f32 %v1951, %v2123
        %v2185 = vadd.f32 %v1952, %v2125
        %v2186 = vadd.f32 %v1953, %v2128
        %v2187 = vadd.f32 %v1954, %v2130
        %v2188 = vadd.f32 %v1955, %v2133
        %v2189 = vadd.f32 %v1956, %v2135
        %v2190 = vadd.f32 %v1957, %v2138
        %v2191 = vadd.f32 %v1958, %v2140
        %v2192 = vadd.f32 %v1959, %v2143
        %v2193 = vadd.f32 %v1960, %v2145
        %v2194 = vadd.f32 %v1961, %v2148
        %v2195 = vadd.f32 %v1962, %v2150
        %v2196 = vadd.f32 %v1963, %v2153
        %v2197 = vadd.f32 %v1964, %v2155
        %v2198 = vadd.f32 %v1965, %v2158
        %v2199 = vadd.f32 %v1966, %v2160
        %v2200 = vadd.f32 %v1967, %v2163
        %v2201 = vadd.f32 %v1968, %v2165
        %v2202 = vadd.f32 %v1969, %v2168
        %v2203 = vadd.f32 %v1970, %v2170
        %v2204 = vld [vmem:[%s325 + $0x12] sm:$0xff]
        %v2205 = vld [vmem:[%s325 + $0x1a] sm:$0xff]
        %v2206 = vld [vmem:[%s325 + $0x22] sm:$0xff]
        %v2207 = vld [vmem:[%s325 + $0x2a] sm:$0xff]
        %v2208 = vld [vmem:[%s325 + $0x32] sm:$0xff]
        %v2209 = vld [vmem:[%s325 + $0x3a] sm:$0xff]
        %v2210 = vld [vmem:[%s325 + $0x42] sm:$0xff]
        %v2211 = vld [vmem:[%s325 + $0x4a] sm:$0xff]
        %v2212 = vld [vmem:[%s325 + $0x52] sm:$0xff]
        %v2213 = vld [vmem:[%s325 + $0x5a] sm:$0xff]
        %v2214 = vld [vmem:[%s325 + $0x62] sm:$0xff]
        %v2215 = vld [vmem:[%s325 + $0x6a] sm:$0xff]
        %v2216 = vld [vmem:[%s325 + $0x72] sm:$0xff]
        %v2217 = vld [vmem:[%s325 + $0x7a] sm:$0xff]
        %v2218 = vld [vmem:[%s325 + $0x82] sm:$0xff]
        %v2219 = vld [vmem:[%s325 + $0x8a] sm:$0xff]
        %v2220 = vld [vmem:[%s325 + $0x92] sm:$0xff]
        %v2221 = vld [vmem:[%s325 + $0x9a] sm:$0xff]
        %v2222 = vld [vmem:[%s325 + $0xa2] sm:$0xff]
        %v2223 = vld [vmem:[%s325 + $0xaa] sm:$0xff]
        %v2224 = vld [vmem:[%s325 + $0xb2] sm:$0xff]
        %v2225 = vld [vmem:[%s325 + $0xba] sm:$0xff]
        %v2226 = vld [vmem:[%s325 + $0xc2] sm:$0xff]
        %v2227 = vld [vmem:[%s325 + $0xca] sm:$0xff]
        %v2228 = vld [vmem:[%s325 + $0xd2] sm:$0xff]
        %v2229 = vld [vmem:[%s325 + $0xda] sm:$0xff]
        %v2230 = vld [vmem:[%s325 + $0xe2] sm:$0xff]
        %v2231 = vld [vmem:[%s325 + $0xea] sm:$0xff]
        %v2232 = vld [vmem:[%s325 + $0xf2] sm:$0xff]
        %v2233 = vld [vmem:[%s325 + $0xfa] sm:$0xff]
        %v2234 = vld [vmem:[%s325 + $0x102] sm:$0xff]
        %v2235 = vld [vmem:[%s325 + $0x10a] sm:$0xff]
        %v2236 = vsel %vm1441, %v2204, 0.0
        %v2237 = vsel %vm1442, %v2205, 0.0
        %v2238 = vsel %vm1443, %v2206, 0.0
        %v2239 = vsel %vm1444, %v2207, 0.0
        %v2240 = vsel %vm1445, %v2208, 0.0
        %v2241 = vsel %vm1446, %v2209, 0.0
        %v2242 = vsel %vm1447, %v2210, 0.0
        %v2243 = vsel %vm1448, %v2211, 0.0
        %v2244 = vsel %vm1449, %v2212, 0.0
        %v2245 = vsel %vm1450, %v2213, 0.0
        %v2246 = vsel %vm1451, %v2214, 0.0
        %v2247 = vsel %vm1452, %v2215, 0.0
        %v2248 = vsel %vm1453, %v2216, 0.0
        %v2249 = vsel %vm1454, %v2217, 0.0
        %v2250 = vsel %vm1455, %v2218, 0.0
        %v2251 = vsel %vm1456, %v2219, 0.0
        %v2252 = vsel %vm1457, %v2220, 0.0
        %v2253 = vsel %vm1458, %v2221, 0.0
        %v2254 = vsel %vm1459, %v2222, 0.0
        %v2255 = vsel %vm1460, %v2223, 0.0
        %v2256 = vsel %vm1461, %v2224, 0.0
        %v2257 = vsel %vm1462, %v2225, 0.0
        %v2258 = vsel %vm1463, %v2226, 0.0
        %v2259 = vsel %vm1464, %v2227, 0.0
        %v2260 = vsel %vm1465, %v2228, 0.0
        %v2261 = vsel %vm1466, %v2229, 0.0
        %v2262 = vsel %vm1467, %v2230, 0.0
        %v2263 = vsel %vm1468, %v2231, 0.0
        %v2264 = vsel %vm1469, %v2232, 0.0
        %v2265 = vsel %vm1470, %v2233, 0.0
        %v2266 = vsel %vm1471, %v2234, 0.0
        %v2267 = vsel %vm1472, %v2235, 0.0
        %v2268 = vld [vmem:[%s1 + $0x50] sm:$0xf]
        %v2269 = vld [vmem:[%s1 + $0x54] sm:$0xf]
        %v2270 = vld [vmem:[%s1 + $0x58] sm:$0xf]
        %v2271 = vld [vmem:[%s1 + $0x5c] sm:$0xf]
        %v2272 = vpack.c.bf16 %v2237, %v2236
        %v2273 = vpack.c.bf16 %v2239, %v2238
        %v2274 = vpack.c.bf16 %v2241, %v2240
        %v2275 = vpack.c.bf16 %v2243, %v2242
        %v2276 = vpack.c.bf16 %v2245, %v2244
        %v2277 = vpack.c.bf16 %v2247, %v2246
        %v2278 = vpack.c.bf16 %v2249, %v2248
        %v2279 = vpack.c.bf16 %v2251, %v2250
        %v2280 = vpack.c.bf16 %v2253, %v2252
        %v2281 = vpack.c.bf16 %v2255, %v2254
        %v2282 = vpack.c.bf16 %v2257, %v2256
        %v2283 = vpack.c.bf16 %v2259, %v2258
        %v2284 = vpack.c.bf16 %v2261, %v2260
        %v2285 = vpack.c.bf16 %v2263, %v2262
        %v2286 = vpack.c.bf16 %v2265, %v2264
        %v2287 = vpack.c.bf16 %v2267, %v2266
        %v2292 = vunpack.c.l.b16 %v2268
        %v2293 = vunpack.c.l.b16 %v2269
        %v2294 = vunpack.c.l.b16 %v2270
        %v2295 = vunpack.c.l.b16 %v2271
        %v2296 = vpack.c.b16 %v2293, %v2292
        %v2297 = vpack.c.b16 %v2295, %v2294
        %v2301 = vsel %vm1026, %v2272, 0
        %v2304 = vsel %vm1026, %v2273, 0
        %v2307 = vsel %vm1026, %v2274, 0
        %v2310 = vsel %vm1026, %v2275, 0
        %v2313 = vsel %vm1026, %v2276, 0
        %v2316 = vsel %vm1026, %v2277, 0
        %v2319 = vsel %vm1026, %v2278, 0
        %v2322 = vsel %vm1026, %v2279, 0
        %v2325 = vsel %vm1026, %v2280, 0
        %v2328 = vsel %vm1026, %v2281, 0
        %v2331 = vsel %vm1026, %v2282, 0
        %v2334 = vsel %vm1026, %v2283, 0
        %v2337 = vsel %vm1026, %v2284, 0
        %v2340 = vsel %vm1026, %v2285, 0
        %v2343 = vsel %vm1026, %v2286, 0
        %v2346 = vsel %vm1026, %v2287, 0
        %2348 = vmatpush.bf16.msra.mxu0 0
        %2349 = vmatpush.bf16.msra.mxu0 0
        %2350 = vmatpush.bf16.msra.mxu0 0
        %2351 = vmatpush.bf16.msra.mxu0 0
        %2352 = vmatpush.bf16.msra.mxu0 0
        %2353 = vmatpush.bf16.msra.mxu0 0
        %2354 = vmatpush.bf16.msra.mxu0 %v2297
        %2355 = vmatpush.bf16.msra.mxu0 %v2296
        %2356 = vmatmul.bf16.gmra.mxu0 %v2301
        %v2357 = vpop.f32.mrf.mxu0
        %v2358 = vadd.f32 0.0, %v2357
        %v2359 = vpop.f32.mrf.mxu0
        %v2360 = vadd.f32 0.0, %v2359
        %2361 = vmatmul.bf16.gmra.mxu0 %v2304
        %v2362 = vpop.f32.mrf.mxu0
        %v2363 = vadd.f32 0.0, %v2362
        %v2364 = vpop.f32.mrf.mxu0
        %v2365 = vadd.f32 0.0, %v2364
        %2366 = vmatmul.bf16.gmra.mxu0 %v2307
        %v2367 = vpop.f32.mrf.mxu0
        %v2368 = vadd.f32 0.0, %v2367
        %v2369 = vpop.f32.mrf.mxu0
        %v2370 = vadd.f32 0.0, %v2369
        %2371 = vmatmul.bf16.gmra.mxu0 %v2310
        %v2372 = vpop.f32.mrf.mxu0
        %v2373 = vadd.f32 0.0, %v2372
        %v2374 = vpop.f32.mrf.mxu0
        %v2375 = vadd.f32 0.0, %v2374
        %2376 = vmatmul.bf16.gmra.mxu0 %v2313
        %v2377 = vpop.f32.mrf.mxu0
        %v2378 = vadd.f32 0.0, %v2377
        %v2379 = vpop.f32.mrf.mxu0
        %v2380 = vadd.f32 0.0, %v2379
        %2381 = vmatmul.bf16.gmra.mxu0 %v2316
        %v2382 = vpop.f32.mrf.mxu0
        %v2383 = vadd.f32 0.0, %v2382
        %v2384 = vpop.f32.mrf.mxu0
        %v2385 = vadd.f32 0.0, %v2384
        %2386 = vmatmul.bf16.gmra.mxu0 %v2319
        %v2387 = vpop.f32.mrf.mxu0
        %v2388 = vadd.f32 0.0, %v2387
        %v2389 = vpop.f32.mrf.mxu0
        %v2390 = vadd.f32 0.0, %v2389
        %2391 = vmatmul.bf16.gmra.mxu0 %v2322
        %v2392 = vpop.f32.mrf.mxu0
        %v2393 = vadd.f32 0.0, %v2392
        %v2394 = vpop.f32.mrf.mxu0
        %v2395 = vadd.f32 0.0, %v2394
        %2396 = vmatmul.bf16.gmra.mxu0 %v2325
        %v2397 = vpop.f32.mrf.mxu0
        %v2398 = vadd.f32 0.0, %v2397
        %v2399 = vpop.f32.mrf.mxu0
        %v2400 = vadd.f32 0.0, %v2399
        %2401 = vmatmul.bf16.gmra.mxu0 %v2328
        %v2402 = vpop.f32.mrf.mxu0
        %v2403 = vadd.f32 0.0, %v2402
        %v2404 = vpop.f32.mrf.mxu0
        %v2405 = vadd.f32 0.0, %v2404
        %2406 = vmatmul.bf16.gmra.mxu0 %v2331
        %v2407 = vpop.f32.mrf.mxu0
        %v2408 = vadd.f32 0.0, %v2407
        %v2409 = vpop.f32.mrf.mxu0
        %v2410 = vadd.f32 0.0, %v2409
        %2411 = vmatmul.bf16.gmra.mxu0 %v2334
        %v2412 = vpop.f32.mrf.mxu0
        %v2413 = vadd.f32 0.0, %v2412
        %v2414 = vpop.f32.mrf.mxu0
        %v2415 = vadd.f32 0.0, %v2414
        %2416 = vmatmul.bf16.gmra.mxu0 %v2337
        %v2417 = vpop.f32.mrf.mxu0
        %v2418 = vadd.f32 0.0, %v2417
        %v2419 = vpop.f32.mrf.mxu0
        %v2420 = vadd.f32 0.0, %v2419
        %2421 = vmatmul.bf16.gmra.mxu0 %v2340
        %v2422 = vpop.f32.mrf.mxu0
        %v2423 = vadd.f32 0.0, %v2422
        %v2424 = vpop.f32.mrf.mxu0
        %v2425 = vadd.f32 0.0, %v2424
        %2426 = vmatmul.bf16.gmra.mxu0 %v2343
        %v2427 = vpop.f32.mrf.mxu0
        %v2428 = vadd.f32 0.0, %v2427
        %v2429 = vpop.f32.mrf.mxu0
        %v2430 = vadd.f32 0.0, %v2429
        %2431 = vmatmul.bf16.gmra.mxu0 %v2346
        %v2432 = vpop.f32.mrf.mxu0
        %v2433 = vadd.f32 0.0, %v2432
        %v2434 = vpop.f32.mrf.mxu0
        %v2435 = vadd.f32 0.0, %v2434
        %2436 = vdwg.mxu0
        %v2437 = vadd.f32 %v2172, %v2358
        %v2438 = vadd.f32 %v2173, %v2360
        %v2439 = vadd.f32 %v2174, %v2363
        %v2440 = vadd.f32 %v2175, %v2365
        %v2441 = vadd.f32 %v2176, %v2368
        %v2442 = vadd.f32 %v2177, %v2370
        %v2443 = vadd.f32 %v2178, %v2373
        %v2444 = vadd.f32 %v2179, %v2375
        %v2445 = vadd.f32 %v2180, %v2378
        %v2446 = vadd.f32 %v2181, %v2380
        %v2447 = vadd.f32 %v2182, %v2383
        %v2448 = vadd.f32 %v2183, %v2385
        %v2449 = vadd.f32 %v2184, %v2388
        %v2450 = vadd.f32 %v2185, %v2390
        %v2451 = vadd.f32 %v2186, %v2393
        %v2452 = vadd.f32 %v2187, %v2395
        %v2453 = vadd.f32 %v2188, %v2398
        %v2454 = vadd.f32 %v2189, %v2400
        %v2455 = vadd.f32 %v2190, %v2403
        %v2456 = vadd.f32 %v2191, %v2405
        %v2457 = vadd.f32 %v2192, %v2408
        %v2458 = vadd.f32 %v2193, %v2410
        %v2459 = vadd.f32 %v2194, %v2413
        %v2460 = vadd.f32 %v2195, %v2415
        %v2461 = vadd.f32 %v2196, %v2418
        %v2462 = vadd.f32 %v2197, %v2420
        %v2463 = vadd.f32 %v2198, %v2423
        %v2464 = vadd.f32 %v2199, %v2425
        %v2465 = vadd.f32 %v2200, %v2428
        %v2466 = vadd.f32 %v2201, %v2430
        %v2467 = vadd.f32 %v2202, %v2433
        %v2468 = vadd.f32 %v2203, %v2435
        %v2469 = vld [vmem:[%s325 + $0x20] sm:$0xff]
        %v2470 = vld [vmem:[%s325 + $0x28] sm:$0xff]
        %v2471 = vld [vmem:[%s325 + $0x30] sm:$0xff]
        %v2472 = vld [vmem:[%s325 + $0x38] sm:$0xff]
        %v2473 = vld [vmem:[%s325 + $0x40] sm:$0xff]
        %v2474 = vld [vmem:[%s325 + $0x48] sm:$0xff]
        %v2475 = vld [vmem:[%s325 + $0x50] sm:$0xff]
        %v2476 = vld [vmem:[%s325 + $0x58] sm:$0xff]
        %v2477 = vld [vmem:[%s325 + $0x60] sm:$0xff]
        %v2478 = vld [vmem:[%s325 + $0x68] sm:$0xff]
        %v2479 = vld [vmem:[%s325 + $0x70] sm:$0xff]
        %v2480 = vld [vmem:[%s325 + $0x78] sm:$0xff]
        %v2481 = vld [vmem:[%s325 + $0x80] sm:$0xff]
        %v2482 = vld [vmem:[%s325 + $0x88] sm:$0xff]
        %v2483 = vld [vmem:[%s325 + $0x90] sm:$0xff]
        %v2484 = vld [vmem:[%s325 + $0x98] sm:$0xff]
        %v2485 = vld [vmem:[%s325 + $0xa0] sm:$0xff]
        %v2486 = vld [vmem:[%s325 + $0xa8] sm:$0xff]
        %v2487 = vld [vmem:[%s325 + $0xb0] sm:$0xff]
        %v2488 = vld [vmem:[%s325 + $0xb8] sm:$0xff]
        %v2489 = vld [vmem:[%s325 + $0xc0] sm:$0xff]
        %v2490 = vld [vmem:[%s325 + $0xc8] sm:$0xff]
        %v2491 = vld [vmem:[%s325 + $0xd0] sm:$0xff]
        %v2492 = vld [vmem:[%s325 + $0xd8] sm:$0xff]
        %v2493 = vld [vmem:[%s325 + $0xe0] sm:$0xff]
        %v2494 = vld [vmem:[%s325 + $0xe8] sm:$0xff]
        %v2495 = vld [vmem:[%s325 + $0xf0] sm:$0xff]
        %v2496 = vld [vmem:[%s325 + $0xf8] sm:$0xff]
        %v2497 = vld [vmem:[%s325 + $0x100] sm:$0xff]
        %v2498 = vld [vmem:[%s325 + $0x108] sm:$0xff]
        %v2499 = vld [vmem:[%s325 + $0x110] sm:$0xff]
        %v2500 = vld [vmem:[%s325 + $0x118] sm:$0xff]
        %v2501 = vsel %vm878, %v2469, 0.0
        %v2502 = vsel %vm879, %v2470, 0.0
        %v2503 = vsel %vm880, %v2471, 0.0
        %v2504 = vsel %vm881, %v2472, 0.0
        %v2505 = vsel %vm882, %v2473, 0.0
        %v2506 = vsel %vm883, %v2474, 0.0
        %v2507 = vsel %vm884, %v2475, 0.0
        %v2508 = vsel %vm885, %v2476, 0.0
        %v2509 = vsel %vm886, %v2477, 0.0
        %v2510 = vsel %vm887, %v2478, 0.0
        %v2511 = vsel %vm888, %v2479, 0.0
        %v2512 = vsel %vm889, %v2480, 0.0
        %v2513 = vsel %vm890, %v2481, 0.0
        %v2514 = vsel %vm891, %v2482, 0.0
        %v2515 = vsel %vm892, %v2483, 0.0
        %v2516 = vsel %vm893, %v2484, 0.0
        %v2517 = vsel %vm894, %v2485, 0.0
        %v2518 = vsel %vm895, %v2486, 0.0
        %v2519 = vsel %vm896, %v2487, 0.0
        %v2520 = vsel %vm897, %v2488, 0.0
        %v2521 = vsel %vm898, %v2489, 0.0
        %v2522 = vsel %vm899, %v2490, 0.0
        %v2523 = vsel %vm900, %v2491, 0.0
        %v2524 = vsel %vm901, %v2492, 0.0
        %v2525 = vsel %vm902, %v2493, 0.0
        %v2526 = vsel %vm903, %v2494, 0.0
        %v2527 = vsel %vm904, %v2495, 0.0
        %v2528 = vsel %vm905, %v2496, 0.0
        %v2529 = vsel %vm906, %v2497, 0.0
        %v2530 = vsel %vm907, %v2498, 0.0
        %v2531 = vsel %vm908, %v2499, 0.0
        %v2532 = vsel %vm909, %v2500, 0.0
        %v2533 = vld [vmem:[%s1 + $0x60] sm:$0xf]
        %v2534 = vld [vmem:[%s1 + $0x64] sm:$0xf]
        %v2535 = vld [vmem:[%s1 + $0x68] sm:$0xf]
        %v2536 = vld [vmem:[%s1 + $0x6c] sm:$0xf]
        %v2537 = vpack.c.bf16 %v2502, %v2501
        %v2538 = vpack.c.bf16 %v2504, %v2503
        %v2539 = vpack.c.bf16 %v2506, %v2505
        %v2540 = vpack.c.bf16 %v2508, %v2507
        %v2541 = vpack.c.bf16 %v2510, %v2509
        %v2542 = vpack.c.bf16 %v2512, %v2511
        %v2543 = vpack.c.bf16 %v2514, %v2513
        %v2544 = vpack.c.bf16 %v2516, %v2515
        %v2545 = vpack.c.bf16 %v2518, %v2517
        %v2546 = vpack.c.bf16 %v2520, %v2519
        %v2547 = vpack.c.bf16 %v2522, %v2521
        %v2548 = vpack.c.bf16 %v2524, %v2523
        %v2549 = vpack.c.bf16 %v2526, %v2525
        %v2550 = vpack.c.bf16 %v2528, %v2527
        %v2551 = vpack.c.bf16 %v2530, %v2529
        %v2552 = vpack.c.bf16 %v2532, %v2531
        %v2557 = vunpack.c.l.b16 %v2533
        %v2558 = vunpack.c.l.b16 %v2534
        %v2559 = vunpack.c.l.b16 %v2535
        %v2560 = vunpack.c.l.b16 %v2536
        %v2561 = vpack.c.b16 %v2558, %v2557
        %v2562 = vpack.c.b16 %v2560, %v2559
        %v2566 = vsel %vm1026, %v2537, 0
        %v2569 = vsel %vm1026, %v2538, 0
        %v2572 = vsel %vm1026, %v2539, 0
        %v2575 = vsel %vm1026, %v2540, 0
        %v2578 = vsel %vm1026, %v2541, 0
        %v2581 = vsel %vm1026, %v2542, 0
        %v2584 = vsel %vm1026, %v2543, 0
        %v2587 = vsel %vm1026, %v2544, 0
        %v2590 = vsel %vm1026, %v2545, 0
        %v2593 = vsel %vm1026, %v2546, 0
        %v2596 = vsel %vm1026, %v2547, 0
        %v2599 = vsel %vm1026, %v2548, 0
        %v2602 = vsel %vm1026, %v2549, 0
        %v2605 = vsel %vm1026, %v2550, 0
        %v2608 = vsel %vm1026, %v2551, 0
        %v2611 = vsel %vm1026, %v2552, 0
        %2613 = vmatpush.bf16.msra.mxu0 0
        %2614 = vmatpush.bf16.msra.mxu0 0
        %2615 = vmatpush.bf16.msra.mxu0 0
        %2616 = vmatpush.bf16.msra.mxu0 0
        %2617 = vmatpush.bf16.msra.mxu0 0
        %2618 = vmatpush.bf16.msra.mxu0 0
        %2619 = vmatpush.bf16.msra.mxu0 %v2562
        %2620 = vmatpush.bf16.msra.mxu0 %v2561
        %2621 = vmatmul.bf16.gmra.mxu0 %v2566
        %v2622 = vpop.f32.mrf.mxu0
        %v2623 = vadd.f32 0.0, %v2622
        %v2624 = vpop.f32.mrf.mxu0
        %v2625 = vadd.f32 0.0, %v2624
        %2626 = vmatmul.bf16.gmra.mxu0 %v2569
        %v2627 = vpop.f32.mrf.mxu0
        %v2628 = vadd.f32 0.0, %v2627
        %v2629 = vpop.f32.mrf.mxu0
        %v2630 = vadd.f32 0.0, %v2629
        %2631 = vmatmul.bf16.gmra.mxu0 %v2572
        %v2632 = vpop.f32.mrf.mxu0
        %v2633 = vadd.f32 0.0, %v2632
        %v2634 = vpop.f32.mrf.mxu0
        %v2635 = vadd.f32 0.0, %v2634
        %2636 = vmatmul.bf16.gmra.mxu0 %v2575
        %v2637 = vpop.f32.mrf.mxu0
        %v2638 = vadd.f32 0.0, %v2637
        %v2639 = vpop.f32.mrf.mxu0
        %v2640 = vadd.f32 0.0, %v2639
        %2641 = vmatmul.bf16.gmra.mxu0 %v2578
        %v2642 = vpop.f32.mrf.mxu0
        %v2643 = vadd.f32 0.0, %v2642
        %v2644 = vpop.f32.mrf.mxu0
        %v2645 = vadd.f32 0.0, %v2644
        %2646 = vmatmul.bf16.gmra.mxu0 %v2581
        %v2647 = vpop.f32.mrf.mxu0
        %v2648 = vadd.f32 0.0, %v2647
        %v2649 = vpop.f32.mrf.mxu0
        %v2650 = vadd.f32 0.0, %v2649
        %2651 = vmatmul.bf16.gmra.mxu0 %v2584
        %v2652 = vpop.f32.mrf.mxu0
        %v2653 = vadd.f32 0.0, %v2652
        %v2654 = vpop.f32.mrf.mxu0
        %v2655 = vadd.f32 0.0, %v2654
        %2656 = vmatmul.bf16.gmra.mxu0 %v2587
        %v2657 = vpop.f32.mrf.mxu0
        %v2658 = vadd.f32 0.0, %v2657
        %v2659 = vpop.f32.mrf.mxu0
        %v2660 = vadd.f32 0.0, %v2659
        %2661 = vmatmul.bf16.gmra.mxu0 %v2590
        %v2662 = vpop.f32.mrf.mxu0
        %v2663 = vadd.f32 0.0, %v2662
        %v2664 = vpop.f32.mrf.mxu0
        %v2665 = vadd.f32 0.0, %v2664
        %2666 = vmatmul.bf16.gmra.mxu0 %v2593
        %v2667 = vpop.f32.mrf.mxu0
        %v2668 = vadd.f32 0.0, %v2667
        %v2669 = vpop.f32.mrf.mxu0
        %v2670 = vadd.f32 0.0, %v2669
        %2671 = vmatmul.bf16.gmra.mxu0 %v2596
        %v2672 = vpop.f32.mrf.mxu0
        %v2673 = vadd.f32 0.0, %v2672
        %v2674 = vpop.f32.mrf.mxu0
        %v2675 = vadd.f32 0.0, %v2674
        %2676 = vmatmul.bf16.gmra.mxu0 %v2599
        %v2677 = vpop.f32.mrf.mxu0
        %v2678 = vadd.f32 0.0, %v2677
        %v2679 = vpop.f32.mrf.mxu0
        %v2680 = vadd.f32 0.0, %v2679
        %2681 = vmatmul.bf16.gmra.mxu0 %v2602
        %v2682 = vpop.f32.mrf.mxu0
        %v2683 = vadd.f32 0.0, %v2682
        %v2684 = vpop.f32.mrf.mxu0
        %v2685 = vadd.f32 0.0, %v2684
        %2686 = vmatmul.bf16.gmra.mxu0 %v2605
        %v2687 = vpop.f32.mrf.mxu0
        %v2688 = vadd.f32 0.0, %v2687
        %v2689 = vpop.f32.mrf.mxu0
        %v2690 = vadd.f32 0.0, %v2689
        %2691 = vmatmul.bf16.gmra.mxu0 %v2608
        %v2692 = vpop.f32.mrf.mxu0
        %v2693 = vadd.f32 0.0, %v2692
        %v2694 = vpop.f32.mrf.mxu0
        %v2695 = vadd.f32 0.0, %v2694
        %2696 = vmatmul.bf16.gmra.mxu0 %v2611
        %v2697 = vpop.f32.mrf.mxu0
        %v2698 = vadd.f32 0.0, %v2697
        %v2699 = vpop.f32.mrf.mxu0
        %v2700 = vadd.f32 0.0, %v2699
        %2701 = vdwg.mxu0
        %v2702 = vadd.f32 %v2437, %v2623
        %v2703 = vadd.f32 %v2438, %v2625
        %v2704 = vadd.f32 %v2439, %v2628
        %v2705 = vadd.f32 %v2440, %v2630
        %v2706 = vadd.f32 %v2441, %v2633
        %v2707 = vadd.f32 %v2442, %v2635
        %v2708 = vadd.f32 %v2443, %v2638
        %v2709 = vadd.f32 %v2444, %v2640
        %v2710 = vadd.f32 %v2445, %v2643
        %v2711 = vadd.f32 %v2446, %v2645
        %v2712 = vadd.f32 %v2447, %v2648
        %v2713 = vadd.f32 %v2448, %v2650
        %v2714 = vadd.f32 %v2449, %v2653
        %v2715 = vadd.f32 %v2450, %v2655
        %v2716 = vadd.f32 %v2451, %v2658
        %v2717 = vadd.f32 %v2452, %v2660
        %v2718 = vadd.f32 %v2453, %v2663
        %v2719 = vadd.f32 %v2454, %v2665
        %v2720 = vadd.f32 %v2455, %v2668
        %v2721 = vadd.f32 %v2456, %v2670
        %v2722 = vadd.f32 %v2457, %v2673
        %v2723 = vadd.f32 %v2458, %v2675
        %v2724 = vadd.f32 %v2459, %v2678
        %v2725 = vadd.f32 %v2460, %v2680
        %v2726 = vadd.f32 %v2461, %v2683
        %v2727 = vadd.f32 %v2462, %v2685
        %v2728 = vadd.f32 %v2463, %v2688
        %v2729 = vadd.f32 %v2464, %v2690
        %v2730 = vadd.f32 %v2465, %v2693
        %v2731 = vadd.f32 %v2466, %v2695
        %v2732 = vadd.f32 %v2467, %v2698
        %v2733 = vadd.f32 %v2468, %v2700
        %v2734 = vld [vmem:[%s325 + $0x21] sm:$0xff]
        %v2735 = vld [vmem:[%s325 + $0x29] sm:$0xff]
        %v2736 = vld [vmem:[%s325 + $0x31] sm:$0xff]
        %v2737 = vld [vmem:[%s325 + $0x39] sm:$0xff]
        %v2738 = vld [vmem:[%s325 + $0x41] sm:$0xff]
        %v2739 = vld [vmem:[%s325 + $0x49] sm:$0xff]
        %v2740 = vld [vmem:[%s325 + $0x51] sm:$0xff]
        %v2741 = vld [vmem:[%s325 + $0x59] sm:$0xff]
        %v2742 = vld [vmem:[%s325 + $0x61] sm:$0xff]
        %v2743 = vld [vmem:[%s325 + $0x69] sm:$0xff]
        %v2744 = vld [vmem:[%s325 + $0x71] sm:$0xff]
        %v2745 = vld [vmem:[%s325 + $0x79] sm:$0xff]
        %v2746 = vld [vmem:[%s325 + $0x81] sm:$0xff]
        %v2747 = vld [vmem:[%s325 + $0x89] sm:$0xff]
        %v2748 = vld [vmem:[%s325 + $0x91] sm:$0xff]
        %v2749 = vld [vmem:[%s325 + $0x99] sm:$0xff]
        %v2750 = vld [vmem:[%s325 + $0xa1] sm:$0xff]
        %v2751 = vld [vmem:[%s325 + $0xa9] sm:$0xff]
        %v2752 = vld [vmem:[%s325 + $0xb1] sm:$0xff]
        %v2753 = vld [vmem:[%s325 + $0xb9] sm:$0xff]
        %v2754 = vld [vmem:[%s325 + $0xc1] sm:$0xff]
        %v2755 = vld [vmem:[%s325 + $0xc9] sm:$0xff]
        %v2756 = vld [vmem:[%s325 + $0xd1] sm:$0xff]
        %v2757 = vld [vmem:[%s325 + $0xd9] sm:$0xff]
        %v2758 = vld [vmem:[%s325 + $0xe1] sm:$0xff]
        %v2759 = vld [vmem:[%s325 + $0xe9] sm:$0xff]
        %v2760 = vld [vmem:[%s325 + $0xf1] sm:$0xff]
        %v2761 = vld [vmem:[%s325 + $0xf9] sm:$0xff]
        %v2762 = vld [vmem:[%s325 + $0x101] sm:$0xff]
        %v2763 = vld [vmem:[%s325 + $0x109] sm:$0xff]
        %v2764 = vld [vmem:[%s325 + $0x111] sm:$0xff]
        %v2765 = vld [vmem:[%s325 + $0x119] sm:$0xff]
        %v2766 = vld [vmem:[%s1 + $0x70] sm:$0xf]
        %v2767 = vld [vmem:[%s1 + $0x74] sm:$0xf]
        %v2768 = vld [vmem:[%s1 + $0x78] sm:$0xf]
        %v2769 = vld [vmem:[%s1 + $0x7c] sm:$0xf]
        %v2770 = vpack.c.bf16 %v2735, %v2734
        %v2771 = vpack.c.bf16 %v2737, %v2736
        %v2772 = vpack.c.bf16 %v2739, %v2738
        %v2773 = vpack.c.bf16 %v2741, %v2740
        %v2774 = vpack.c.bf16 %v2743, %v2742
        %v2775 = vpack.c.bf16 %v2745, %v2744
        %v2776 = vpack.c.bf16 %v2747, %v2746
        %v2777 = vpack.c.bf16 %v2749, %v2748
        %v2778 = vpack.c.bf16 %v2751, %v2750
        %v2779 = vpack.c.bf16 %v2753, %v2752
        %v2780 = vpack.c.bf16 %v2755, %v2754
        %v2781 = vpack.c.bf16 %v2757, %v2756
        %v2782 = vpack.c.bf16 %v2759, %v2758
        %v2783 = vpack.c.bf16 %v2761, %v2760
        %v2784 = vpack.c.bf16 %v2763, %v2762
        %v2785 = vpack.c.bf16 %v2765, %v2764
        %v2790 = vunpack.c.l.b16 %v2766
        %v2791 = vunpack.c.l.b16 %v2767
        %v2792 = vunpack.c.l.b16 %v2768
        %v2793 = vunpack.c.l.b16 %v2769
        %v2794 = vpack.c.b16 %v2791, %v2790
        %v2795 = vpack.c.b16 %v2793, %v2792
        %v2799 = vsel %vm1026, %v2770, 0
        %v2802 = vsel %vm1026, %v2771, 0
        %v2805 = vsel %vm1026, %v2772, 0
        %v2808 = vsel %vm1026, %v2773, 0
        %v2811 = vsel %vm1026, %v2774, 0
        %v2814 = vsel %vm1026, %v2775, 0
        %v2817 = vsel %vm1026, %v2776, 0
        %v2820 = vsel %vm1026, %v2777, 0
        %v2823 = vsel %vm1026, %v2778, 0
        %v2826 = vsel %vm1026, %v2779, 0
        %v2829 = vsel %vm1026, %v2780, 0
        %v2832 = vsel %vm1026, %v2781, 0
        %v2835 = vsel %vm1026, %v2782, 0
        %v2838 = vsel %vm1026, %v2783, 0
        %v2841 = vsel %vm1026, %v2784, 0
        %v2844 = vsel %vm1026, %v2785, 0
        %2846 = vmatpush.bf16.msra.mxu0 0
        %2847 = vmatpush.bf16.msra.mxu0 0
        %2848 = vmatpush.bf16.msra.mxu0 0
        %2849 = vmatpush.bf16.msra.mxu0 0
        %2850 = vmatpush.bf16.msra.mxu0 0
        %2851 = vmatpush.bf16.msra.mxu0 0
        %2852 = vmatpush.bf16.msra.mxu0 %v2795
        %2853 = vmatpush.bf16.msra.mxu0 %v2794
        %2854 = vmatmul.bf16.gmra.mxu0 %v2799
        %v2855 = vpop.f32.mrf.mxu0
        %v2856 = vadd.f32 0.0, %v2855
        %v2857 = vpop.f32.mrf.mxu0
        %v2858 = vadd.f32 0.0, %v2857
        %2859 = vmatmul.bf16.gmra.mxu0 %v2802
        %v2860 = vpop.f32.mrf.mxu0
        %v2861 = vadd.f32 0.0, %v2860
        %v2862 = vpop.f32.mrf.mxu0
        %v2863 = vadd.f32 0.0, %v2862
        %2864 = vmatmul.bf16.gmra.mxu0 %v2805
        %v2865 = vpop.f32.mrf.mxu0
        %v2866 = vadd.f32 0.0, %v2865
        %v2867 = vpop.f32.mrf.mxu0
        %v2868 = vadd.f32 0.0, %v2867
        %2869 = vmatmul.bf16.gmra.mxu0 %v2808
        %v2870 = vpop.f32.mrf.mxu0
        %v2871 = vadd.f32 0.0, %v2870
        %v2872 = vpop.f32.mrf.mxu0
        %v2873 = vadd.f32 0.0, %v2872
        %2874 = vmatmul.bf16.gmra.mxu0 %v2811
        %v2875 = vpop.f32.mrf.mxu0
        %v2876 = vadd.f32 0.0, %v2875
        %v2877 = vpop.f32.mrf.mxu0
        %v2878 = vadd.f32 0.0, %v2877
        %2879 = vmatmul.bf16.gmra.mxu0 %v2814
        %v2880 = vpop.f32.mrf.mxu0
        %v2881 = vadd.f32 0.0, %v2880
        %v2882 = vpop.f32.mrf.mxu0
        %v2883 = vadd.f32 0.0, %v2882
        %2884 = vmatmul.bf16.gmra.mxu0 %v2817
        %v2885 = vpop.f32.mrf.mxu0
        %v2886 = vadd.f32 0.0, %v2885
        %v2887 = vpop.f32.mrf.mxu0
        %v2888 = vadd.f32 0.0, %v2887
        %2889 = vmatmul.bf16.gmra.mxu0 %v2820
        %v2890 = vpop.f32.mrf.mxu0
        %v2891 = vadd.f32 0.0, %v2890
        %v2892 = vpop.f32.mrf.mxu0
        %v2893 = vadd.f32 0.0, %v2892
        %2894 = vmatmul.bf16.gmra.mxu0 %v2823
        %v2895 = vpop.f32.mrf.mxu0
        %v2896 = vadd.f32 0.0, %v2895
        %v2897 = vpop.f32.mrf.mxu0
        %v2898 = vadd.f32 0.0, %v2897
        %2899 = vmatmul.bf16.gmra.mxu0 %v2826
        %v2900 = vpop.f32.mrf.mxu0
        %v2901 = vadd.f32 0.0, %v2900
        %v2902 = vpop.f32.mrf.mxu0
        %v2903 = vadd.f32 0.0, %v2902
        %2904 = vmatmul.bf16.gmra.mxu0 %v2829
        %v2905 = vpop.f32.mrf.mxu0
        %v2906 = vadd.f32 0.0, %v2905
        %v2907 = vpop.f32.mrf.mxu0
        %v2908 = vadd.f32 0.0, %v2907
        %2909 = vmatmul.bf16.gmra.mxu0 %v2832
        %v2910 = vpop.f32.mrf.mxu0
        %v2911 = vadd.f32 0.0, %v2910
        %v2912 = vpop.f32.mrf.mxu0
        %v2913 = vadd.f32 0.0, %v2912
        %2914 = vmatmul.bf16.gmra.mxu0 %v2835
        %v2915 = vpop.f32.mrf.mxu0
        %v2916 = vadd.f32 0.0, %v2915
        %v2917 = vpop.f32.mrf.mxu0
        %v2918 = vadd.f32 0.0, %v2917
        %2919 = vmatmul.bf16.gmra.mxu0 %v2838
        %v2920 = vpop.f32.mrf.mxu0
        %v2921 = vadd.f32 0.0, %v2920
        %v2922 = vpop.f32.mrf.mxu0
        %v2923 = vadd.f32 0.0, %v2922
        %2924 = vmatmul.bf16.gmra.mxu0 %v2841
        %v2925 = vpop.f32.mrf.mxu0
        %v2926 = vadd.f32 0.0, %v2925
        %v2927 = vpop.f32.mrf.mxu0
        %v2928 = vadd.f32 0.0, %v2927
        %2929 = vmatmul.bf16.gmra.mxu0 %v2844
        %v2930 = vpop.f32.mrf.mxu0
        %v2931 = vadd.f32 0.0, %v2930
        %v2932 = vpop.f32.mrf.mxu0
        %v2933 = vadd.f32 0.0, %v2932
        %2934 = vdwg.mxu0
        %v2935 = vadd.f32 %v2702, %v2856
        %v2936 = vadd.f32 %v2703, %v2858
        %v2937 = vadd.f32 %v2704, %v2861
        %v2938 = vadd.f32 %v2705, %v2863
        %v2939 = vadd.f32 %v2706, %v2866
        %v2940 = vadd.f32 %v2707, %v2868
        %v2941 = vadd.f32 %v2708, %v2871
        %v2942 = vadd.f32 %v2709, %v2873
        %v2943 = vadd.f32 %v2710, %v2876
        %v2944 = vadd.f32 %v2711, %v2878
        %v2945 = vadd.f32 %v2712, %v2881
        %v2946 = vadd.f32 %v2713, %v2883
        %v2947 = vadd.f32 %v2714, %v2886
        %v2948 = vadd.f32 %v2715, %v2888
        %v2949 = vadd.f32 %v2716, %v2891
        %v2950 = vadd.f32 %v2717, %v2893
        %v2951 = vadd.f32 %v2718, %v2896
        %v2952 = vadd.f32 %v2719, %v2898
        %v2953 = vadd.f32 %v2720, %v2901
        %v2954 = vadd.f32 %v2721, %v2903
        %v2955 = vadd.f32 %v2722, %v2906
        %v2956 = vadd.f32 %v2723, %v2908
        %v2957 = vadd.f32 %v2724, %v2911
        %v2958 = vadd.f32 %v2725, %v2913
        %v2959 = vadd.f32 %v2726, %v2916
        %v2960 = vadd.f32 %v2727, %v2918
        %v2961 = vadd.f32 %v2728, %v2921
        %v2962 = vadd.f32 %v2729, %v2923
        %v2963 = vadd.f32 %v2730, %v2926
        %v2964 = vadd.f32 %v2731, %v2928
        %v2965 = vadd.f32 %v2732, %v2931
        %v2966 = vadd.f32 %v2733, %v2933
        %v2967 = vld [vmem:[%s325 + $0x22] sm:$0xff]
        %v2968 = vld [vmem:[%s325 + $0x2a] sm:$0xff]
        %v2969 = vld [vmem:[%s325 + $0x32] sm:$0xff]
        %v2970 = vld [vmem:[%s325 + $0x3a] sm:$0xff]
        %v2971 = vld [vmem:[%s325 + $0x42] sm:$0xff]
        %v2972 = vld [vmem:[%s325 + $0x4a] sm:$0xff]
        %v2973 = vld [vmem:[%s325 + $0x52] sm:$0xff]
        %v2974 = vld [vmem:[%s325 + $0x5a] sm:$0xff]
        %v2975 = vld [vmem:[%s325 + $0x62] sm:$0xff]
        %v2976 = vld [vmem:[%s325 + $0x6a] sm:$0xff]
        %v2977 = vld [vmem:[%s325 + $0x72] sm:$0xff]
        %v2978 = vld [vmem:[%s325 + $0x7a] sm:$0xff]
        %v2979 = vld [vmem:[%s325 + $0x82] sm:$0xff]
        %v2980 = vld [vmem:[%s325 + $0x8a] sm:$0xff]
        %v2981 = vld [vmem:[%s325 + $0x92] sm:$0xff]
        %v2982 = vld [vmem:[%s325 + $0x9a] sm:$0xff]
        %v2983 = vld [vmem:[%s325 + $0xa2] sm:$0xff]
        %v2984 = vld [vmem:[%s325 + $0xaa] sm:$0xff]
        %v2985 = vld [vmem:[%s325 + $0xb2] sm:$0xff]
        %v2986 = vld [vmem:[%s325 + $0xba] sm:$0xff]
        %v2987 = vld [vmem:[%s325 + $0xc2] sm:$0xff]
        %v2988 = vld [vmem:[%s325 + $0xca] sm:$0xff]
        %v2989 = vld [vmem:[%s325 + $0xd2] sm:$0xff]
        %v2990 = vld [vmem:[%s325 + $0xda] sm:$0xff]
        %v2991 = vld [vmem:[%s325 + $0xe2] sm:$0xff]
        %v2992 = vld [vmem:[%s325 + $0xea] sm:$0xff]
        %v2993 = vld [vmem:[%s325 + $0xf2] sm:$0xff]
        %v2994 = vld [vmem:[%s325 + $0xfa] sm:$0xff]
        %v2995 = vld [vmem:[%s325 + $0x102] sm:$0xff]
        %v2996 = vld [vmem:[%s325 + $0x10a] sm:$0xff]
        %v2997 = vld [vmem:[%s325 + $0x112] sm:$0xff]
        %v2998 = vld [vmem:[%s325 + $0x11a] sm:$0xff]
        %v2999 = vsel %vm1441, %v2967, 0.0
        %v3000 = vsel %vm1442, %v2968, 0.0
        %v3001 = vsel %vm1443, %v2969, 0.0
        %v3002 = vsel %vm1444, %v2970, 0.0
        %v3003 = vsel %vm1445, %v2971, 0.0
        %v3004 = vsel %vm1446, %v2972, 0.0
        %v3005 = vsel %vm1447, %v2973, 0.0
        %v3006 = vsel %vm1448, %v2974, 0.0
        %v3007 = vsel %vm1449, %v2975, 0.0
        %v3008 = vsel %vm1450, %v2976, 0.0
        %v3009 = vsel %vm1451, %v2977, 0.0
        %v3010 = vsel %vm1452, %v2978, 0.0
        %v3011 = vsel %vm1453, %v2979, 0.0
        %v3012 = vsel %vm1454, %v2980, 0.0
        %v3013 = vsel %vm1455, %v2981, 0.0
        %v3014 = vsel %vm1456, %v2982, 0.0
        %v3015 = vsel %vm1457, %v2983, 0.0
        %v3016 = vsel %vm1458, %v2984, 0.0
        %v3017 = vsel %vm1459, %v2985, 0.0
        %v3018 = vsel %vm1460, %v2986, 0.0
        %v3019 = vsel %vm1461, %v2987, 0.0
        %v3020 = vsel %vm1462, %v2988, 0.0
        %v3021 = vsel %vm1463, %v2989, 0.0
        %v3022 = vsel %vm1464, %v2990, 0.0
        %v3023 = vsel %vm1465, %v2991, 0.0
        %v3024 = vsel %vm1466, %v2992, 0.0
        %v3025 = vsel %vm1467, %v2993, 0.0
        %v3026 = vsel %vm1468, %v2994, 0.0
        %v3027 = vsel %vm1469, %v2995, 0.0
        %v3028 = vsel %vm1470, %v2996, 0.0
        %v3029 = vsel %vm1471, %v2997, 0.0
        %v3030 = vsel %vm1472, %v2998, 0.0
        %v3031 = vld [vmem:[%s1 + $0x80] sm:$0xf]
        %v3032 = vld [vmem:[%s1 + $0x84] sm:$0xf]
        %v3033 = vld [vmem:[%s1 + $0x88] sm:$0xf]
        %v3034 = vld [vmem:[%s1 + $0x8c] sm:$0xf]
        %v3035 = vpack.c.bf16 %v3000, %v2999
        %v3036 = vpack.c.bf16 %v3002, %v3001
        %v3037 = vpack.c.bf16 %v3004, %v3003
        %v3038 = vpack.c.bf16 %v3006, %v3005
        %v3039 = vpack.c.bf16 %v3008, %v3007
        %v3040 = vpack.c.bf16 %v3010, %v3009
        %v3041 = vpack.c.bf16 %v3012, %v3011
        %v3042 = vpack.c.bf16 %v3014, %v3013
        %v3043 = vpack.c.bf16 %v3016, %v3015
        %v3044 = vpack.c.bf16 %v3018, %v3017
        %v3045 = vpack.c.bf16 %v3020, %v3019
        %v3046 = vpack.c.bf16 %v3022, %v3021
        %v3047 = vpack.c.bf16 %v3024, %v3023
        %v3048 = vpack.c.bf16 %v3026, %v3025
        %v3049 = vpack.c.bf16 %v3028, %v3027
        %v3050 = vpack.c.bf16 %v3030, %v3029
        %v3055 = vunpack.c.l.b16 %v3031
        %v3056 = vunpack.c.l.b16 %v3032
        %v3057 = vunpack.c.l.b16 %v3033
        %v3058 = vunpack.c.l.b16 %v3034
        %v3059 = vpack.c.b16 %v3056, %v3055
        %v3060 = vpack.c.b16 %v3058, %v3057
        %v3064 = vsel %vm1026, %v3035, 0
        %v3067 = vsel %vm1026, %v3036, 0
        %v3070 = vsel %vm1026, %v3037, 0
        %v3073 = vsel %vm1026, %v3038, 0
        %v3076 = vsel %vm1026, %v3039, 0
        %v3079 = vsel %vm1026, %v3040, 0
        %v3082 = vsel %vm1026, %v3041, 0
        %v3085 = vsel %vm1026, %v3042, 0
        %v3088 = vsel %vm1026, %v3043, 0
        %v3091 = vsel %vm1026, %v3044, 0
        %v3094 = vsel %vm1026, %v3045, 0
        %v3097 = vsel %vm1026, %v3046, 0
        %v3100 = vsel %vm1026, %v3047, 0
        %v3103 = vsel %vm1026, %v3048, 0
        %v3106 = vsel %vm1026, %v3049, 0
        %v3109 = vsel %vm1026, %v3050, 0
        %3111 = vmatpush.bf16.msra.mxu0 0
        %3112 = vmatpush.bf16.msra.mxu0 0
        %3113 = vmatpush.bf16.msra.mxu0 0
        %3114 = vmatpush.bf16.msra.mxu0 0
        %3115 = vmatpush.bf16.msra.mxu0 0
        %3116 = vmatpush.bf16.msra.mxu0 0
        %3117 = vmatpush.bf16.msra.mxu0 %v3060
        %3118 = vmatpush.bf16.msra.mxu0 %v3059
        %3119 = vmatmul.bf16.gmra.mxu0 %v3064
        %v3120 = vpop.f32.mrf.mxu0
        %v3121 = vadd.f32 0.0, %v3120
        %v3122 = vpop.f32.mrf.mxu0
        %v3123 = vadd.f32 0.0, %v3122
        %3124 = vmatmul.bf16.gmra.mxu0 %v3067
        %v3125 = vpop.f32.mrf.mxu0
        %v3126 = vadd.f32 0.0, %v3125
        %v3127 = vpop.f32.mrf.mxu0
        %v3128 = vadd.f32 0.0, %v3127
        %3129 = vmatmul.bf16.gmra.mxu0 %v3070
        %v3130 = vpop.f32.mrf.mxu0
        %v3131 = vadd.f32 0.0, %v3130
        %v3132 = vpop.f32.mrf.mxu0
        %v3133 = vadd.f32 0.0, %v3132
        %3134 = vmatmul.bf16.gmra.mxu0 %v3073
        %v3135 = vpop.f32.mrf.mxu0
        %v3136 = vadd.f32 0.0, %v3135
        %v3137 = vpop.f32.mrf.mxu0
        %v3138 = vadd.f32 0.0, %v3137
        %3139 = vmatmul.bf16.gmra.mxu0 %v3076
        %v3140 = vpop.f32.mrf.mxu0
        %v3141 = vadd.f32 0.0, %v3140
        %v3142 = vpop.f32.mrf.mxu0
        %v3143 = vadd.f32 0.0, %v3142
        %3144 = vmatmul.bf16.gmra.mxu0 %v3079
        %v3145 = vpop.f32.mrf.mxu0
        %v3146 = vadd.f32 0.0, %v3145
        %v3147 = vpop.f32.mrf.mxu0
        %v3148 = vadd.f32 0.0, %v3147
        %3149 = vmatmul.bf16.gmra.mxu0 %v3082
        %v3150 = vpop.f32.mrf.mxu0
        %v3151 = vadd.f32 0.0, %v3150
        %v3152 = vpop.f32.mrf.mxu0
        %v3153 = vadd.f32 0.0, %v3152
        %3154 = vmatmul.bf16.gmra.mxu0 %v3085
        %v3155 = vpop.f32.mrf.mxu0
        %v3156 = vadd.f32 0.0, %v3155
        %v3157 = vpop.f32.mrf.mxu0
        %v3158 = vadd.f32 0.0, %v3157
        %3159 = vmatmul.bf16.gmra.mxu0 %v3088
        %v3160 = vpop.f32.mrf.mxu0
        %v3161 = vadd.f32 0.0, %v3160
        %v3162 = vpop.f32.mrf.mxu0
        %v3163 = vadd.f32 0.0, %v3162
        %3164 = vmatmul.bf16.gmra.mxu0 %v3091
        %v3165 = vpop.f32.mrf.mxu0
        %v3166 = vadd.f32 0.0, %v3165
        %v3167 = vpop.f32.mrf.mxu0
        %v3168 = vadd.f32 0.0, %v3167
        %3169 = vmatmul.bf16.gmra.mxu0 %v3094
        %v3170 = vpop.f32.mrf.mxu0
        %v3171 = vadd.f32 0.0, %v3170
        %v3172 = vpop.f32.mrf.mxu0
        %v3173 = vadd.f32 0.0, %v3172
        %3174 = vmatmul.bf16.gmra.mxu0 %v3097
        %v3175 = vpop.f32.mrf.mxu0
        %v3176 = vadd.f32 0.0, %v3175
        %v3177 = vpop.f32.mrf.mxu0
        %v3178 = vadd.f32 0.0, %v3177
        %3179 = vmatmul.bf16.gmra.mxu0 %v3100
        %v3180 = vpop.f32.mrf.mxu0
        %v3181 = vadd.f32 0.0, %v3180
        %v3182 = vpop.f32.mrf.mxu0
        %v3183 = vadd.f32 0.0, %v3182
        %3184 = vmatmul.bf16.gmra.mxu0 %v3103
        %v3185 = vpop.f32.mrf.mxu0
        %v3186 = vadd.f32 0.0, %v3185
        %v3187 = vpop.f32.mrf.mxu0
        %v3188 = vadd.f32 0.0, %v3187
        %3189 = vmatmul.bf16.gmra.mxu0 %v3106
        %v3190 = vpop.f32.mrf.mxu0
        %v3191 = vadd.f32 0.0, %v3190
        %v3192 = vpop.f32.mrf.mxu0
        %v3193 = vadd.f32 0.0, %v3192
        %3194 = vmatmul.bf16.gmra.mxu0 %v3109
        %v3195 = vpop.f32.mrf.mxu0
        %v3196 = vadd.f32 0.0, %v3195
        %v3197 = vpop.f32.mrf.mxu0
        %v3198 = vadd.f32 0.0, %v3197
        %3199 = vdwg.mxu0
        %v3200 = vadd.f32 %v2935, %v3121
        %v3201 = vadd.f32 %v2936, %v3123
        %v3202 = vadd.f32 %v2937, %v3126
        %v3203 = vadd.f32 %v2938, %v3128
        %v3204 = vadd.f32 %v2939, %v3131
        %v3205 = vadd.f32 %v2940, %v3133
        %v3206 = vadd.f32 %v2941, %v3136
        %v3207 = vadd.f32 %v2942, %v3138
        %v3208 = vadd.f32 %v2943, %v3141
        %v3209 = vadd.f32 %v2944, %v3143
        %v3210 = vadd.f32 %v2945, %v3146
        %v3211 = vadd.f32 %v2946, %v3148
        %v3212 = vadd.f32 %v2947, %v3151
        %v3213 = vadd.f32 %v2948, %v3153
        %v3214 = vadd.f32 %v2949, %v3156
        %v3215 = vadd.f32 %v2950, %v3158
        %v3216 = vadd.f32 %v2951, %v3161
        %v3217 = vadd.f32 %v2952, %v3163
        %v3218 = vadd.f32 %v2953, %v3166
        %v3219 = vadd.f32 %v2954, %v3168
        %v3220 = vadd.f32 %v2955, %v3171
        %v3221 = vadd.f32 %v2956, %v3173
        %v3222 = vadd.f32 %v2957, %v3176
        %v3223 = vadd.f32 %v2958, %v3178
        %v3224 = vadd.f32 %v2959, %v3181
        %v3225 = vadd.f32 %v2960, %v3183
        %v3226 = vadd.f32 %v2961, %v3186
        %v3227 = vadd.f32 %v2962, %v3188
        %v3228 = vadd.f32 %v2963, %v3191
        %v3229 = vadd.f32 %v2964, %v3193
        %v3230 = vadd.f32 %v2965, %v3196
        %v3231 = vadd.f32 %v2966, %v3198
        %v3232 = vld [vmem:[%s2] sm:$0x1]
        %v3234 = vperm.slane %v3232, 0
        %v3236 = vadd.f32 %v3200, %v3234
        %v3237 = vadd.f32 %v3201, %v3234
        %v3238 = vadd.f32 %v3202, %v3234
        %v3239 = vadd.f32 %v3203, %v3234
        %v3240 = vadd.f32 %v3204, %v3234
        %v3241 = vadd.f32 %v3205, %v3234
        %v3242 = vadd.f32 %v3206, %v3234
        %v3243 = vadd.f32 %v3207, %v3234
        %v3244 = vadd.f32 %v3208, %v3234
        %v3245 = vadd.f32 %v3209, %v3234
        %v3246 = vadd.f32 %v3210, %v3234
        %v3247 = vadd.f32 %v3211, %v3234
        %v3248 = vadd.f32 %v3212, %v3234
        %v3249 = vadd.f32 %v3213, %v3234
        %v3250 = vadd.f32 %v3214, %v3234
        %v3251 = vadd.f32 %v3215, %v3234
        %v3252 = vadd.f32 %v3216, %v3234
        %v3253 = vadd.f32 %v3217, %v3234
        %v3254 = vadd.f32 %v3218, %v3234
        %v3255 = vadd.f32 %v3219, %v3234
        %v3256 = vadd.f32 %v3220, %v3234
        %v3257 = vadd.f32 %v3221, %v3234
        %v3258 = vadd.f32 %v3222, %v3234
        %v3259 = vadd.f32 %v3223, %v3234
        %v3260 = vadd.f32 %v3224, %v3234
        %v3261 = vadd.f32 %v3225, %v3234
        %v3262 = vadd.f32 %v3226, %v3234
        %v3263 = vadd.f32 %v3227, %v3234
        %v3264 = vadd.f32 %v3228, %v3234
        %v3265 = vadd.f32 %v3229, %v3234
        %v3266 = vadd.f32 %v3230, %v3234
        %v3267 = vadd.f32 %v3231, %v3234
        %vm3268 = vcmask 523264
        %v3269 = vsel %vm3268, %v3236, 0.0
        %v3270 = vsel %vm3268, %v3237, 0.0
        %v3271 = vadd.f32 %v3269, %v3270
        %v3272 = vsel %vm3268, %v3238, 0.0
        %v3273 = vadd.f32 %v3271, %v3272
        %v3274 = vsel %vm3268, %v3239, 0.0
        %v3275 = vadd.f32 %v3273, %v3274
        %v3276 = vsel %vm3268, %v3240, 0.0
        %v3277 = vadd.f32 %v3275, %v3276
        %v3278 = vsel %vm3268, %v3241, 0.0
        %v3279 = vadd.f32 %v3277, %v3278
        %v3280 = vsel %vm3268, %v3242, 0.0
        %v3281 = vadd.f32 %v3279, %v3280
        %v3282 = vsel %vm3268, %v3243, 0.0
        %v3283 = vadd.f32 %v3281, %v3282
        %v3284 = vsel %vm3268, %v3244, 0.0
        %v3285 = vadd.f32 %v3283, %v3284
        %v3286 = vsel %vm3268, %v3245, 0.0
        %v3287 = vadd.f32 %v3285, %v3286
        %v3288 = vsel %vm3268, %v3246, 0.0
        %v3289 = vadd.f32 %v3287, %v3288
        %v3290 = vsel %vm3268, %v3247, 0.0
        %v3291 = vadd.f32 %v3289, %v3290
        %v3292 = vsel %vm3268, %v3248, 0.0
        %v3293 = vadd.f32 %v3291, %v3292
        %v3294 = vsel %vm3268, %v3249, 0.0
        %v3295 = vadd.f32 %v3293, %v3294
        %v3296 = vsel %vm3268, %v3250, 0.0
        %v3297 = vadd.f32 %v3295, %v3296
        %v3298 = vsel %vm3268, %v3251, 0.0
        %v3299 = vadd.f32 %v3297, %v3298
        %v3300 = vsel %vm3268, %v3252, 0.0
        %v3301 = vadd.f32 %v3299, %v3300
        %v3302 = vsel %vm3268, %v3253, 0.0
        %v3303 = vadd.f32 %v3301, %v3302
        %v3304 = vsel %vm3268, %v3254, 0.0
        %v3305 = vadd.f32 %v3303, %v3304
        %v3306 = vsel %vm3268, %v3255, 0.0
        %v3307 = vadd.f32 %v3305, %v3306
        %v3308 = vsel %vm3268, %v3256, 0.0
        %v3309 = vadd.f32 %v3307, %v3308
        %v3310 = vsel %vm3268, %v3257, 0.0
        %v3311 = vadd.f32 %v3309, %v3310
        %v3312 = vsel %vm3268, %v3258, 0.0
        %v3313 = vadd.f32 %v3311, %v3312
        %v3314 = vsel %vm3268, %v3259, 0.0
        %v3315 = vadd.f32 %v3313, %v3314
        %v3316 = vsel %vm3268, %v3260, 0.0
        %v3317 = vadd.f32 %v3315, %v3316
        %v3318 = vsel %vm3268, %v3261, 0.0
        %v3319 = vadd.f32 %v3317, %v3318
        %v3320 = vsel %vm3268, %v3262, 0.0
        %v3321 = vadd.f32 %v3319, %v3320
        %v3322 = vsel %vm3268, %v3263, 0.0
        %v3323 = vadd.f32 %v3321, %v3322
        %v3324 = vsel %vm3268, %v3264, 0.0
        %v3325 = vadd.f32 %v3323, %v3324
        %v3326 = vsel %vm3268, %v3265, 0.0
        %v3327 = vadd.f32 %v3325, %v3326
        %v3328 = vsel %vm3268, %v3266, 0.0
        %v3329 = vadd.f32 %v3327, %v3328
        %v3330 = vsel %vm3268, %v3267, 0.0
        %v3331 = vadd.f32 %v3329, %v3330
        %v3332 = vrot.slane %v3331, 4
        %v3333 = vadd.f32 %v3331, %v3332
        %v3334 = vrot.slane %v3333, 2
        %v3335 = vadd.f32 %v3333, %v3334
        %v3336 = vrot.slane %v3335, 1
        %v3337 = vadd.f32 %v3335, %v3336
        %v3338 = vmul.f32 %v3236, %v3236
        %v3339 = vmul.f32 %v3237, %v3237
        %v3340 = vmul.f32 %v3238, %v3238
        %v3341 = vmul.f32 %v3239, %v3239
        %v3342 = vmul.f32 %v3240, %v3240
        %v3343 = vmul.f32 %v3241, %v3241
        %v3344 = vmul.f32 %v3242, %v3242
        %v3345 = vmul.f32 %v3243, %v3243
        %v3346 = vmul.f32 %v3244, %v3244
        %v3347 = vmul.f32 %v3245, %v3245
        %v3348 = vmul.f32 %v3246, %v3246
        %v3349 = vmul.f32 %v3247, %v3247
        %v3350 = vmul.f32 %v3248, %v3248
        %v3351 = vmul.f32 %v3249, %v3249
        %v3352 = vmul.f32 %v3250, %v3250
        %v3353 = vmul.f32 %v3251, %v3251
        %v3354 = vmul.f32 %v3252, %v3252
        %v3355 = vmul.f32 %v3253, %v3253
        %v3356 = vmul.f32 %v3254, %v3254
        %v3357 = vmul.f32 %v3255, %v3255
        %v3358 = vmul.f32 %v3256, %v3256
        %v3359 = vmul.f32 %v3257, %v3257
        %v3360 = vmul.f32 %v3258, %v3258
        %v3361 = vmul.f32 %v3259, %v3259
        %v3362 = vmul.f32 %v3260, %v3260
        %v3363 = vmul.f32 %v3261, %v3261
        %v3364 = vmul.f32 %v3262, %v3262
        %v3365 = vmul.f32 %v3263, %v3263
        %v3366 = vmul.f32 %v3264, %v3264
        %v3367 = vmul.f32 %v3265, %v3265
        %v3368 = vmul.f32 %v3266, %v3266
        %v3369 = vmul.f32 %v3267, %v3267
        %v3370 = vsel %vm3268, %v3338, 0.0
        %v3371 = vsel %vm3268, %v3339, 0.0
        %v3372 = vadd.f32 %v3370, %v3371
        %v3373 = vsel %vm3268, %v3340, 0.0
        %v3374 = vadd.f32 %v3372, %v3373
        %v3375 = vsel %vm3268, %v3341, 0.0
        %v3376 = vadd.f32 %v3374, %v3375
        %v3377 = vsel %vm3268, %v3342, 0.0
        %v3378 = vadd.f32 %v3376, %v3377
        %v3379 = vsel %vm3268, %v3343, 0.0
        %v3380 = vadd.f32 %v3378, %v3379
        %v3381 = vsel %vm3268, %v3344, 0.0
        %v3382 = vadd.f32 %v3380, %v3381
        %v3383 = vsel %vm3268, %v3345, 0.0
        %v3384 = vadd.f32 %v3382, %v3383
        %v3385 = vsel %vm3268, %v3346, 0.0
        %v3386 = vadd.f32 %v3384, %v3385
        %v3387 = vsel %vm3268, %v3347, 0.0
        %v3388 = vadd.f32 %v3386, %v3387
        %v3389 = vsel %vm3268, %v3348, 0.0
        %v3390 = vadd.f32 %v3388, %v3389
        %v3391 = vsel %vm3268, %v3349, 0.0
        %v3392 = vadd.f32 %v3390, %v3391
        %v3393 = vsel %vm3268, %v3350, 0.0
        %v3394 = vadd.f32 %v3392, %v3393
        %v3395 = vsel %vm3268, %v3351, 0.0
        %v3396 = vadd.f32 %v3394, %v3395
        %v3397 = vsel %vm3268, %v3352, 0.0
        %v3398 = vadd.f32 %v3396, %v3397
        %v3399 = vsel %vm3268, %v3353, 0.0
        %v3400 = vadd.f32 %v3398, %v3399
        %v3401 = vsel %vm3268, %v3354, 0.0
        %v3402 = vadd.f32 %v3400, %v3401
        %v3403 = vsel %vm3268, %v3355, 0.0
        %v3404 = vadd.f32 %v3402, %v3403
        %v3405 = vsel %vm3268, %v3356, 0.0
        %v3406 = vadd.f32 %v3404, %v3405
        %v3407 = vsel %vm3268, %v3357, 0.0
        %v3408 = vadd.f32 %v3406, %v3407
        %v3409 = vsel %vm3268, %v3358, 0.0
        %v3410 = vadd.f32 %v3408, %v3409
        %v3411 = vsel %vm3268, %v3359, 0.0
        %v3412 = vadd.f32 %v3410, %v3411
        %v3413 = vsel %vm3268, %v3360, 0.0
        %v3414 = vadd.f32 %v3412, %v3413
        %v3415 = vsel %vm3268, %v3361, 0.0
        %v3416 = vadd.f32 %v3414, %v3415
        %v3417 = vsel %vm3268, %v3362, 0.0
        %v3418 = vadd.f32 %v3416, %v3417
        %v3419 = vsel %vm3268, %v3363, 0.0
        %v3420 = vadd.f32 %v3418, %v3419
        %v3421 = vsel %vm3268, %v3364, 0.0
        %v3422 = vadd.f32 %v3420, %v3421
        %v3423 = vsel %vm3268, %v3365, 0.0
        %v3424 = vadd.f32 %v3422, %v3423
        %v3425 = vsel %vm3268, %v3366, 0.0
        %v3426 = vadd.f32 %v3424, %v3425
        %v3427 = vsel %vm3268, %v3367, 0.0
        %v3428 = vadd.f32 %v3426, %v3427
        %v3429 = vsel %vm3268, %v3368, 0.0
        %v3430 = vadd.f32 %v3428, %v3429
        %v3431 = vsel %vm3268, %v3369, 0.0
        %v3432 = vadd.f32 %v3430, %v3431
        %v3433 = vrot.slane %v3432, 4
        %v3434 = vadd.f32 %v3432, %v3433
        %v3435 = vrot.slane %v3434, 2
        %v3436 = vadd.f32 %v3434, %v3435
        %v3437 = vrot.slane %v3436, 1
        %v3438 = vadd.f32 %v3436, %v3437
        %v3439 = vld [vmem:[%s3] sm:$0xff]
        %v3440 = vld [vmem:[%s3 + $0x8] sm:$0xff]
        %v3441 = vld [vmem:[%s3 + $0x10] sm:$0xff]
        %v3442 = vld [vmem:[%s3 + $0x18] sm:$0xff]
        %v3443 = vld [vmem:[%s3 + $0x20] sm:$0xff]
        %v3444 = vld [vmem:[%s3 + $0x28] sm:$0xff]
        %v3445 = vld [vmem:[%s3 + $0x30] sm:$0xff]
        %v3446 = vld [vmem:[%s3 + $0x38] sm:$0xff]
        %v3448 = vsel %vm3268, %v3337, 0
        %3450 = vmatpush.msra.mxu0 0.0
        %3451 = vmatpush.msra.mxu0 0.0
        %3452 = vmatpush.msra.mxu0 0.0
        %3453 = vmatpush.msra.mxu0 0.0
        %3454 = vmatpush.msra.mxu0 0.0
        %3455 = vmatpush.msra.mxu0 0.0
        %3456 = vmatpush.msra.mxu0 0.0
        %3457 = vmatpush.msra.mxu0 0.0
        %3458 = vmatpush.msra.mxu0 %v3446
        %3459 = vmatpush.msra.mxu0 %v3445
        %3460 = vmatpush.msra.mxu0 %v3444
        %3461 = vmatpush.msra.mxu0 %v3443
        %3462 = vmatpush.msra.mxu0 %v3442
        %3463 = vmatpush.msra.mxu0 %v3441
        %3464 = vmatpush.msra.mxu0 %v3440
        %3465 = vmatpush.msra.mxu0 %v3439
        %3466 = vmatmul.f32.gmra.mxu0 %v3448
        %v3467 = vpop.f32.mrf.mxu0
        %v3468 = vadd.f32 0.0, %v3467
        %3469 = vdwg.mxu0
        %v3471 = vsel %vm3268, %v3438, 0
        %3473 = vmatpush.msra.mxu0 0.0
        %3474 = vmatpush.msra.mxu0 0.0
        %3475 = vmatpush.msra.mxu0 0.0
        %3476 = vmatpush.msra.mxu0 0.0
        %3477 = vmatpush.msra.mxu0 0.0
        %3478 = vmatpush.msra.mxu0 0.0
        %3479 = vmatpush.msra.mxu0 0.0
        %3480 = vmatpush.msra.mxu0 0.0
        %3481 = vmatpush.msra.mxu0 %v3446
        %3482 = vmatpush.msra.mxu0 %v3445
        %3483 = vmatpush.msra.mxu0 %v3444
        %3484 = vmatpush.msra.mxu0 %v3443
        %3485 = vmatpush.msra.mxu0 %v3442
        %3486 = vmatpush.msra.mxu0 %v3441
        %3487 = vmatpush.msra.mxu0 %v3440
        %3488 = vmatpush.msra.mxu0 %v3439
        %3489 = vmatmul.f32.gmra.mxu0 %v3471
        %v3490 = vpop.f32.mrf.mxu0
        %v3491 = vadd.f32 0.0, %v3490
        %3492 = vdwg.mxu0
        %v3493 = vmul.f32 %v3468, %v3468
        %v3494 = vsub.f32 %v3491, %v3493
        %v3495 = vadd.f32 %v3494, 1e-05
        %v3496 = vrsqrt.pop %v3495
        %v3497 = vmul.f32 %v3496, %v3495
        %v3498 = vmul.f32 %v3497, %v3496
        %v3499 = vmul.f32 0.5, %v3498
        %v3500 = vsub.f32 1.5, %v3499
        %v3501 = vmul.f32 %v3496, %v3500
        %vm3502 = vweird.f32 %v3495
        %vm3503 = vweird.f32 %v3496
        %vm3504 = vmor %vm3502, %vm3503
        %v3505 = vsel %vm3504, %v3496, %v3501
        %v3506 = vperm.slane %v3468, 0
        %v3507 = vsub.f32 %v3236, %v3506
        %v3508 = vsub.f32 %v3237, %v3506
        %v3509 = vsub.f32 %v3238, %v3506
        %v3510 = vsub.f32 %v3239, %v3506
        %v3511 = vsub.f32 %v3240, %v3506
        %v3512 = vsub.f32 %v3241, %v3506
        %v3513 = vsub.f32 %v3242, %v3506
        %v3514 = vsub.f32 %v3243, %v3506
        %v3515 = vsub.f32 %v3244, %v3506
        %v3516 = vsub.f32 %v3245, %v3506
        %v3517 = vsub.f32 %v3246, %v3506
        %v3518 = vsub.f32 %v3247, %v3506
        %v3519 = vsub.f32 %v3248, %v3506
        %v3520 = vsub.f32 %v3249, %v3506
        %v3521 = vsub.f32 %v3250, %v3506
        %v3522 = vsub.f32 %v3251, %v3506
        %v3523 = vsub.f32 %v3252, %v3506
        %v3524 = vsub.f32 %v3253, %v3506
        %v3525 = vsub.f32 %v3254, %v3506
        %v3526 = vsub.f32 %v3255, %v3506
        %v3527 = vsub.f32 %v3256, %v3506
        %v3528 = vsub.f32 %v3257, %v3506
        %v3529 = vsub.f32 %v3258, %v3506
        %v3530 = vsub.f32 %v3259, %v3506
        %v3531 = vsub.f32 %v3260, %v3506
        %v3532 = vsub.f32 %v3261, %v3506
        %v3533 = vsub.f32 %v3262, %v3506
        %v3534 = vsub.f32 %v3263, %v3506
        %v3535 = vsub.f32 %v3264, %v3506
        %v3536 = vsub.f32 %v3265, %v3506
        %v3537 = vsub.f32 %v3266, %v3506
        %v3538 = vsub.f32 %v3267, %v3506
        %v3539 = vperm.slane %v3505, 0
        %v3540 = vmul.f32 %v3507, %v3539
        %v3541 = vmul.f32 %v3508, %v3539
        %v3542 = vmul.f32 %v3509, %v3539
        %v3543 = vmul.f32 %v3510, %v3539
        %v3544 = vmul.f32 %v3511, %v3539
        %v3545 = vmul.f32 %v3512, %v3539
        %v3546 = vmul.f32 %v3513, %v3539
        %v3547 = vmul.f32 %v3514, %v3539
        %v3548 = vmul.f32 %v3515, %v3539
        %v3549 = vmul.f32 %v3516, %v3539
        %v3550 = vmul.f32 %v3517, %v3539
        %v3551 = vmul.f32 %v3518, %v3539
        %v3552 = vmul.f32 %v3519, %v3539
        %v3553 = vmul.f32 %v3520, %v3539
        %v3554 = vmul.f32 %v3521, %v3539
        %v3555 = vmul.f32 %v3522, %v3539
        %v3556 = vmul.f32 %v3523, %v3539
        %v3557 = vmul.f32 %v3524, %v3539
        %v3558 = vmul.f32 %v3525, %v3539
        %v3559 = vmul.f32 %v3526, %v3539
        %v3560 = vmul.f32 %v3527, %v3539
        %v3561 = vmul.f32 %v3528, %v3539
        %v3562 = vmul.f32 %v3529, %v3539
        %v3563 = vmul.f32 %v3530, %v3539
        %v3564 = vmul.f32 %v3531, %v3539
        %v3565 = vmul.f32 %v3532, %v3539
        %v3566 = vmul.f32 %v3533, %v3539
        %v3567 = vmul.f32 %v3534, %v3539
        %v3568 = vmul.f32 %v3535, %v3539
        %v3569 = vmul.f32 %v3536, %v3539
        %v3570 = vmul.f32 %v3537, %v3539
        %v3571 = vmul.f32 %v3538, %v3539
        %v3572 = vld [vmem:[%s4] sm:$0x1]
        %v3574 = vperm.slane %v3572, 0
        %v3576 = vmul.f32 %v3540, %v3574
        %v3577 = vmul.f32 %v3541, %v3574
        %v3578 = vmul.f32 %v3542, %v3574
        %v3579 = vmul.f32 %v3543, %v3574
        %v3580 = vmul.f32 %v3544, %v3574
        %v3581 = vmul.f32 %v3545, %v3574
        %v3582 = vmul.f32 %v3546, %v3574
        %v3583 = vmul.f32 %v3547, %v3574
        %v3584 = vmul.f32 %v3548, %v3574
        %v3585 = vmul.f32 %v3549, %v3574
        %v3586 = vmul.f32 %v3550, %v3574
        %v3587 = vmul.f32 %v3551, %v3574
        %v3588 = vmul.f32 %v3552, %v3574
        %v3589 = vmul.f32 %v3553, %v3574
        %v3590 = vmul.f32 %v3554, %v3574
        %v3591 = vmul.f32 %v3555, %v3574
        %v3592 = vmul.f32 %v3556, %v3574
        %v3593 = vmul.f32 %v3557, %v3574
        %v3594 = vmul.f32 %v3558, %v3574
        %v3595 = vmul.f32 %v3559, %v3574
        %v3596 = vmul.f32 %v3560, %v3574
        %v3597 = vmul.f32 %v3561, %v3574
        %v3598 = vmul.f32 %v3562, %v3574
        %v3599 = vmul.f32 %v3563, %v3574
        %v3600 = vmul.f32 %v3564, %v3574
        %v3601 = vmul.f32 %v3565, %v3574
        %v3602 = vmul.f32 %v3566, %v3574
        %v3603 = vmul.f32 %v3567, %v3574
        %v3604 = vmul.f32 %v3568, %v3574
        %v3605 = vmul.f32 %v3569, %v3574
        %v3606 = vmul.f32 %v3570, %v3574
        %v3607 = vmul.f32 %v3571, %v3574
        %v3608 = vld [vmem:[%s5] sm:$0x1]
        %v3610 = vperm.slane %v3608, 0
        %v3612 = vadd.f32 %v3576, %v3610
        %v3613 = vadd.f32 %v3577, %v3610
        %v3614 = vadd.f32 %v3578, %v3610
        %v3615 = vadd.f32 %v3579, %v3610
        %v3616 = vadd.f32 %v3580, %v3610
        %v3617 = vadd.f32 %v3581, %v3610
        %v3618 = vadd.f32 %v3582, %v3610
        %v3619 = vadd.f32 %v3583, %v3610
        %v3620 = vadd.f32 %v3584, %v3610
        %v3621 = vadd.f32 %v3585, %v3610
        %v3622 = vadd.f32 %v3586, %v3610
        %v3623 = vadd.f32 %v3587, %v3610
        %v3624 = vadd.f32 %v3588, %v3610
        %v3625 = vadd.f32 %v3589, %v3610
        %v3626 = vadd.f32 %v3590, %v3610
        %v3627 = vadd.f32 %v3591, %v3610
        %v3628 = vadd.f32 %v3592, %v3610
        %v3629 = vadd.f32 %v3593, %v3610
        %v3630 = vadd.f32 %v3594, %v3610
        %v3631 = vadd.f32 %v3595, %v3610
        %v3632 = vadd.f32 %v3596, %v3610
        %v3633 = vadd.f32 %v3597, %v3610
        %v3634 = vadd.f32 %v3598, %v3610
        %v3635 = vadd.f32 %v3599, %v3610
        %v3636 = vadd.f32 %v3600, %v3610
        %v3637 = vadd.f32 %v3601, %v3610
        %v3638 = vadd.f32 %v3602, %v3610
        %v3639 = vadd.f32 %v3603, %v3610
        %v3640 = vadd.f32 %v3604, %v3610
        %v3641 = vadd.f32 %v3605, %v3610
        %v3642 = vadd.f32 %v3606, %v3610
        %v3643 = vadd.f32 %v3607, %v3610
        %v3644 = vld [vmem:[%s328] sm:$0x1]
        %v3645 = vadd.f32 %v3644, 1.0
        %v3647 = vperm.slane %v3645, 0
        %v3649 = vmul.f32 %v3612, %v3647
        %v3650 = vmul.f32 %v3613, %v3647
        %v3651 = vmul.f32 %v3614, %v3647
        %v3652 = vmul.f32 %v3615, %v3647
        %v3653 = vmul.f32 %v3616, %v3647
        %v3654 = vmul.f32 %v3617, %v3647
        %v3655 = vmul.f32 %v3618, %v3647
        %v3656 = vmul.f32 %v3619, %v3647
        %v3657 = vmul.f32 %v3620, %v3647
        %v3658 = vmul.f32 %v3621, %v3647
        %v3659 = vmul.f32 %v3622, %v3647
        %v3660 = vmul.f32 %v3623, %v3647
        %v3661 = vmul.f32 %v3624, %v3647
        %v3662 = vmul.f32 %v3625, %v3647
        %v3663 = vmul.f32 %v3626, %v3647
        %v3664 = vmul.f32 %v3627, %v3647
        %v3665 = vmul.f32 %v3628, %v3647
        %v3666 = vmul.f32 %v3629, %v3647
        %v3667 = vmul.f32 %v3630, %v3647
        %v3668 = vmul.f32 %v3631, %v3647
        %v3669 = vmul.f32 %v3632, %v3647
        %v3670 = vmul.f32 %v3633, %v3647
        %v3671 = vmul.f32 %v3634, %v3647
        %v3672 = vmul.f32 %v3635, %v3647
        %v3673 = vmul.f32 %v3636, %v3647
        %v3674 = vmul.f32 %v3637, %v3647
        %v3675 = vmul.f32 %v3638, %v3647
        %v3676 = vmul.f32 %v3639, %v3647
        %v3677 = vmul.f32 %v3640, %v3647
        %v3678 = vmul.f32 %v3641, %v3647
        %v3679 = vmul.f32 %v3642, %v3647
        %v3680 = vmul.f32 %v3643, %v3647
        %v3681 = vld [vmem:[%s331] sm:$0x1]
        %v3683 = vperm.slane %v3681, 0
        %v3685 = vadd.f32 %v3649, %v3683
        %v3686 = vadd.f32 %v3650, %v3683
        %v3687 = vadd.f32 %v3651, %v3683
        %v3688 = vadd.f32 %v3652, %v3683
        %v3689 = vadd.f32 %v3653, %v3683
        %v3690 = vadd.f32 %v3654, %v3683
        %v3691 = vadd.f32 %v3655, %v3683
        %v3692 = vadd.f32 %v3656, %v3683
        %v3693 = vadd.f32 %v3657, %v3683
        %v3694 = vadd.f32 %v3658, %v3683
        %v3695 = vadd.f32 %v3659, %v3683
        %v3696 = vadd.f32 %v3660, %v3683
        %v3697 = vadd.f32 %v3661, %v3683
        %v3698 = vadd.f32 %v3662, %v3683
        %v3699 = vadd.f32 %v3663, %v3683
        %v3700 = vadd.f32 %v3664, %v3683
        %v3701 = vadd.f32 %v3665, %v3683
        %v3702 = vadd.f32 %v3666, %v3683
        %v3703 = vadd.f32 %v3667, %v3683
        %v3704 = vadd.f32 %v3668, %v3683
        %v3705 = vadd.f32 %v3669, %v3683
        %v3706 = vadd.f32 %v3670, %v3683
        %v3707 = vadd.f32 %v3671, %v3683
        %v3708 = vadd.f32 %v3672, %v3683
        %v3709 = vadd.f32 %v3673, %v3683
        %v3710 = vadd.f32 %v3674, %v3683
        %v3711 = vadd.f32 %v3675, %v3683
        %v3712 = vadd.f32 %v3676, %v3683
        %v3713 = vadd.f32 %v3677, %v3683
        %v3714 = vadd.f32 %v3678, %v3683
        %v3715 = vadd.f32 %v3679, %v3683
        %v3716 = vadd.f32 %v3680, %v3683
        %v3717 = vsub.f32 0.0, %v3685
        %v3718 = vsub.f32 0.0, %v3686
        %v3719 = vsub.f32 0.0, %v3687
        %v3720 = vsub.f32 0.0, %v3688
        %v3721 = vsub.f32 0.0, %v3689
        %v3722 = vsub.f32 0.0, %v3690
        %v3723 = vsub.f32 0.0, %v3691
        %v3724 = vsub.f32 0.0, %v3692
        %v3725 = vsub.f32 0.0, %v3693
        %v3726 = vsub.f32 0.0, %v3694
        %v3727 = vsub.f32 0.0, %v3695
        %v3728 = vsub.f32 0.0, %v3696
        %v3729 = vsub.f32 0.0, %v3697
        %v3730 = vsub.f32 0.0, %v3698
        %v3731 = vsub.f32 0.0, %v3699
        %v3732 = vsub.f32 0.0, %v3700
        %v3733 = vsub.f32 0.0, %v3701
        %v3734 = vsub.f32 0.0, %v3702
        %v3735 = vsub.f32 0.0, %v3703
        %v3736 = vsub.f32 0.0, %v3704
        %v3737 = vsub.f32 0.0, %v3705
        %v3738 = vsub.f32 0.0, %v3706
        %v3739 = vsub.f32 0.0, %v3707
        %v3740 = vsub.f32 0.0, %v3708
        %v3741 = vsub.f32 0.0, %v3709
        %v3742 = vsub.f32 0.0, %v3710
        %v3743 = vsub.f32 0.0, %v3711
        %v3744 = vsub.f32 0.0, %v3712
        %v3745 = vsub.f32 0.0, %v3713
        %v3746 = vsub.f32 0.0, %v3714
        %v3747 = vsub.f32 0.0, %v3715
        %v3748 = vsub.f32 0.0, %v3716
        %v3749 = vmul.f32 %v3717, 1.442695
        %v3750 = vpow.pop %v3749
        %v3751 = vmul.f32 %v3718, 1.442695
        %v3752 = vpow.pop %v3751
        %v3753 = vmul.f32 %v3719, 1.442695
        %v3754 = vpow.pop %v3753
        %v3755 = vmul.f32 %v3720, 1.442695
        %v3756 = vpow.pop %v3755
        %v3757 = vmul.f32 %v3721, 1.442695
        %v3758 = vpow.pop %v3757
        %v3759 = vmul.f32 %v3722, 1.442695
        %v3760 = vpow.pop %v3759
        %v3761 = vmul.f32 %v3723, 1.442695
        %v3762 = vpow.pop %v3761
        %v3763 = vmul.f32 %v3724, 1.442695
        %v3764 = vpow.pop %v3763
        %v3765 = vmul.f32 %v3725, 1.442695
        %v3766 = vpow.pop %v3765
        %v3767 = vmul.f32 %v3726, 1.442695
        %v3768 = vpow.pop %v3767
        %v3769 = vmul.f32 %v3727, 1.442695
        %v3770 = vpow.pop %v3769
        %v3771 = vmul.f32 %v3728, 1.442695
        %v3772 = vpow.pop %v3771
        %v3773 = vmul.f32 %v3729, 1.442695
        %v3774 = vpow.pop %v3773
        %v3775 = vmul.f32 %v3730, 1.442695
        %v3776 = vpow.pop %v3775
        %v3777 = vmul.f32 %v3731, 1.442695
        %v3778 = vpow.pop %v3777
        %v3779 = vmul.f32 %v3732, 1.442695
        %v3780 = vpow.pop %v3779
        %v3781 = vmul.f32 %v3733, 1.442695
        %v3782 = vpow.pop %v3781
        %v3783 = vmul.f32 %v3734, 1.442695
        %v3784 = vpow.pop %v3783
        %v3785 = vmul.f32 %v3735, 1.442695
        %v3786 = vpow.pop %v3785
        %v3787 = vmul.f32 %v3736, 1.442695
        %v3788 = vpow.pop %v3787
        %v3789 = vmul.f32 %v3737, 1.442695
        %v3790 = vpow.pop %v3789
        %v3791 = vmul.f32 %v3738, 1.442695
        %v3792 = vpow.pop %v3791
        %v3793 = vmul.f32 %v3739, 1.442695
        %v3794 = vpow.pop %v3793
        %v3795 = vmul.f32 %v3740, 1.442695
        %v3796 = vpow.pop %v3795
        %v3797 = vmul.f32 %v3741, 1.442695
        %v3798 = vpow.pop %v3797
        %v3799 = vmul.f32 %v3742, 1.442695
        %v3800 = vpow.pop %v3799
        %v3801 = vmul.f32 %v3743, 1.442695
        %v3802 = vpow.pop %v3801
        %v3803 = vmul.f32 %v3744, 1.442695
        %v3804 = vpow.pop %v3803
        %v3805 = vmul.f32 %v3745, 1.442695
        %v3806 = vpow.pop %v3805
        %v3807 = vmul.f32 %v3746, 1.442695
        %v3808 = vpow.pop %v3807
        %v3809 = vmul.f32 %v3747, 1.442695
        %v3810 = vpow.pop %v3809
        %v3811 = vmul.f32 %v3748, 1.442695
        %v3812 = vpow.pop %v3811
        %v3813 = vadd.f32 %v3750, 1.0
        %v3814 = vadd.f32 %v3752, 1.0
        %v3815 = vadd.f32 %v3754, 1.0
        %v3816 = vadd.f32 %v3756, 1.0
        %v3817 = vadd.f32 %v3758, 1.0
        %v3818 = vadd.f32 %v3760, 1.0
        %v3819 = vadd.f32 %v3762, 1.0
        %v3820 = vadd.f32 %v3764, 1.0
        %v3821 = vadd.f32 %v3766, 1.0
        %v3822 = vadd.f32 %v3768, 1.0
        %v3823 = vadd.f32 %v3770, 1.0
        %v3824 = vadd.f32 %v3772, 1.0
        %v3825 = vadd.f32 %v3774, 1.0
        %v3826 = vadd.f32 %v3776, 1.0
        %v3827 = vadd.f32 %v3778, 1.0
        %v3828 = vadd.f32 %v3780, 1.0
        %v3829 = vadd.f32 %v3782, 1.0
        %v3830 = vadd.f32 %v3784, 1.0
        %v3831 = vadd.f32 %v3786, 1.0
        %v3832 = vadd.f32 %v3788, 1.0
        %v3833 = vadd.f32 %v3790, 1.0
        %v3834 = vadd.f32 %v3792, 1.0
        %v3835 = vadd.f32 %v3794, 1.0
        %v3836 = vadd.f32 %v3796, 1.0
        %v3837 = vadd.f32 %v3798, 1.0
        %v3838 = vadd.f32 %v3800, 1.0
        %v3839 = vadd.f32 %v3802, 1.0
        %v3840 = vadd.f32 %v3804, 1.0
        %v3841 = vadd.f32 %v3806, 1.0
        %v3842 = vadd.f32 %v3808, 1.0
        %v3843 = vadd.f32 %v3810, 1.0
        %v3844 = vadd.f32 %v3812, 1.0
        %v3845 = vrcp.pop %v3813
        %v3846 = vrcp.pop %v3814
        %v3847 = vrcp.pop %v3815
        %v3848 = vrcp.pop %v3816
        %v3849 = vrcp.pop %v3817
        %v3850 = vrcp.pop %v3818
        %v3851 = vrcp.pop %v3819
        %v3852 = vrcp.pop %v3820
        %v3853 = vrcp.pop %v3821
        %v3854 = vrcp.pop %v3822
        %v3855 = vrcp.pop %v3823
        %v3856 = vrcp.pop %v3824
        %v3857 = vrcp.pop %v3825
        %v3858 = vrcp.pop %v3826
        %v3859 = vrcp.pop %v3827
        %v3860 = vrcp.pop %v3828
        %v3861 = vrcp.pop %v3829
        %v3862 = vrcp.pop %v3830
        %v3863 = vrcp.pop %v3831
        %v3864 = vrcp.pop %v3832
        %v3865 = vrcp.pop %v3833
        %v3866 = vrcp.pop %v3834
        %v3867 = vrcp.pop %v3835
        %v3868 = vrcp.pop %v3836
        %v3869 = vrcp.pop %v3837
        %v3870 = vrcp.pop %v3838
        %v3871 = vrcp.pop %v3839
        %v3872 = vrcp.pop %v3840
        %v3873 = vrcp.pop %v3841
        %v3874 = vrcp.pop %v3842
        %v3875 = vrcp.pop %v3843
        %v3876 = vrcp.pop %v3844
        %v3877 = vmul.f32 %v3685, %v3845
        %v3878 = vmul.f32 %v3686, %v3846
        %v3879 = vmul.f32 %v3687, %v3847
        %v3880 = vmul.f32 %v3688, %v3848
        %v3881 = vmul.f32 %v3689, %v3849
        %v3882 = vmul.f32 %v3690, %v3850
        %v3883 = vmul.f32 %v3691, %v3851
        %v3884 = vmul.f32 %v3692, %v3852
        %v3885 = vmul.f32 %v3693, %v3853
        %v3886 = vmul.f32 %v3694, %v3854
        %v3887 = vmul.f32 %v3695, %v3855
        %v3888 = vmul.f32 %v3696, %v3856
        %v3889 = vmul.f32 %v3697, %v3857
        %v3890 = vmul.f32 %v3698, %v3858
        %v3891 = vmul.f32 %v3699, %v3859
        %v3892 = vmul.f32 %v3700, %v3860
        %v3893 = vmul.f32 %v3701, %v3861
        %v3894 = vmul.f32 %v3702, %v3862
        %v3895 = vmul.f32 %v3703, %v3863
        %v3896 = vmul.f32 %v3704, %v3864
        %v3897 = vmul.f32 %v3705, %v3865
        %v3898 = vmul.f32 %v3706, %v3866
        %v3899 = vmul.f32 %v3707, %v3867
        %v3900 = vmul.f32 %v3708, %v3868
        %v3901 = vmul.f32 %v3709, %v3869
        %v3902 = vmul.f32 %v3710, %v3870
        %v3903 = vmul.f32 %v3711, %v3871
        %v3904 = vmul.f32 %v3712, %v3872
        %v3905 = vmul.f32 %v3713, %v3873
        %v3906 = vmul.f32 %v3714, %v3874
        %v3907 = vmul.f32 %v3715, %v3875
        %v3908 = vmul.f32 %v3716, %v3876
        %3909 = vst.msk [vmem:[%s320] sm:$0xff] %vm3268, %v3877
        %3910 = vst.msk [vmem:[%s320 + $0x8] sm:$0xff] %vm3268, %v3878
        %3911 = vst.msk [vmem:[%s320 + $0x10] sm:$0xff] %vm3268, %v3879
        %3912 = vst.msk [vmem:[%s320 + $0x18] sm:$0xff] %vm3268, %v3880
        %3913 = vst.msk [vmem:[%s320 + $0x20] sm:$0xff] %vm3268, %v3881
        %3914 = vst.msk [vmem:[%s320 + $0x28] sm:$0xff] %vm3268, %v3882
        %3915 = vst.msk [vmem:[%s320 + $0x30] sm:$0xff] %vm3268, %v3883
        %3916 = vst.msk [vmem:[%s320 + $0x38] sm:$0xff] %vm3268, %v3884
        %3917 = vst.msk [vmem:[%s320 + $0x40] sm:$0xff] %vm3268, %v3885
        %3918 = vst.msk [vmem:[%s320 + $0x48] sm:$0xff] %vm3268, %v3886
        %3919 = vst.msk [vmem:[%s320 + $0x50] sm:$0xff] %vm3268, %v3887
        %3920 = vst.msk [vmem:[%s320 + $0x58] sm:$0xff] %vm3268, %v3888
        %3921 = vst.msk [vmem:[%s320 + $0x60] sm:$0xff] %vm3268, %v3889
        %3922 = vst.msk [vmem:[%s320 + $0x68] sm:$0xff] %vm3268, %v3890
        %3923 = vst.msk [vmem:[%s320 + $0x70] sm:$0xff] %vm3268, %v3891
        %3924 = vst.msk [vmem:[%s320 + $0x78] sm:$0xff] %vm3268, %v3892
        %3925 = vst.msk [vmem:[%s320 + $0x80] sm:$0xff] %vm3268, %v3893
        %3926 = vst.msk [vmem:[%s320 + $0x88] sm:$0xff] %vm3268, %v3894
        %3927 = vst.msk [vmem:[%s320 + $0x90] sm:$0xff] %vm3268, %v3895
        %3928 = vst.msk [vmem:[%s320 + $0x98] sm:$0xff] %vm3268, %v3896
        %3929 = vst.msk [vmem:[%s320 + $0xa0] sm:$0xff] %vm3268, %v3897
        %3930 = vst.msk [vmem:[%s320 + $0xa8] sm:$0xff] %vm3268, %v3898
        %3931 = vst.msk [vmem:[%s320 + $0xb0] sm:$0xff] %vm3268, %v3899
        %3932 = vst.msk [vmem:[%s320 + $0xb8] sm:$0xff] %vm3268, %v3900
        %3933 = vst.msk [vmem:[%s320 + $0xc0] sm:$0xff] %vm3268, %v3901
        %3934 = vst.msk [vmem:[%s320 + $0xc8] sm:$0xff] %vm3268, %v3902
        %3935 = vst.msk [vmem:[%s320 + $0xd0] sm:$0xff] %vm3268, %v3903
        %3936 = vst.msk [vmem:[%s320 + $0xd8] sm:$0xff] %vm3268, %v3904
        %3937 = vst.msk [vmem:[%s320 + $0xe0] sm:$0xff] %vm3268, %v3905
        %3938 = vst.msk [vmem:[%s320 + $0xe8] sm:$0xff] %vm3268, %v3906
        %3939 = vst.msk [vmem:[%s320 + $0xf0] sm:$0xff] %vm3268, %v3907
        %3940 = vst.msk [vmem:[%s320 + $0xf8] sm:$0xff] %vm3268, %v3908
        %s3941 = sand.u32 %s213, 1
        %s3942 = scalar_lea.sflag [#allocation3], %s3941
        %s3943 = sand.u32 %s213, 1
        %s3944 = smul.addr %s3943, 256
        %s3945 = scalar_lea.vmem [#allocation2], %s3944
        // Predicated region
        $region53: #{block_forward.1} parent=51 // pred_check
          %p3946 = pneg %p223
        $region54: #{block_forward.1} parent=51 // pred_check_branch
          %3948 = sbr.rel (%p3946) target = $region56
        $region55: #{block_forward.1} parent=51 // pred_region
          %3950 = vsyncadd %s3942, 0
          %s3951 = smul.addr %s22, 32
          %s3952 = smul.addr %s3951, 8
          %s3953 = scalar_lea.hbm %s8, %s3952
          %s3954 = sshll.u32 %s3945, 4
          %s3955 = int_to_ptr.vmem [resolvable:$true] %s3954
          %s3956 = sshll.u32 %s3953, 4
          %s3957 = int_to_ptr.hbm [resolvable:$true] %s3956
          %3962 = dma.vmem_to_hbm [thread:$0]  %s3955, 4096, %s3957, %s3942, 128, 128, 8
        $region56: #{block_forward.1} parent=51 // pred_fallthru
          _
      $region52: #{block_forward.1} parent=5 // pred_fallthru
        _
      %p3963 = scmp.le.s32.totalorder 2, %s17
      // Predicated region
      $region57: #{block_forward.1} parent=5 // pred_check
        %p3964 = pneg %p3963
      $region58: #{block_forward.1} parent=5 // pred_check_branch
        %3966 = sbr.rel (%p3964) target = $region60
      $region59: #{block_forward.1} parent=5 // pred_region
        %s3967 = ssub.s32 %s17, 2
        // Predicated region
        $region61: #{block_forward.1} parent=59 // pred_check
          %p3968 = pneg %p229
        $region62: #{block_forward.1} parent=59 // pred_check_branch
          %3970 = sbr.rel (%p3968) target = $region64
        $region63: #{block_forward.1} parent=59 // pred_region
          %s3971 = sand.u32 %s214, 1
          %s3972 = scalar_lea.sflag [#allocation3], %s3971
          %s3973 = sand.u32 %s214, 1
          %s3974 = smul.addr %s3973, 256
          %s3975 = scalar_lea.vmem [#allocation2], %s3974
          %3977 = dma.done %s3972, 4096
        $region64: #{block_forward.1} parent=59 // pred_fallthru
          _
      $region60: #{block_forward.1} parent=5 // pred_fallthru
        _
    $region6: #{block_forward.1} parent=1 // loop_footer
      %s21 = sadd.s32 1, %s17
    $region7: #{block_forward.1} parent=1 // loop_footer_branch
      %16 = sbr.rel target = $region3
    $region8: #{block_forward.1} parent=1 // loop_exit
      _
    %3978 = vsyncpa [#allocation3], 1
    %s3979 = scalar_lea.sflag [#allocation3], 1
    %3980 = vsyncpa %s3979, 1

</llo_original>
